<compile_context>
chip_gen: v6e
topology: v6e:2x2x1
jax: 0.10.0
libtpu: 0.0.40
codegen_flags: <defaults>
</compile_context>

<pallas_src>
import functools

import jax
import jax.numpy as jnp
from jax import lax
from jax.experimental import pallas as pl
from jax.experimental.pallas import tpu as pltpu


HIDDEN_PAD = 128    # padded hidden width (lane width)
ROW_BLOCK = 128     # batch rows packed per output lane-row
FINAL_ROWS = 16     # sublane padding of the transposed final-layer weight (>= bf16 tile)
TB_MIN = 1024       # min batch tile: packed output block (TB//128, 128) keeps sublanes >= 8


def _round_up(n, m):
    return ((n + m - 1) // m) * m


def _mlp_kernel(x_ref,
                w1, b1, w2, b2, w3, b3, w4, b4, w5, b5, w6t, b6,
                o_ref, *, compute_dtype):
    """One batch tile.

    x_ref  : [TB, d_in]          (compute_dtype)
    w1..w5 : [*, 128]            (compute_dtype), b1..b5: [1, 128] (f32, zero-padded)
    w6t    : [FINAL_ROWS, 128]   transposed final weight, row 0 real (compute_dtype)
    b6     : [1, 128]            final bias broadcast across all lanes (f32)
    o_ref  : [TB//128, 128]      packed sigmoid outputs; batch row = m*128 + lane
    """

    def dense_relu(h, w_ref, b_ref):
        acc = jnp.dot(h, w_ref[...], preferred_element_type=jnp.float32) + b_ref[...]
        # Cast once per layer: halves inter-layer VMEM temporaries / vld+vst traffic.
        return jnp.maximum(acc, 0.0).astype(compute_dtype)

    h = x_ref[...]
    h = dense_relu(h, w1, b1)   # Linear(30,100)  + ReLU
    h = dense_relu(h, w2, b2)   # Linear(100,100) + ReLU (+Dropout p=0.2, identity in eval)
    h = dense_relu(h, w3, b3)   # Linear(100,100) + ReLU (+Dropout p=0.3, identity in eval)
    h = dense_relu(h, w4, b4)   # Linear(100,100) + ReLU (+Dropout p=0.4, identity in eval)
    h = dense_relu(h, w5, b5)   # Linear(100,100) + ReLU (+Dropout p=0.5, identity in eval)

    # Final Linear(100,1), computed transposed so logits land lane-dense:
    # for each 128-row block of h, contract the feature dim of w6t and h_blk
    # (A @ B^T on the MXU); row 0 of the product holds that block's 128 logits
    # with batch index in the lane dimension.
    tb = x_ref.shape[0]
    nblk = tb // ROW_BLOCK
    rows = []
    for n in range(nblk):
        h_blk = h[n * ROW_BLOCK:(n + 1) * ROW_BLOCK, :]            # [128, 128]
        c = lax.dot_general(
            w6t[...], h_blk,
            dimension_numbers=(((1,), (1,)), ((), ())),            # contract features
            preferred_element_type=jnp.float32)                    # [FINAL_ROWS, 128]
        rows.append(c[0:1, :])                                     # [1, 128] real logits
    logits = jnp.concatenate(rows, axis=0) + b6[...]               # [nblk, 128]

    # Sigmoid applied after packing (128x fewer transcendentals than on the slab);
    # exp + approximate reciprocal both run on the EUP slot.
    o_ref[...] = pl.reciprocal(1.0 + jnp.exp(-logits), approx=True).astype(o_ref.dtype)


def mlp_forward(x, params, *, compute_dtype=jnp.bfloat16, block_rows=4096):
    """x: [B, num_dimensions] float32. params: list of 6 (W, b) pairs with
    W of shape [in_features, out_features] (transpose of PyTorch layout)."""
    B, d_in = x.shape
    H = HIDDEN_PAD
    n_layers = len(params)

    # --- Pad / repack weights to lane-friendly shapes; cast matmul operands. ---
    flat = []
    for idx, (w, b) in enumerate(params[:-1]):
        fi, fo = w.shape
        fi_p = fi if idx == 0 else H          # input features stay d_in; hidden padded to 128
        w_p = jnp.zeros((fi_p, H), jnp.float32).at[:fi, :fo].set(w)
        b_p = jnp.zeros((1, H), jnp.float32).at[0, :fo].set(b)
        flat.append(w_p.astype(compute_dtype))    # matmul operand
        flat.append(b_p)                          # bias stays f32
    w6, b6 = params[-1]                            # [100, 1], [1]
    w6t = jnp.zeros((FINAL_ROWS, H), jnp.float32).at[0, :w6.shape[0]].set(w6[:, 0])
    b6b = jnp.full((1, H), b6[0], jnp.float32)     # scalar bias broadcast across lanes
    flat.append(w6t.astype(compute_dtype))
    flat.append(b6b)

    # --- Batch tiling: TB multiple of 1024 (packed-output sublanes >= 8); keep the
    # grid >= 2 steps when the batch is large enough so v7x can use both TCs. ---
    B_pad1 = _round_up(B, TB_MIN)
    tb_cap = max(TB_MIN, _round_up(pl.cdiv(B_pad1, 2), TB_MIN))
    TB = max(TB_MIN, min(block_rows, tb_cap))
    B_pad = _round_up(B, TB)
    # Cast to compute_dtype (bf16 input stream) fused with the batch pad by XLA.
    x = jnp.pad(x.astype(compute_dtype), ((0, B_pad - B), (0, 0)))

    grid = (B_pad // TB,)
    x_spec = pl.BlockSpec((TB, d_in), lambda i: (i, 0))
    out_spec = pl.BlockSpec((TB // ROW_BLOCK, ROW_BLOCK), lambda i: (i, 0))
    # Weights/biases: constant index_map -> DMA'd once, VMEM-resident across tiles.
    w_specs = [pl.BlockSpec(a.shape, lambda i: (0, 0)) for a in flat]

    # --- Advisory cost estimate. ---
    flops = 2 * B_pad * (d_in * H + (n_layers - 2) * H * H + FINAL_ROWS * H)
    bytes_accessed = (int(x.size) * x.dtype.itemsize
                      + B_pad * 4
                      + sum(int(a.size) * a.dtype.itemsize for a in flat))
    cost = pl.CostEstimate(flops=flops, transcendentals=B_pad,
                           bytes_accessed=bytes_accessed)

    out = pl.pallas_call(
        functools.partial(_mlp_kernel, compute_dtype=compute_dtype),
        out_shape=jax.ShapeDtypeStruct((B_pad // ROW_BLOCK, ROW_BLOCK), jnp.float32),
        grid=grid,
        in_specs=[x_spec] + w_specs,
        out_specs=out_spec,
        compiler_params=pltpu.CompilerParams(
            dimension_semantics=("parallel",)),
        cost_estimate=cost,
    )(x, *flat)

    # Packed [B_pad//128, 128] (batch row = m*128 + lane) -> real [B, 1] output.
    return out.reshape(B_pad, 1)[:B]


def init_params(key, num_dimensions=30, neuron_number=100):
    """Deterministic init mimicking torch.nn.Linear default (uniform +/- 1/sqrt(fan_in))."""
    dims = [(num_dimensions, neuron_number)] + \
           [(neuron_number, neuron_number)] * 4 + \
           [(neuron_number, 1)]
    params = []
    for (fan_in, fan_out) in dims:
        key, kw, kb = jax.random.split(key, 3)
        bound = 1.0 / jnp.sqrt(fan_in)
        w = jax.random.uniform(kw, (fan_in, fan_out), jnp.float32, -bound, bound)
        b = jax.random.uniform(kb, (fan_out,), jnp.float32, -bound, bound)
        params.append((w, b))
    return params


def reference_forward(x, params):
    h = x
    for i, (w, b) in enumerate(params):
        h = h @ w + b
        if i < len(params) - 1:
            h = jnp.maximum(h, 0.0)
    return jax.nn.sigmoid(h)


if __name__ == "__main__":
    key = jax.random.PRNGKey(0)
    k_x, k_p = jax.random.split(key)

    B, NUM_DIM, NEURONS = 8, 30, 100
    x = jax.random.normal(k_x, (B, NUM_DIM), jnp.float32)
    params = init_params(k_p, NUM_DIM, NEURONS)

    ref = reference_forward(x, params)

    # f32 matmul path: near-exact vs reference (approx-reciprocal tolerance).
    out_f32 = jax.block_until_ready(
        mlp_forward(x, params, compute_dtype=jnp.float32))
    assert out_f32.shape == (B, 1)
    assert jnp.allclose(out_f32, ref, atol=1e-2, rtol=0.0), \
        f"f32 mismatch: {jnp.max(jnp.abs(out_f32 - ref))}"

    # bf16 matmul / bf16 input stream (default fast path): loose tolerance.
    out_bf16 = jax.block_until_ready(
        mlp_forward(x, params, compute_dtype=jnp.bfloat16))
    assert out_bf16.shape == (B, 1)
    assert jnp.allclose(out_bf16, ref, atol=3e-2, rtol=0.0), \
        f"bf16 mismatch: {jnp.max(jnp.abs(out_bf16 - ref))}"

    print("KERNEL_OK")
</pallas_src>

<mosaic_0001>
module attributes {stable_mosaic.version = 11 : i64} {
  func.func @_mlp_kernel(%arg0: i32, %arg1: memref<1024x30xf32, #tpu.memory_space<vmem>>, %arg2: memref<30x128xf32, #tpu.memory_space<vmem>>, %arg3: memref<1x128xf32, #tpu.memory_space<vmem>>, %arg4: memref<128x128xf32, #tpu.memory_space<vmem>>, %arg5: memref<1x128xf32, #tpu.memory_space<vmem>>, %arg6: memref<128x128xf32, #tpu.memory_space<vmem>>, %arg7: memref<1x128xf32, #tpu.memory_space<vmem>>, %arg8: memref<128x128xf32, #tpu.memory_space<vmem>>, %arg9: memref<1x128xf32, #tpu.memory_space<vmem>>, %arg10: memref<128x128xf32, #tpu.memory_space<vmem>>, %arg11: memref<1x128xf32, #tpu.memory_space<vmem>>, %arg12: memref<16x128xf32, #tpu.memory_space<vmem>>, %arg13: memref<1x128xf32, #tpu.memory_space<vmem>>, %arg14: memref<8x128xf32, #tpu.memory_space<vmem>>) attributes {dimension_semantics = [#tpu.dimension_semantics<parallel>], iteration_bounds = array<i64: 1>, scalar_prefetch = 0 : i64, scratch_operands = 0 : i64, tpu.core_type = #tpu.core_type<tc>, window_params = [{transform_indices = @transform_0, window_bounds = array<i64: 1024, 30>}, {pipeline_mode = #tpu.pipeline_mode<synchronous>, transform_indices = @transform_1, window_bounds = array<i64: 30, 128>}, {pipeline_mode = #tpu.pipeline_mode<synchronous>, transform_indices = @transform_2, window_bounds = array<i64: 1, 128>}, {pipeline_mode = #tpu.pipeline_mode<synchronous>, transform_indices = @transform_3, window_bounds = array<i64: 128, 128>}, {pipeline_mode = #tpu.pipeline_mode<synchronous>, transform_indices = @transform_4, window_bounds = array<i64: 1, 128>}, {pipeline_mode = #tpu.pipeline_mode<synchronous>, transform_indices = @transform_5, window_bounds = array<i64: 128, 128>}, {pipeline_mode = #tpu.pipeline_mode<synchronous>, transform_indices = @transform_6, window_bounds = array<i64: 1, 128>}, {pipeline_mode = #tpu.pipeline_mode<synchronous>, transform_indices = @transform_7, window_bounds = array<i64: 128, 128>}, {pipeline_mode = #tpu.pipeline_mode<synchronous>, transform_indices = @transform_8, window_bounds = array<i64: 1, 128>}, {pipeline_mode = #tpu.pipeline_mode<synchronous>, transform_indices = @transform_9, window_bounds = array<i64: 128, 128>}, {pipeline_mode = #tpu.pipeline_mode<synchronous>, transform_indices = @transform_10, window_bounds = array<i64: 1, 128>}, {pipeline_mode = #tpu.pipeline_mode<synchronous>, transform_indices = @transform_11, window_bounds = array<i64: 16, 128>}, {pipeline_mode = #tpu.pipeline_mode<synchronous>, transform_indices = @transform_12, window_bounds = array<i64: 1, 128>}, {transform_indices = @transform_13, window_bounds = array<i64: 8, 128>}]} {
    %c0 = arith.constant 0 : index
    %c0_0 = arith.constant 0 : index
    %0 = vector.load %arg1[%c0, %c0_0] : memref<1024x30xf32, #tpu.memory_space<vmem>>, vector<1024x30xf32>
    %c0_1 = arith.constant 0 : index
    %c0_2 = arith.constant 0 : index
    %1 = vector.load %arg2[%c0_1, %c0_2] : memref<30x128xf32, #tpu.memory_space<vmem>>, vector<30x128xf32>
    %cst = arith.constant dense<0.000000e+00> : vector<1024x128xf32>
    %2 = tpu.matmul %0, %1, %cst {dimension_numbers = #tpu.dot_dimension_numbers<[1], [0], [0], [1], [0, 0, 1, 1], [], []>} : vector<1024x30xf32>, vector<30x128xf32>, vector<1024x128xf32> -> vector<1024x128xf32>
    %c0_3 = arith.constant 0 : index
    %c0_4 = arith.constant 0 : index
    %3 = vector.load %arg3[%c0_3, %c0_4] : memref<1x128xf32, #tpu.memory_space<vmem>>, vector<1x128xf32>
    %4 = vector.broadcast %3 : vector<1x128xf32> to vector<1024x128xf32>
    %5 = arith.addf %2, %4 : vector<1024x128xf32>
    %cst_5 = arith.constant 0.000000e+00 : f32
    %6 = vector.broadcast %cst_5 : f32 to vector<1024x128xf32>
    %7 = arith.maximumf %5, %6 : vector<1024x128xf32>
    %c0_6 = arith.constant 0 : index
    %c0_7 = arith.constant 0 : index
    %8 = vector.load %arg4[%c0_6, %c0_7] : memref<128x128xf32, #tpu.memory_space<vmem>>, vector<128x128xf32>
    %cst_8 = arith.constant dense<0.000000e+00> : vector<1024x128xf32>
    %9 = tpu.matmul %7, %8, %cst_8 {dimension_numbers = #tpu.dot_dimension_numbers<[1], [0], [0], [1], [0, 0, 1, 1], [], []>} : vector<1024x128xf32>, vector<128x128xf32>, vector<1024x128xf32> -> vector<1024x128xf32>
    %c0_9 = arith.constant 0 : index
    %c0_10 = arith.constant 0 : index
    %10 = vector.load %arg5[%c0_9, %c0_10] : memref<1x128xf32, #tpu.memory_space<vmem>>, vector<1x128xf32>
    %11 = vector.broadcast %10 : vector<1x128xf32> to vector<1024x128xf32>
    %12 = arith.addf %9, %11 : vector<1024x128xf32>
    %cst_11 = arith.constant 0.000000e+00 : f32
    %13 = vector.broadcast %cst_11 : f32 to vector<1024x128xf32>
    %14 = arith.maximumf %12, %13 : vector<1024x128xf32>
    %c0_12 = arith.constant 0 : index
    %c0_13 = arith.constant 0 : index
    %15 = vector.load %arg6[%c0_12, %c0_13] : memref<128x128xf32, #tpu.memory_space<vmem>>, vector<128x128xf32>
    %cst_14 = arith.constant dense<0.000000e+00> : vector<1024x128xf32>
    %16 = tpu.matmul %14, %15, %cst_14 {dimension_numbers = #tpu.dot_dimension_numbers<[1], [0], [0], [1], [0, 0, 1, 1], [], []>} : vector<1024x128xf32>, vector<128x128xf32>, vector<1024x128xf32> -> vector<1024x128xf32>
    %c0_15 = arith.constant 0 : index
    %c0_16 = arith.constant 0 : index
    %17 = vector.load %arg7[%c0_15, %c0_16] : memref<1x128xf32, #tpu.memory_space<vmem>>, vector<1x128xf32>
    %18 = vector.broadcast %17 : vector<1x128xf32> to vector<1024x128xf32>
    %19 = arith.addf %16, %18 : vector<1024x128xf32>
    %cst_17 = arith.constant 0.000000e+00 : f32
    %20 = vector.broadcast %cst_17 : f32 to vector<1024x128xf32>
    %21 = arith.maximumf %19, %20 : vector<1024x128xf32>
    %c0_18 = arith.constant 0 : index
    %c0_19 = arith.constant 0 : index
    %22 = vector.load %arg8[%c0_18, %c0_19] : memref<128x128xf32, #tpu.memory_space<vmem>>, vector<128x128xf32>
    %cst_20 = arith.constant dense<0.000000e+00> : vector<1024x128xf32>
    %23 = tpu.matmul %21, %22, %cst_20 {dimension_numbers = #tpu.dot_dimension_numbers<[1], [0], [0], [1], [0, 0, 1, 1], [], []>} : vector<1024x128xf32>, vector<128x128xf32>, vector<1024x128xf32> -> vector<1024x128xf32>
    %c0_21 = arith.constant 0 : index
    %c0_22 = arith.constant 0 : index
    %24 = vector.load %arg9[%c0_21, %c0_22] : memref<1x128xf32, #tpu.memory_space<vmem>>, vector<1x128xf32>
    %25 = vector.broadcast %24 : vector<1x128xf32> to vector<1024x128xf32>
    %26 = arith.addf %23, %25 : vector<1024x128xf32>
    %cst_23 = arith.constant 0.000000e+00 : f32
    %27 = vector.broadcast %cst_23 : f32 to vector<1024x128xf32>
    %28 = arith.maximumf %26, %27 : vector<1024x128xf32>
    %c0_24 = arith.constant 0 : index
    %c0_25 = arith.constant 0 : index
    %29 = vector.load %arg10[%c0_24, %c0_25] : memref<128x128xf32, #tpu.memory_space<vmem>>, vector<128x128xf32>
    %cst_26 = arith.constant dense<0.000000e+00> : vector<1024x128xf32>
    %30 = tpu.matmul %28, %29, %cst_26 {dimension_numbers = #tpu.dot_dimension_numbers<[1], [0], [0], [1], [0, 0, 1, 1], [], []>} : vector<1024x128xf32>, vector<128x128xf32>, vector<1024x128xf32> -> vector<1024x128xf32>
    %c0_27 = arith.constant 0 : index
    %c0_28 = arith.constant 0 : index
    %31 = vector.load %arg11[%c0_27, %c0_28] : memref<1x128xf32, #tpu.memory_space<vmem>>, vector<1x128xf32>
    %32 = vector.broadcast %31 : vector<1x128xf32> to vector<1024x128xf32>
    %33 = arith.addf %30, %32 : vector<1024x128xf32>
    %cst_29 = arith.constant 0.000000e+00 : f32
    %34 = vector.broadcast %cst_29 : f32 to vector<1024x128xf32>
    %35 = arith.maximumf %33, %34 : vector<1024x128xf32>
    %36 = vector.extract_strided_slice %35 {offsets = [0, 0], sizes = [128, 128], strides = [1, 1]} : vector<1024x128xf32> to vector<128x128xf32>
    %c0_30 = arith.constant 0 : index
    %c0_31 = arith.constant 0 : index
    %37 = vector.load %arg12[%c0_30, %c0_31] : memref<16x128xf32, #tpu.memory_space<vmem>>, vector<16x128xf32>
    %cst_32 = arith.constant dense<0.000000e+00> : vector<16x128xf32>
    %38 = tpu.matmul %37, %36, %cst_32 {dimension_numbers = #tpu.dot_dimension_numbers<[1], [1], [0], [0], [0, 0, 1, 0], [], []>} : vector<16x128xf32>, vector<128x128xf32>, vector<16x128xf32> -> vector<16x128xf32>
    %39 = vector.extract_strided_slice %38 {offsets = [0, 0], sizes = [1, 128], strides = [1, 1]} : vector<16x128xf32> to vector<1x128xf32>
    %40 = vector.extract_strided_slice %35 {offsets = [128, 0], sizes = [128, 128], strides = [1, 1]} : vector<1024x128xf32> to vector<128x128xf32>
    %c0_33 = arith.constant 0 : index
    %c0_34 = arith.constant 0 : index
    %41 = vector.load %arg12[%c0_33, %c0_34] : memref<16x128xf32, #tpu.memory_space<vmem>>, vector<16x128xf32>
    %cst_35 = arith.constant dense<0.000000e+00> : vector<16x128xf32>
    %42 = tpu.matmul %41, %40, %cst_35 {dimension_numbers = #tpu.dot_dimension_numbers<[1], [1], [0], [0], [0, 0, 1, 0], [], []>} : vector<16x128xf32>, vector<128x128xf32>, vector<16x128xf32> -> vector<16x128xf32>
    %43 = vector.extract_strided_slice %42 {offsets = [0, 0], sizes = [1, 128], strides = [1, 1]} : vector<16x128xf32> to vector<1x128xf32>
    %44 = vector.extract_strided_slice %35 {offsets = [256, 0], sizes = [128, 128], strides = [1, 1]} : vector<1024x128xf32> to vector<128x128xf32>
    %c0_36 = arith.constant 0 : index
    %c0_37 = arith.constant 0 : index
    %45 = vector.load %arg12[%c0_36, %c0_37] : memref<16x128xf32, #tpu.memory_space<vmem>>, vector<16x128xf32>
    %cst_38 = arith.constant dense<0.000000e+00> : vector<16x128xf32>
    %46 = tpu.matmul %45, %44, %cst_38 {dimension_numbers = #tpu.dot_dimension_numbers<[1], [1], [0], [0], [0, 0, 1, 0], [], []>} : vector<16x128xf32>, vector<128x128xf32>, vector<16x128xf32> -> vector<16x128xf32>
    %47 = vector.extract_strided_slice %46 {offsets = [0, 0], sizes = [1, 128], strides = [1, 1]} : vector<16x128xf32> to vector<1x128xf32>
    %48 = vector.extract_strided_slice %35 {offsets = [384, 0], sizes = [128, 128], strides = [1, 1]} : vector<1024x128xf32> to vector<128x128xf32>
    %c0_39 = arith.constant 0 : index
    %c0_40 = arith.constant 0 : index
    %49 = vector.load %arg12[%c0_39, %c0_40] : memref<16x128xf32, #tpu.memory_space<vmem>>, vector<16x128xf32>
    %cst_41 = arith.constant dense<0.000000e+00> : vector<16x128xf32>
    %50 = tpu.matmul %49, %48, %cst_41 {dimension_numbers = #tpu.dot_dimension_numbers<[1], [1], [0], [0], [0, 0, 1, 0], [], []>} : vector<16x128xf32>, vector<128x128xf32>, vector<16x128xf32> -> vector<16x128xf32>
    %51 = vector.extract_strided_slice %50 {offsets = [0, 0], sizes = [1, 128], strides = [1, 1]} : vector<16x128xf32> to vector<1x128xf32>
    %52 = vector.extract_strided_slice %35 {offsets = [512, 0], sizes = [128, 128], strides = [1, 1]} : vector<1024x128xf32> to vector<128x128xf32>
    %c0_42 = arith.constant 0 : index
    %c0_43 = arith.constant 0 : index
    %53 = vector.load %arg12[%c0_42, %c0_43] : memref<16x128xf32, #tpu.memory_space<vmem>>, vector<16x128xf32>
    %cst_44 = arith.constant dense<0.000000e+00> : vector<16x128xf32>
    %54 = tpu.matmul %53, %52, %cst_44 {dimension_numbers = #tpu.dot_dimension_numbers<[1], [1], [0], [0], [0, 0, 1, 0], [], []>} : vector<16x128xf32>, vector<128x128xf32>, vector<16x128xf32> -> vector<16x128xf32>
    %55 = vector.extract_strided_slice %54 {offsets = [0, 0], sizes = [1, 128], strides = [1, 1]} : vector<16x128xf32> to vector<1x128xf32>
    %56 = vector.extract_strided_slice %35 {offsets = [640, 0], sizes = [128, 128], strides = [1, 1]} : vector<1024x128xf32> to vector<128x128xf32>
    %c0_45 = arith.constant 0 : index
    %c0_46 = arith.constant 0 : index
    %57 = vector.load %arg12[%c0_45, %c0_46] : memref<16x128xf32, #tpu.memory_space<vmem>>, vector<16x128xf32>
    %cst_47 = arith.constant dense<0.000000e+00> : vector<16x128xf32>
    %58 = tpu.matmul %57, %56, %cst_47 {dimension_numbers = #tpu.dot_dimension_numbers<[1], [1], [0], [0], [0, 0, 1, 0], [], []>} : vector<16x128xf32>, vector<128x128xf32>, vector<16x128xf32> -> vector<16x128xf32>
    %59 = vector.extract_strided_slice %58 {offsets = [0, 0], sizes = [1, 128], strides = [1, 1]} : vector<16x128xf32> to vector<1x128xf32>
    %60 = vector.extract_strided_slice %35 {offsets = [768, 0], sizes = [128, 128], strides = [1, 1]} : vector<1024x128xf32> to vector<128x128xf32>
    %c0_48 = arith.constant 0 : index
    %c0_49 = arith.constant 0 : index
    %61 = vector.load %arg12[%c0_48, %c0_49] : memref<16x128xf32, #tpu.memory_space<vmem>>, vector<16x128xf32>
    %cst_50 = arith.constant dense<0.000000e+00> : vector<16x128xf32>
    %62 = tpu.matmul %61, %60, %cst_50 {dimension_numbers = #tpu.dot_dimension_numbers<[1], [1], [0], [0], [0, 0, 1, 0], [], []>} : vector<16x128xf32>, vector<128x128xf32>, vector<16x128xf32> -> vector<16x128xf32>
    %63 = vector.extract_strided_slice %62 {offsets = [0, 0], sizes = [1, 128], strides = [1, 1]} : vector<16x128xf32> to vector<1x128xf32>
    %64 = vector.extract_strided_slice %35 {offsets = [896, 0], sizes = [128, 128], strides = [1, 1]} : vector<1024x128xf32> to vector<128x128xf32>
    %c0_51 = arith.constant 0 : index
    %c0_52 = arith.constant 0 : index
    %65 = vector.load %arg12[%c0_51, %c0_52] : memref<16x128xf32, #tpu.memory_space<vmem>>, vector<16x128xf32>
    %cst_53 = arith.constant dense<0.000000e+00> : vector<16x128xf32>
    %66 = tpu.matmul %65, %64, %cst_53 {dimension_numbers = #tpu.dot_dimension_numbers<[1], [1], [0], [0], [0, 0, 1, 0], [], []>} : vector<16x128xf32>, vector<128x128xf32>, vector<16x128xf32> -> vector<16x128xf32>
    %67 = vector.extract_strided_slice %66 {offsets = [0, 0], sizes = [1, 128], strides = [1, 1]} : vector<16x128xf32> to vector<1x128xf32>
    %68 = tpu.concatenate %39, %43, %47, %51, %55, %59, %63, %67 in 0 : vector<1x128xf32>, vector<1x128xf32>, vector<1x128xf32>, vector<1x128xf32>, vector<1x128xf32>, vector<1x128xf32>, vector<1x128xf32>, vector<1x128xf32> -> vector<8x128xf32>
    %c0_54 = arith.constant 0 : index
    %c0_55 = arith.constant 0 : index
    %69 = vector.load %arg13[%c0_54, %c0_55] : memref<1x128xf32, #tpu.memory_space<vmem>>, vector<1x128xf32>
    %70 = vector.broadcast %69 : vector<1x128xf32> to vector<8x128xf32>
    %71 = arith.addf %68, %70 : vector<8x128xf32>
    %cst_56 = arith.constant 0.000000e+00 : f32
    %72 = vector.broadcast %cst_56 : f32 to vector<8x128xf32>
    %73 = arith.subf %72, %71 : vector<8x128xf32>
    %74 = math.exp %73 : vector<8x128xf32>
    %cst_57 = arith.constant 1.000000e+00 : f32
    %75 = vector.broadcast %cst_57 : f32 to vector<8x128xf32>
    %76 = arith.addf %75, %74 : vector<8x128xf32>
    %77 = tpu.reciprocal %76 {approx = true} : vector<8x128xf32> -> vector<8x128xf32>
    %c0_58 = arith.constant 0 : index
    %c0_59 = arith.constant 0 : index
    %78 = vector.load %arg14[%c0_58, %c0_59] : memref<8x128xf32, #tpu.memory_space<vmem>>, vector<8x128xf32>
    tpu.vector_store %arg14[%c0_58, %c0_59], %77 {strides = array<i32>} : memref<8x128xf32, #tpu.memory_space<vmem>>, vector<8x128xf32>,
    return
  }
  func.func @transform_0(%arg0: i32) -> (i32, i32) {
    %c0_i32 = arith.constant 0 : i32
    %c0_i32_0 = arith.constant 0 : i32
    return %arg0, %c0_i32 : i32, i32
  }
  func.func @transform_1(%arg0: i32) -> (i32, i32) {
    %c0_i32 = arith.constant 0 : i32
    %c0_i32_0 = arith.constant 0 : i32
    %c0_i32_1 = arith.constant 0 : i32
    return %c0_i32, %c0_i32_0 : i32, i32
  }
  func.func @transform_2(%arg0: i32) -> (i32, i32) {
    %c0_i32 = arith.constant 0 : i32
    %c0_i32_0 = arith.constant 0 : i32
    %c0_i32_1 = arith.constant 0 : i32
    return %c0_i32, %c0_i32_0 : i32, i32
  }
  func.func @transform_3(%arg0: i32) -> (i32, i32) {
    %c0_i32 = arith.constant 0 : i32
    %c0_i32_0 = arith.constant 0 : i32
    %c0_i32_1 = arith.constant 0 : i32
    return %c0_i32, %c0_i32_0 : i32, i32
  }
  func.func @transform_4(%arg0: i32) -> (i32, i32) {
    %c0_i32 = arith.constant 0 : i32
    %c0_i32_0 = arith.constant 0 : i32
    %c0_i32_1 = arith.constant 0 : i32
    return %c0_i32, %c0_i32_0 : i32, i32
  }
  func.func @transform_5(%arg0: i32) -> (i32, i32) {
    %c0_i32 = arith.constant 0 : i32
    %c0_i32_0 = arith.constant 0 : i32
    %c0_i32_1 = arith.constant 0 : i32
    return %c0_i32, %c0_i32_0 : i32, i32
  }
  func.func @transform_6(%arg0: i32) -> (i32, i32) {
    %c0_i32 = arith.constant 0 : i32
    %c0_i32_0 = arith.constant 0 : i32
    %c0_i32_1 = arith.constant 0 : i32
    return %c0_i32, %c0_i32_0 : i32, i32
  }
  func.func @transform_7(%arg0: i32) -> (i32, i32) {
    %c0_i32 = arith.constant 0 : i32
    %c0_i32_0 = arith.constant 0 : i32
    %c0_i32_1 = arith.constant 0 : i32
    return %c0_i32, %c0_i32_0 : i32, i32
  }
  func.func @transform_8(%arg0: i32) -> (i32, i32) {
    %c0_i32 = arith.constant 0 : i32
    %c0_i32_0 = arith.constant 0 : i32
    %c0_i32_1 = arith.constant 0 : i32
    return %c0_i32, %c0_i32_0 : i32, i32
  }
  func.func @transform_9(%arg0: i32) -> (i32, i32) {
    %c0_i32 = arith.constant 0 : i32
    %c0_i32_0 = arith.constant 0 : i32
    %c0_i32_1 = arith.constant 0 : i32
    return %c0_i32, %c0_i32_0 : i32, i32
  }
  func.func @transform_10(%arg0: i32) -> (i32, i32) {
    %c0_i32 = arith.constant 0 : i32
    %c0_i32_0 = arith.constant 0 : i32
    %c0_i32_1 = arith.constant 0 : i32
    return %c0_i32, %c0_i32_0 : i32, i32
  }
  func.func @transform_11(%arg0: i32) -> (i32, i32) {
    %c0_i32 = arith.constant 0 : i32
    %c0_i32_0 = arith.constant 0 : i32
    %c0_i32_1 = arith.constant 0 : i32
    return %c0_i32, %c0_i32_0 : i32, i32
  }
  func.func @transform_12(%arg0: i32) -> (i32, i32) {
    %c0_i32 = arith.constant 0 : i32
    %c0_i32_0 = arith.constant 0 : i32
    %c0_i32_1 = arith.constant 0 : i32
    return %c0_i32, %c0_i32_0 : i32, i32
  }
  func.func @transform_13(%arg0: i32) -> (i32, i32) {
    %c0_i32 = arith.constant 0 : i32
    %c0_i32_0 = arith.constant 0 : i32
    return %arg0, %c0_i32 : i32, i32
  }
}

</mosaic_0001>

<llo_original>
// kernel: tpu_custom_call.1
$region0: #{tpu_custom_call.1}
  #allocation0 [shape = 'u32[]', space=smem, size = 0x4, offset = 0x4, fixed_abs, tag = 'smem constant byte address 0x4 - core index']
  #allocation1 [shape = 'u32[144,128]{1,0:T(1,128)}', space=vmem, size = 0x12000, scoped, tag = 'internal scratch']
  %s0 = inlined_call_operand.vmem [shape: f32[1024,30], index: 0, kind: input, shape index: {}]
  %s1 = inlined_call_operand.vmem [shape: f32[30,128], index: 1, kind: input, shape index: {}]
  %s2 = inlined_call_operand.vmem [shape: f32[1,128], index: 2, kind: input, shape index: {}]
  %s3 = inlined_call_operand.vmem [shape: f32[128,128], index: 3, kind: input, shape index: {}]
  %s4 = inlined_call_operand.vmem [shape: f32[1,128], index: 4, kind: input, shape index: {}]
  %s5 = inlined_call_operand.vmem [shape: f32[128,128], index: 5, kind: input, shape index: {}]
  %s6 = inlined_call_operand.vmem [shape: f32[1,128], index: 6, kind: input, shape index: {}]
  %s7 = inlined_call_operand.vmem [shape: f32[128,128], index: 7, kind: input, shape index: {}]
  %s8 = inlined_call_operand.vmem [shape: f32[1,128], index: 8, kind: input, shape index: {}]
  %s9 = inlined_call_operand.vmem [shape: f32[128,128], index: 9, kind: input, shape index: {}]
  %s10 = inlined_call_operand.vmem [shape: f32[1,128], index: 10, kind: input, shape index: {}]
  %s11 = inlined_call_operand.vmem [shape: f32[16,128], index: 11, kind: input, shape index: {}]
  %s12 = inlined_call_operand.vmem [shape: f32[1,128], index: 12, kind: input, shape index: {}]
  %s13 = inlined_call_operand.hbm [shape: f32[8,128], index: 13, kind: output, shape index: {}]
  %s14 = sld [smem:[#allocation0]]
  $region62: #{tpu_custom_call.1} parent=0
    _
  %s16 = ssub.s32 1, %s14
  %s17 = scalar_select 0, %s16, %s14
  $region1: #{tpu_custom_call.1} parent=0
    #allocation2 [shape = 'u8[4096]{0}', space=vmem, size = 0x1000, scoped, tag = 'output window, operand 0, single buffered']
    #allocation3 [shape = 's32[1]{0}', space=sflag, size = 0x4, scoped, tag = 'scoped memory for tpu_custom_call.1']
    %18 = vsyncpa [#allocation3], 0
    // Predicated region
    $region2: #{tpu_custom_call.1} parent=1 // pred_check
      _
    $region3: #{tpu_custom_call.1} parent=1 // pred_check_branch
      %20 = sbr.rel (0) target = $region5
    $region4: #{tpu_custom_call.1} parent=1 // pred_region
      _
    $region5: #{tpu_custom_call.1} parent=1 // pred_fallthru
      _
    // Predicated region
    $region6: #{tpu_custom_call.1} parent=1 // pred_check
      _
    $region7: #{tpu_custom_call.1} parent=1 // pred_check_branch
      %22 = sbr.rel (0) target = $region9
    $region8: #{tpu_custom_call.1} parent=1 // pred_region
      _
    $region9: #{tpu_custom_call.1} parent=1 // pred_fallthru
      _
    // Predicated region
    $region10: #{tpu_custom_call.1} parent=1 // pred_check
      _
    $region11: #{tpu_custom_call.1} parent=1 // pred_check_branch
      %24 = sbr.rel (0) target = $region13
    $region12: #{tpu_custom_call.1} parent=1 // pred_region
      _
    $region13: #{tpu_custom_call.1} parent=1 // pred_fallthru
      _
    // Predicated region
    $region14: #{tpu_custom_call.1} parent=1 // pred_check
      _
    $region15: #{tpu_custom_call.1} parent=1 // pred_check_branch
      %26 = sbr.rel (0) target = $region17
    $region16: #{tpu_custom_call.1} parent=1 // pred_region
      _
    $region17: #{tpu_custom_call.1} parent=1 // pred_fallthru
      _
    // Predicated region
    $region18: #{tpu_custom_call.1} parent=1 // pred_check
      _
    $region19: #{tpu_custom_call.1} parent=1 // pred_check_branch
      %28 = sbr.rel (0) target = $region21
    $region20: #{tpu_custom_call.1} parent=1 // pred_region
      _
    $region21: #{tpu_custom_call.1} parent=1 // pred_fallthru
      _
    // Predicated region
    $region22: #{tpu_custom_call.1} parent=1 // pred_check
      _
    $region23: #{tpu_custom_call.1} parent=1 // pred_check_branch
      %30 = sbr.rel (0) target = $region25
    $region24: #{tpu_custom_call.1} parent=1 // pred_region
      _
    $region25: #{tpu_custom_call.1} parent=1 // pred_fallthru
      _
    // Predicated region
    $region26: #{tpu_custom_call.1} parent=1 // pred_check
      _
    $region27: #{tpu_custom_call.1} parent=1 // pred_check_branch
      %32 = sbr.rel (0) target = $region29
    $region28: #{tpu_custom_call.1} parent=1 // pred_region
      _
    $region29: #{tpu_custom_call.1} parent=1 // pred_fallthru
      _
    // Predicated region
    $region30: #{tpu_custom_call.1} parent=1 // pred_check
      _
    $region31: #{tpu_custom_call.1} parent=1 // pred_check_branch
      %34 = sbr.rel (0) target = $region33
    $region32: #{tpu_custom_call.1} parent=1 // pred_region
      _
    $region33: #{tpu_custom_call.1} parent=1 // pred_fallthru
      _
    // Predicated region
    $region34: #{tpu_custom_call.1} parent=1 // pred_check
      _
    $region35: #{tpu_custom_call.1} parent=1 // pred_check_branch
      %36 = sbr.rel (0) target = $region37
    $region36: #{tpu_custom_call.1} parent=1 // pred_region
      _
    $region37: #{tpu_custom_call.1} parent=1 // pred_fallthru
      _
    // Predicated region
    $region38: #{tpu_custom_call.1} parent=1 // pred_check
      _
    $region39: #{tpu_custom_call.1} parent=1 // pred_check_branch
      %38 = sbr.rel (0) target = $region41
    $region40: #{tpu_custom_call.1} parent=1 // pred_region
      _
    $region41: #{tpu_custom_call.1} parent=1 // pred_fallthru
      _
    // Predicated region
    $region42: #{tpu_custom_call.1} parent=1 // pred_check
      _
    $region43: #{tpu_custom_call.1} parent=1 // pred_check_branch
      %40 = sbr.rel (0) target = $region45
    $region44: #{tpu_custom_call.1} parent=1 // pred_region
      _
    $region45: #{tpu_custom_call.1} parent=1 // pred_fallthru
      _
    // Predicated region
    $region46: #{tpu_custom_call.1} parent=1 // pred_check
      _
    $region47: #{tpu_custom_call.1} parent=1 // pred_check_branch
      %42 = sbr.rel (0) target = $region49
    $region48: #{tpu_custom_call.1} parent=1 // pred_region
      _
    $region49: #{tpu_custom_call.1} parent=1 // pred_fallthru
      _
    // Predicated region
    $region50: #{tpu_custom_call.1} parent=1 // pred_check
      _
    $region51: #{tpu_custom_call.1} parent=1 // pred_check_branch
      %44 = sbr.rel (0) target = $region53
    $region52: #{tpu_custom_call.1} parent=1 // pred_region
      _
    $region53: #{tpu_custom_call.1} parent=1 // pred_fallthru
      _
    %v45 = vld [vmem:[%s0] sm:$0xff]
    %v46 = vld [vmem:[%s0 + $0x8] sm:$0xff]
    %v47 = vld [vmem:[%s0 + $0x10] sm:$0xff]
    %v48 = vld [vmem:[%s0 + $0x18] sm:$0xff]
    %v49 = vld [vmem:[%s0 + $0x20] sm:$0xff]
    %v50 = vld [vmem:[%s0 + $0x28] sm:$0xff]
    %v51 = vld [vmem:[%s0 + $0x30] sm:$0xff]
    %v52 = vld [vmem:[%s0 + $0x38] sm:$0xff]
    %v53 = vld [vmem:[%s0 + $0x40] sm:$0xff]
    %v54 = vld [vmem:[%s0 + $0x48] sm:$0xff]
    %v55 = vld [vmem:[%s0 + $0x50] sm:$0xff]
    %v56 = vld [vmem:[%s0 + $0x58] sm:$0xff]
    %v57 = vld [vmem:[%s0 + $0x60] sm:$0xff]
    %v58 = vld [vmem:[%s0 + $0x68] sm:$0xff]
    %v59 = vld [vmem:[%s0 + $0x70] sm:$0xff]
    %v60 = vld [vmem:[%s0 + $0x78] sm:$0xff]
    %v61 = vld [vmem:[%s0 + $0x80] sm:$0xff]
    %v62 = vld [vmem:[%s0 + $0x88] sm:$0xff]
    %v63 = vld [vmem:[%s0 + $0x90] sm:$0xff]
    %v64 = vld [vmem:[%s0 + $0x98] sm:$0xff]
    %v65 = vld [vmem:[%s0 + $0xa0] sm:$0xff]
    %v66 = vld [vmem:[%s0 + $0xa8] sm:$0xff]
    %v67 = vld [vmem:[%s0 + $0xb0] sm:$0xff]
    %v68 = vld [vmem:[%s0 + $0xb8] sm:$0xff]
    %v69 = vld [vmem:[%s0 + $0xc0] sm:$0xff]
    %v70 = vld [vmem:[%s0 + $0xc8] sm:$0xff]
    %v71 = vld [vmem:[%s0 + $0xd0] sm:$0xff]
    %v72 = vld [vmem:[%s0 + $0xd8] sm:$0xff]
    %v73 = vld [vmem:[%s0 + $0xe0] sm:$0xff]
    %v74 = vld [vmem:[%s0 + $0xe8] sm:$0xff]
    %v75 = vld [vmem:[%s0 + $0xf0] sm:$0xff]
    %v76 = vld [vmem:[%s0 + $0xf8] sm:$0xff]
    %v77 = vld [vmem:[%s0 + $0x100] sm:$0xff]
    %v78 = vld [vmem:[%s0 + $0x108] sm:$0xff]
    %v79 = vld [vmem:[%s0 + $0x110] sm:$0xff]
    %v80 = vld [vmem:[%s0 + $0x118] sm:$0xff]
    %v81 = vld [vmem:[%s0 + $0x120] sm:$0xff]
    %v82 = vld [vmem:[%s0 + $0x128] sm:$0xff]
    %v83 = vld [vmem:[%s0 + $0x130] sm:$0xff]
    %v84 = vld [vmem:[%s0 + $0x138] sm:$0xff]
    %v85 = vld [vmem:[%s0 + $0x140] sm:$0xff]
    %v86 = vld [vmem:[%s0 + $0x148] sm:$0xff]
    %v87 = vld [vmem:[%s0 + $0x150] sm:$0xff]
    %v88 = vld [vmem:[%s0 + $0x158] sm:$0xff]
    %v89 = vld [vmem:[%s0 + $0x160] sm:$0xff]
    %v90 = vld [vmem:[%s0 + $0x168] sm:$0xff]
    %v91 = vld [vmem:[%s0 + $0x170] sm:$0xff]
    %v92 = vld [vmem:[%s0 + $0x178] sm:$0xff]
    %v93 = vld [vmem:[%s0 + $0x180] sm:$0xff]
    %v94 = vld [vmem:[%s0 + $0x188] sm:$0xff]
    %v95 = vld [vmem:[%s0 + $0x190] sm:$0xff]
    %v96 = vld [vmem:[%s0 + $0x198] sm:$0xff]
    %v97 = vld [vmem:[%s0 + $0x1a0] sm:$0xff]
    %v98 = vld [vmem:[%s0 + $0x1a8] sm:$0xff]
    %v99 = vld [vmem:[%s0 + $0x1b0] sm:$0xff]
    %v100 = vld [vmem:[%s0 + $0x1b8] sm:$0xff]
    %v101 = vld [vmem:[%s0 + $0x1c0] sm:$0xff]
    %v102 = vld [vmem:[%s0 + $0x1c8] sm:$0xff]
    %v103 = vld [vmem:[%s0 + $0x1d0] sm:$0xff]
    %v104 = vld [vmem:[%s0 + $0x1d8] sm:$0xff]
    %v105 = vld [vmem:[%s0 + $0x1e0] sm:$0xff]
    %v106 = vld [vmem:[%s0 + $0x1e8] sm:$0xff]
    %v107 = vld [vmem:[%s0 + $0x1f0] sm:$0xff]
    %v108 = vld [vmem:[%s0 + $0x1f8] sm:$0xff]
    %v109 = vld [vmem:[%s0 + $0x200] sm:$0xff]
    %v110 = vld [vmem:[%s0 + $0x208] sm:$0xff]
    %v111 = vld [vmem:[%s0 + $0x210] sm:$0xff]
    %v112 = vld [vmem:[%s0 + $0x218] sm:$0xff]
    %v113 = vld [vmem:[%s0 + $0x220] sm:$0xff]
    %v114 = vld [vmem:[%s0 + $0x228] sm:$0xff]
    %v115 = vld [vmem:[%s0 + $0x230] sm:$0xff]
    %v116 = vld [vmem:[%s0 + $0x238] sm:$0xff]
    %v117 = vld [vmem:[%s0 + $0x240] sm:$0xff]
    %v118 = vld [vmem:[%s0 + $0x248] sm:$0xff]
    %v119 = vld [vmem:[%s0 + $0x250] sm:$0xff]
    %v120 = vld [vmem:[%s0 + $0x258] sm:$0xff]
    %v121 = vld [vmem:[%s0 + $0x260] sm:$0xff]
    %v122 = vld [vmem:[%s0 + $0x268] sm:$0xff]
    %v123 = vld [vmem:[%s0 + $0x270] sm:$0xff]
    %v124 = vld [vmem:[%s0 + $0x278] sm:$0xff]
    %v125 = vld [vmem:[%s0 + $0x280] sm:$0xff]
    %v126 = vld [vmem:[%s0 + $0x288] sm:$0xff]
    %v127 = vld [vmem:[%s0 + $0x290] sm:$0xff]
    %v128 = vld [vmem:[%s0 + $0x298] sm:$0xff]
    %v129 = vld [vmem:[%s0 + $0x2a0] sm:$0xff]
    %v130 = vld [vmem:[%s0 + $0x2a8] sm:$0xff]
    %v131 = vld [vmem:[%s0 + $0x2b0] sm:$0xff]
    %v132 = vld [vmem:[%s0 + $0x2b8] sm:$0xff]
    %v133 = vld [vmem:[%s0 + $0x2c0] sm:$0xff]
    %v134 = vld [vmem:[%s0 + $0x2c8] sm:$0xff]
    %v135 = vld [vmem:[%s0 + $0x2d0] sm:$0xff]
    %v136 = vld [vmem:[%s0 + $0x2d8] sm:$0xff]
    %v137 = vld [vmem:[%s0 + $0x2e0] sm:$0xff]
    %v138 = vld [vmem:[%s0 + $0x2e8] sm:$0xff]
    %v139 = vld [vmem:[%s0 + $0x2f0] sm:$0xff]
    %v140 = vld [vmem:[%s0 + $0x2f8] sm:$0xff]
    %v141 = vld [vmem:[%s0 + $0x300] sm:$0xff]
    %v142 = vld [vmem:[%s0 + $0x308] sm:$0xff]
    %v143 = vld [vmem:[%s0 + $0x310] sm:$0xff]
    %v144 = vld [vmem:[%s0 + $0x318] sm:$0xff]
    %v145 = vld [vmem:[%s0 + $0x320] sm:$0xff]
    %v146 = vld [vmem:[%s0 + $0x328] sm:$0xff]
    %v147 = vld [vmem:[%s0 + $0x330] sm:$0xff]
    %v148 = vld [vmem:[%s0 + $0x338] sm:$0xff]
    %v149 = vld [vmem:[%s0 + $0x340] sm:$0xff]
    %v150 = vld [vmem:[%s0 + $0x348] sm:$0xff]
    %v151 = vld [vmem:[%s0 + $0x350] sm:$0xff]
    %v152 = vld [vmem:[%s0 + $0x358] sm:$0xff]
    %v153 = vld [vmem:[%s0 + $0x360] sm:$0xff]
    %v154 = vld [vmem:[%s0 + $0x368] sm:$0xff]
    %v155 = vld [vmem:[%s0 + $0x370] sm:$0xff]
    %v156 = vld [vmem:[%s0 + $0x378] sm:$0xff]
    %v157 = vld [vmem:[%s0 + $0x380] sm:$0xff]
    %v158 = vld [vmem:[%s0 + $0x388] sm:$0xff]
    %v159 = vld [vmem:[%s0 + $0x390] sm:$0xff]
    %v160 = vld [vmem:[%s0 + $0x398] sm:$0xff]
    %v161 = vld [vmem:[%s0 + $0x3a0] sm:$0xff]
    %v162 = vld [vmem:[%s0 + $0x3a8] sm:$0xff]
    %v163 = vld [vmem:[%s0 + $0x3b0] sm:$0xff]
    %v164 = vld [vmem:[%s0 + $0x3b8] sm:$0xff]
    %v165 = vld [vmem:[%s0 + $0x3c0] sm:$0xff]
    %v166 = vld [vmem:[%s0 + $0x3c8] sm:$0xff]
    %v167 = vld [vmem:[%s0 + $0x3d0] sm:$0xff]
    %v168 = vld [vmem:[%s0 + $0x3d8] sm:$0xff]
    %v169 = vld [vmem:[%s0 + $0x3e0] sm:$0xff]
    %v170 = vld [vmem:[%s0 + $0x3e8] sm:$0xff]
    %v171 = vld [vmem:[%s0 + $0x3f0] sm:$0xff]
    %v172 = vld [vmem:[%s0 + $0x3f8] sm:$0xff]
    %v173 = vld [vmem:[%s1] sm:$0xff]
    %v174 = vld [vmem:[%s1 + $0x8] sm:$0xff]
    %v175 = vld [vmem:[%s1 + $0x10] sm:$0xff]
    %v176 = vld [vmem:[%s1 + $0x18] sm:$0x3f]
    %v177 = vld [vmem:[%s2] sm:$0x1]
    %v179 = vlaneseq
    %v180 = vshrl.u32 %v179, 7
    %v181 = vsub.s32 0, %v180
    %v182 = vrot.slane %v177, %v181
    %vm184 = vcmask 244736
    %v186 = vsel %vm184, %v45, 0
    %v189 = vsel %vm184, %v46, 0
    %v192 = vsel %vm184, %v47, 0
    %v195 = vsel %vm184, %v48, 0
    %v198 = vsel %vm184, %v49, 0
    %v201 = vsel %vm184, %v50, 0
    %v204 = vsel %vm184, %v51, 0
    %v207 = vsel %vm184, %v52, 0
    %v210 = vsel %vm184, %v53, 0
    %v213 = vsel %vm184, %v54, 0
    %v216 = vsel %vm184, %v55, 0
    %v219 = vsel %vm184, %v56, 0
    %v222 = vsel %vm184, %v57, 0
    %v225 = vsel %vm184, %v58, 0
    %v228 = vsel %vm184, %v59, 0
    %v231 = vsel %vm184, %v60, 0
    %v234 = vsel %vm184, %v61, 0
    %v237 = vsel %vm184, %v62, 0
    %v240 = vsel %vm184, %v63, 0
    %v243 = vsel %vm184, %v64, 0
    %v246 = vsel %vm184, %v65, 0
    %v249 = vsel %vm184, %v66, 0
    %v252 = vsel %vm184, %v67, 0
    %v255 = vsel %vm184, %v68, 0
    %v258 = vsel %vm184, %v69, 0
    %v261 = vsel %vm184, %v70, 0
    %v264 = vsel %vm184, %v71, 0
    %v267 = vsel %vm184, %v72, 0
    %v270 = vsel %vm184, %v73, 0
    %v273 = vsel %vm184, %v74, 0
    %v276 = vsel %vm184, %v75, 0
    %v279 = vsel %vm184, %v76, 0
    %v282 = vsel %vm184, %v77, 0
    %v285 = vsel %vm184, %v78, 0
    %v288 = vsel %vm184, %v79, 0
    %v291 = vsel %vm184, %v80, 0
    %v294 = vsel %vm184, %v81, 0
    %v297 = vsel %vm184, %v82, 0
    %v300 = vsel %vm184, %v83, 0
    %v303 = vsel %vm184, %v84, 0
    %v306 = vsel %vm184, %v85, 0
    %v309 = vsel %vm184, %v86, 0
    %v312 = vsel %vm184, %v87, 0
    %v315 = vsel %vm184, %v88, 0
    %v318 = vsel %vm184, %v89, 0
    %v321 = vsel %vm184, %v90, 0
    %v324 = vsel %vm184, %v91, 0
    %v327 = vsel %vm184, %v92, 0
    %v330 = vsel %vm184, %v93, 0
    %v333 = vsel %vm184, %v94, 0
    %v336 = vsel %vm184, %v95, 0
    %v339 = vsel %vm184, %v96, 0
    %v342 = vsel %vm184, %v97, 0
    %v345 = vsel %vm184, %v98, 0
    %v348 = vsel %vm184, %v99, 0
    %v351 = vsel %vm184, %v100, 0
    %v354 = vsel %vm184, %v101, 0
    %v357 = vsel %vm184, %v102, 0
    %v360 = vsel %vm184, %v103, 0
    %v363 = vsel %vm184, %v104, 0
    %v366 = vsel %vm184, %v105, 0
    %v369 = vsel %vm184, %v106, 0
    %v372 = vsel %vm184, %v107, 0
    %v375 = vsel %vm184, %v108, 0
    %v378 = vsel %vm184, %v109, 0
    %v381 = vsel %vm184, %v110, 0
    %v384 = vsel %vm184, %v111, 0
    %v387 = vsel %vm184, %v112, 0
    %v390 = vsel %vm184, %v113, 0
    %v393 = vsel %vm184, %v114, 0
    %v396 = vsel %vm184, %v115, 0
    %v399 = vsel %vm184, %v116, 0
    %v402 = vsel %vm184, %v117, 0
    %v405 = vsel %vm184, %v118, 0
    %v408 = vsel %vm184, %v119, 0
    %v411 = vsel %vm184, %v120, 0
    %v414 = vsel %vm184, %v121, 0
    %v417 = vsel %vm184, %v122, 0
    %v420 = vsel %vm184, %v123, 0
    %v423 = vsel %vm184, %v124, 0
    %v426 = vsel %vm184, %v125, 0
    %v429 = vsel %vm184, %v126, 0
    %v432 = vsel %vm184, %v127, 0
    %v435 = vsel %vm184, %v128, 0
    %v438 = vsel %vm184, %v129, 0
    %v441 = vsel %vm184, %v130, 0
    %v444 = vsel %vm184, %v131, 0
    %v447 = vsel %vm184, %v132, 0
    %v450 = vsel %vm184, %v133, 0
    %v453 = vsel %vm184, %v134, 0
    %v456 = vsel %vm184, %v135, 0
    %v459 = vsel %vm184, %v136, 0
    %v462 = vsel %vm184, %v137, 0
    %v465 = vsel %vm184, %v138, 0
    %v468 = vsel %vm184, %v139, 0
    %v471 = vsel %vm184, %v140, 0
    %v474 = vsel %vm184, %v141, 0
    %v477 = vsel %vm184, %v142, 0
    %v480 = vsel %vm184, %v143, 0
    %v483 = vsel %vm184, %v144, 0
    %v486 = vsel %vm184, %v145, 0
    %v489 = vsel %vm184, %v146, 0
    %v492 = vsel %vm184, %v147, 0
    %v495 = vsel %vm184, %v148, 0
    %v498 = vsel %vm184, %v149, 0
    %v501 = vsel %vm184, %v150, 0
    %v504 = vsel %vm184, %v151, 0
    %v507 = vsel %vm184, %v152, 0
    %v510 = vsel %vm184, %v153, 0
    %v513 = vsel %vm184, %v154, 0
    %v516 = vsel %vm184, %v155, 0
    %v519 = vsel %vm184, %v156, 0
    %v522 = vsel %vm184, %v157, 0
    %v525 = vsel %vm184, %v158, 0
    %v528 = vsel %vm184, %v159, 0
    %v531 = vsel %vm184, %v160, 0
    %v534 = vsel %vm184, %v161, 0
    %v537 = vsel %vm184, %v162, 0
    %v540 = vsel %vm184, %v163, 0
    %v543 = vsel %vm184, %v164, 0
    %v546 = vsel %vm184, %v165, 0
    %v549 = vsel %vm184, %v166, 0
    %v552 = vsel %vm184, %v167, 0
    %v555 = vsel %vm184, %v168, 0
    %v558 = vsel %vm184, %v169, 0
    %v561 = vsel %vm184, %v170, 0
    %v564 = vsel %vm184, %v171, 0
    %v567 = vsel %vm184, %v172, 0
    %vm569 = vcmask 1045504
    %v571 = vsel %vm569, %v176, 0
    %573 = vmatprep.subr.mxu0 0.0
    %574 = vmatpush1.msra.mxu0 0.0
    %575 = vmatprep.subr.mxu0 0.0
    %576 = vmatpush1.msra.mxu0 0.0
    %577 = vmatprep.subr.mxu0 0.0
    %578 = vmatpush1.msra.mxu0 0.0
    %579 = vmatprep.subr.mxu0 0.0
    %580 = vmatpush1.msra.mxu0 0.0
    %581 = vmatprep.subr.mxu0 0.0
    %582 = vmatpush1.msra.mxu0 0.0
    %583 = vmatprep.subr.mxu0 0.0
    %584 = vmatpush1.msra.mxu0 0.0
    %585 = vmatprep.subr.mxu0 0.0
    %586 = vmatpush1.msra.mxu0 0.0
    %587 = vmatprep.subr.mxu0 0.0
    %588 = vmatpush1.msra.mxu0 0.0
    %589 = vmatprep.subr.mxu0 0.0
    %590 = vmatpush1.msra.mxu0 0.0
    %591 = vmatprep.subr.mxu0 0.0
    %592 = vmatpush1.msra.mxu0 0.0
    %593 = vmatprep.subr.mxu0 0.0
    %594 = vmatpush1.msra.mxu0 0.0
    %595 = vmatprep.subr.mxu0 0.0
    %596 = vmatpush1.msra.mxu0 0.0
    %597 = vmatprep.subr.mxu0 0.0
    %598 = vmatpush1.msra.mxu0 %v571
    %599 = vmatprep.subr.mxu0 0.0
    %600 = vmatpush1.msra.mxu0 %v175
    %601 = vmatprep.subr.mxu0 0.0
    %602 = vmatpush1.msra.mxu0 %v174
    %603 = vmatprep.subr.mxu0 0.0
    %604 = vmatpush1.msra.mxu0 %v173
    %605 = vmatprep.subr.mxu0 0.0
    %606 = vmatpush2.msra.mxu0 0.0
    %607 = vmatprep.subr.mxu0 0.0
    %608 = vmatpush2.msra.mxu0 0.0
    %609 = vmatprep.subr.mxu0 0.0
    %610 = vmatpush2.msra.mxu0 0.0
    %611 = vmatprep.subr.mxu0 0.0
    %612 = vmatpush2.msra.mxu0 0.0
    %613 = vmatprep.subr.mxu0 0.0
    %614 = vmatpush2.msra.mxu0 0.0
    %615 = vmatprep.subr.mxu0 0.0
    %616 = vmatpush2.msra.mxu0 0.0
    %617 = vmatprep.subr.mxu0 0.0
    %618 = vmatpush2.msra.mxu0 0.0
    %619 = vmatprep.subr.mxu0 0.0
    %620 = vmatpush2.msra.mxu0 0.0
    %621 = vmatprep.subr.mxu0 0.0
    %622 = vmatpush2.msra.mxu0 0.0
    %623 = vmatprep.subr.mxu0 0.0
    %624 = vmatpush2.msra.mxu0 0.0
    %625 = vmatprep.subr.mxu0 0.0
    %626 = vmatpush2.msra.mxu0 0.0
    %627 = vmatprep.subr.mxu0 0.0
    %628 = vmatpush2.msra.mxu0 0.0
    %629 = vmatprep.subr.mxu0 0.0
    %630 = vmatpush2.msra.mxu0 0.0
    %631 = vmatprep.subr.mxu0 0.0
    %632 = vmatpush2.msra.mxu0 0.0
    %633 = vmatprep.subr.mxu0 0.0
    %634 = vmatpush2.msra.mxu0 0.0
    %635 = vmatprep.subr.mxu0 0.0
    %636 = vmatpush2.msra.mxu0 0.0
    %637 = vmatprep.mubr.f32.mxu0 0.0
    %638 = vmatmul.mubr.f32.gmra.mxu0 %v186
    %v639 = vpop.f32.mrf.mxu0
    %v640 = vadd.f32 %v182, %v639
    %v641 = vpop.f32.mrf.mxu0
    %642 = vmatprep.mubr.f32.mxu0 0.0
    %643 = vmatmul.mubr.f32.gmra.mxu0 %v189
    %v644 = vpop.f32.mrf.mxu0
    %v645 = vadd.f32 %v182, %v644
    %v646 = vpop.f32.mrf.mxu0
    %647 = vmatprep.mubr.f32.mxu0 0.0
    %648 = vmatmul.mubr.f32.gmra.mxu0 %v192
    %v649 = vpop.f32.mrf.mxu0
    %v650 = vadd.f32 %v182, %v649
    %v651 = vpop.f32.mrf.mxu0
    %652 = vmatprep.mubr.f32.mxu0 0.0
    %653 = vmatmul.mubr.f32.gmra.mxu0 %v195
    %v654 = vpop.f32.mrf.mxu0
    %v655 = vadd.f32 %v182, %v654
    %v656 = vpop.f32.mrf.mxu0
    %657 = vmatprep.mubr.f32.mxu0 0.0
    %658 = vmatmul.mubr.f32.gmra.mxu0 %v198
    %v659 = vpop.f32.mrf.mxu0
    %v660 = vadd.f32 %v182, %v659
    %v661 = vpop.f32.mrf.mxu0
    %662 = vmatprep.mubr.f32.mxu0 0.0
    %663 = vmatmul.mubr.f32.gmra.mxu0 %v201
    %v664 = vpop.f32.mrf.mxu0
    %v665 = vadd.f32 %v182, %v664
    %v666 = vpop.f32.mrf.mxu0
    %667 = vmatprep.mubr.f32.mxu0 0.0
    %668 = vmatmul.mubr.f32.gmra.mxu0 %v204
    %v669 = vpop.f32.mrf.mxu0
    %v670 = vadd.f32 %v182, %v669
    %v671 = vpop.f32.mrf.mxu0
    %672 = vmatprep.mubr.f32.mxu0 0.0
    %673 = vmatmul.mubr.f32.gmra.mxu0 %v207
    %v674 = vpop.f32.mrf.mxu0
    %v675 = vadd.f32 %v182, %v674
    %v676 = vpop.f32.mrf.mxu0
    %677 = vmatprep.mubr.f32.mxu0 0.0
    %678 = vmatmul.mubr.f32.gmra.mxu0 %v210
    %v679 = vpop.f32.mrf.mxu0
    %v680 = vadd.f32 %v182, %v679
    %v681 = vpop.f32.mrf.mxu0
    %682 = vmatprep.mubr.f32.mxu0 0.0
    %683 = vmatmul.mubr.f32.gmra.mxu0 %v213
    %v684 = vpop.f32.mrf.mxu0
    %v685 = vadd.f32 %v182, %v684
    %v686 = vpop.f32.mrf.mxu0
    %687 = vmatprep.mubr.f32.mxu0 0.0
    %688 = vmatmul.mubr.f32.gmra.mxu0 %v216
    %v689 = vpop.f32.mrf.mxu0
    %v690 = vadd.f32 %v182, %v689
    %v691 = vpop.f32.mrf.mxu0
    %692 = vmatprep.mubr.f32.mxu0 0.0
    %693 = vmatmul.mubr.f32.gmra.mxu0 %v219
    %v694 = vpop.f32.mrf.mxu0
    %v695 = vadd.f32 %v182, %v694
    %v696 = vpop.f32.mrf.mxu0
    %697 = vmatprep.mubr.f32.mxu0 0.0
    %698 = vmatmul.mubr.f32.gmra.mxu0 %v222
    %v699 = vpop.f32.mrf.mxu0
    %v700 = vadd.f32 %v182, %v699
    %v701 = vpop.f32.mrf.mxu0
    %702 = vmatprep.mubr.f32.mxu0 0.0
    %703 = vmatmul.mubr.f32.gmra.mxu0 %v225
    %v704 = vpop.f32.mrf.mxu0
    %v705 = vadd.f32 %v182, %v704
    %v706 = vpop.f32.mrf.mxu0
    %707 = vmatprep.mubr.f32.mxu0 0.0
    %708 = vmatmul.mubr.f32.gmra.mxu0 %v228
    %v709 = vpop.f32.mrf.mxu0
    %v710 = vadd.f32 %v182, %v709
    %v711 = vpop.f32.mrf.mxu0
    %712 = vmatprep.mubr.f32.mxu0 0.0
    %713 = vmatmul.mubr.f32.gmra.mxu0 %v231
    %v714 = vpop.f32.mrf.mxu0
    %v715 = vadd.f32 %v182, %v714
    %v716 = vpop.f32.mrf.mxu0
    %717 = vmatprep.mubr.f32.mxu0 0.0
    %718 = vmatmul.mubr.f32.gmra.mxu0 %v234
    %v719 = vpop.f32.mrf.mxu0
    %v720 = vadd.f32 %v182, %v719
    %v721 = vpop.f32.mrf.mxu0
    %722 = vmatprep.mubr.f32.mxu0 0.0
    %723 = vmatmul.mubr.f32.gmra.mxu0 %v237
    %v724 = vpop.f32.mrf.mxu0
    %v725 = vadd.f32 %v182, %v724
    %v726 = vpop.f32.mrf.mxu0
    %727 = vmatprep.mubr.f32.mxu0 0.0
    %728 = vmatmul.mubr.f32.gmra.mxu0 %v240
    %v729 = vpop.f32.mrf.mxu0
    %v730 = vadd.f32 %v182, %v729
    %v731 = vpop.f32.mrf.mxu0
    %732 = vmatprep.mubr.f32.mxu0 0.0
    %733 = vmatmul.mubr.f32.gmra.mxu0 %v243
    %v734 = vpop.f32.mrf.mxu0
    %v735 = vadd.f32 %v182, %v734
    %v736 = vpop.f32.mrf.mxu0
    %737 = vmatprep.mubr.f32.mxu0 0.0
    %738 = vmatmul.mubr.f32.gmra.mxu0 %v246
    %v739 = vpop.f32.mrf.mxu0
    %v740 = vadd.f32 %v182, %v739
    %v741 = vpop.f32.mrf.mxu0
    %742 = vmatprep.mubr.f32.mxu0 0.0
    %743 = vmatmul.mubr.f32.gmra.mxu0 %v249
    %v744 = vpop.f32.mrf.mxu0
    %v745 = vadd.f32 %v182, %v744
    %v746 = vpop.f32.mrf.mxu0
    %747 = vmatprep.mubr.f32.mxu0 0.0
    %748 = vmatmul.mubr.f32.gmra.mxu0 %v252
    %v749 = vpop.f32.mrf.mxu0
    %v750 = vadd.f32 %v182, %v749
    %v751 = vpop.f32.mrf.mxu0
    %752 = vmatprep.mubr.f32.mxu0 0.0
    %753 = vmatmul.mubr.f32.gmra.mxu0 %v255
    %v754 = vpop.f32.mrf.mxu0
    %v755 = vadd.f32 %v182, %v754
    %v756 = vpop.f32.mrf.mxu0
    %757 = vmatprep.mubr.f32.mxu0 0.0
    %758 = vmatmul.mubr.f32.gmra.mxu0 %v258
    %v759 = vpop.f32.mrf.mxu0
    %v760 = vadd.f32 %v182, %v759
    %v761 = vpop.f32.mrf.mxu0
    %762 = vmatprep.mubr.f32.mxu0 0.0
    %763 = vmatmul.mubr.f32.gmra.mxu0 %v261
    %v764 = vpop.f32.mrf.mxu0
    %v765 = vadd.f32 %v182, %v764
    %v766 = vpop.f32.mrf.mxu0
    %767 = vmatprep.mubr.f32.mxu0 0.0
    %768 = vmatmul.mubr.f32.gmra.mxu0 %v264
    %v769 = vpop.f32.mrf.mxu0
    %v770 = vadd.f32 %v182, %v769
    %v771 = vpop.f32.mrf.mxu0
    %772 = vmatprep.mubr.f32.mxu0 0.0
    %773 = vmatmul.mubr.f32.gmra.mxu0 %v267
    %v774 = vpop.f32.mrf.mxu0
    %v775 = vadd.f32 %v182, %v774
    %v776 = vpop.f32.mrf.mxu0
    %777 = vmatprep.mubr.f32.mxu0 0.0
    %778 = vmatmul.mubr.f32.gmra.mxu0 %v270
    %v779 = vpop.f32.mrf.mxu0
    %v780 = vadd.f32 %v182, %v779
    %v781 = vpop.f32.mrf.mxu0
    %782 = vmatprep.mubr.f32.mxu0 0.0
    %783 = vmatmul.mubr.f32.gmra.mxu0 %v273
    %v784 = vpop.f32.mrf.mxu0
    %v785 = vadd.f32 %v182, %v784
    %v786 = vpop.f32.mrf.mxu0
    %787 = vmatprep.mubr.f32.mxu0 0.0
    %788 = vmatmul.mubr.f32.gmra.mxu0 %v276
    %v789 = vpop.f32.mrf.mxu0
    %v790 = vadd.f32 %v182, %v789
    %v791 = vpop.f32.mrf.mxu0
    %792 = vmatprep.mubr.f32.mxu0 0.0
    %793 = vmatmul.mubr.f32.gmra.mxu0 %v279
    %v794 = vpop.f32.mrf.mxu0
    %v795 = vadd.f32 %v182, %v794
    %v796 = vpop.f32.mrf.mxu0
    %797 = vmatprep.mubr.f32.mxu0 0.0
    %798 = vmatmul.mubr.f32.gmra.mxu0 %v282
    %v799 = vpop.f32.mrf.mxu0
    %v800 = vadd.f32 %v182, %v799
    %v801 = vpop.f32.mrf.mxu0
    %802 = vmatprep.mubr.f32.mxu0 0.0
    %803 = vmatmul.mubr.f32.gmra.mxu0 %v285
    %v804 = vpop.f32.mrf.mxu0
    %v805 = vadd.f32 %v182, %v804
    %v806 = vpop.f32.mrf.mxu0
    %807 = vmatprep.mubr.f32.mxu0 0.0
    %808 = vmatmul.mubr.f32.gmra.mxu0 %v288
    %v809 = vpop.f32.mrf.mxu0
    %v810 = vadd.f32 %v182, %v809
    %v811 = vpop.f32.mrf.mxu0
    %812 = vmatprep.mubr.f32.mxu0 0.0
    %813 = vmatmul.mubr.f32.gmra.mxu0 %v291
    %v814 = vpop.f32.mrf.mxu0
    %v815 = vadd.f32 %v182, %v814
    %v816 = vpop.f32.mrf.mxu0
    %817 = vmatprep.mubr.f32.mxu0 0.0
    %818 = vmatmul.mubr.f32.gmra.mxu0 %v294
    %v819 = vpop.f32.mrf.mxu0
    %v820 = vadd.f32 %v182, %v819
    %v821 = vpop.f32.mrf.mxu0
    %822 = vmatprep.mubr.f32.mxu0 0.0
    %823 = vmatmul.mubr.f32.gmra.mxu0 %v297
    %v824 = vpop.f32.mrf.mxu0
    %v825 = vadd.f32 %v182, %v824
    %v826 = vpop.f32.mrf.mxu0
    %827 = vmatprep.mubr.f32.mxu0 0.0
    %828 = vmatmul.mubr.f32.gmra.mxu0 %v300
    %v829 = vpop.f32.mrf.mxu0
    %v830 = vadd.f32 %v182, %v829
    %v831 = vpop.f32.mrf.mxu0
    %832 = vmatprep.mubr.f32.mxu0 0.0
    %833 = vmatmul.mubr.f32.gmra.mxu0 %v303
    %v834 = vpop.f32.mrf.mxu0
    %v835 = vadd.f32 %v182, %v834
    %v836 = vpop.f32.mrf.mxu0
    %837 = vmatprep.mubr.f32.mxu0 0.0
    %838 = vmatmul.mubr.f32.gmra.mxu0 %v306
    %v839 = vpop.f32.mrf.mxu0
    %v840 = vadd.f32 %v182, %v839
    %v841 = vpop.f32.mrf.mxu0
    %842 = vmatprep.mubr.f32.mxu0 0.0
    %843 = vmatmul.mubr.f32.gmra.mxu0 %v309
    %v844 = vpop.f32.mrf.mxu0
    %v845 = vadd.f32 %v182, %v844
    %v846 = vpop.f32.mrf.mxu0
    %847 = vmatprep.mubr.f32.mxu0 0.0
    %848 = vmatmul.mubr.f32.gmra.mxu0 %v312
    %v849 = vpop.f32.mrf.mxu0
    %v850 = vadd.f32 %v182, %v849
    %v851 = vpop.f32.mrf.mxu0
    %852 = vmatprep.mubr.f32.mxu0 0.0
    %853 = vmatmul.mubr.f32.gmra.mxu0 %v315
    %v854 = vpop.f32.mrf.mxu0
    %v855 = vadd.f32 %v182, %v854
    %v856 = vpop.f32.mrf.mxu0
    %857 = vmatprep.mubr.f32.mxu0 0.0
    %858 = vmatmul.mubr.f32.gmra.mxu0 %v318
    %v859 = vpop.f32.mrf.mxu0
    %v860 = vadd.f32 %v182, %v859
    %v861 = vpop.f32.mrf.mxu0
    %862 = vmatprep.mubr.f32.mxu0 0.0
    %863 = vmatmul.mubr.f32.gmra.mxu0 %v321
    %v864 = vpop.f32.mrf.mxu0
    %v865 = vadd.f32 %v182, %v864
    %v866 = vpop.f32.mrf.mxu0
    %867 = vmatprep.mubr.f32.mxu0 0.0
    %868 = vmatmul.mubr.f32.gmra.mxu0 %v324
    %v869 = vpop.f32.mrf.mxu0
    %v870 = vadd.f32 %v182, %v869
    %v871 = vpop.f32.mrf.mxu0
    %872 = vmatprep.mubr.f32.mxu0 0.0
    %873 = vmatmul.mubr.f32.gmra.mxu0 %v327
    %v874 = vpop.f32.mrf.mxu0
    %v875 = vadd.f32 %v182, %v874
    %v876 = vpop.f32.mrf.mxu0
    %877 = vmatprep.mubr.f32.mxu0 0.0
    %878 = vmatmul.mubr.f32.gmra.mxu0 %v330
    %v879 = vpop.f32.mrf.mxu0
    %v880 = vadd.f32 %v182, %v879
    %v881 = vpop.f32.mrf.mxu0
    %882 = vmatprep.mubr.f32.mxu0 0.0
    %883 = vmatmul.mubr.f32.gmra.mxu0 %v333
    %v884 = vpop.f32.mrf.mxu0
    %v885 = vadd.f32 %v182, %v884
    %v886 = vpop.f32.mrf.mxu0
    %887 = vmatprep.mubr.f32.mxu0 0.0
    %888 = vmatmul.mubr.f32.gmra.mxu0 %v336
    %v889 = vpop.f32.mrf.mxu0
    %v890 = vadd.f32 %v182, %v889
    %v891 = vpop.f32.mrf.mxu0
    %892 = vmatprep.mubr.f32.mxu0 0.0
    %893 = vmatmul.mubr.f32.gmra.mxu0 %v339
    %v894 = vpop.f32.mrf.mxu0
    %v895 = vadd.f32 %v182, %v894
    %v896 = vpop.f32.mrf.mxu0
    %897 = vmatprep.mubr.f32.mxu0 0.0
    %898 = vmatmul.mubr.f32.gmra.mxu0 %v342
    %v899 = vpop.f32.mrf.mxu0
    %v900 = vadd.f32 %v182, %v899
    %v901 = vpop.f32.mrf.mxu0
    %902 = vmatprep.mubr.f32.mxu0 0.0
    %903 = vmatmul.mubr.f32.gmra.mxu0 %v345
    %v904 = vpop.f32.mrf.mxu0
    %v905 = vadd.f32 %v182, %v904
    %v906 = vpop.f32.mrf.mxu0
    %907 = vmatprep.mubr.f32.mxu0 0.0
    %908 = vmatmul.mubr.f32.gmra.mxu0 %v348
    %v909 = vpop.f32.mrf.mxu0
    %v910 = vadd.f32 %v182, %v909
    %v911 = vpop.f32.mrf.mxu0
    %912 = vmatprep.mubr.f32.mxu0 0.0
    %913 = vmatmul.mubr.f32.gmra.mxu0 %v351
    %v914 = vpop.f32.mrf.mxu0
    %v915 = vadd.f32 %v182, %v914
    %v916 = vpop.f32.mrf.mxu0
    %917 = vmatprep.mubr.f32.mxu0 0.0
    %918 = vmatmul.mubr.f32.gmra.mxu0 %v354
    %v919 = vpop.f32.mrf.mxu0
    %v920 = vadd.f32 %v182, %v919
    %v921 = vpop.f32.mrf.mxu0
    %922 = vmatprep.mubr.f32.mxu0 0.0
    %923 = vmatmul.mubr.f32.gmra.mxu0 %v357
    %v924 = vpop.f32.mrf.mxu0
    %v925 = vadd.f32 %v182, %v924
    %v926 = vpop.f32.mrf.mxu0
    %927 = vmatprep.mubr.f32.mxu0 0.0
    %928 = vmatmul.mubr.f32.gmra.mxu0 %v360
    %v929 = vpop.f32.mrf.mxu0
    %v930 = vadd.f32 %v182, %v929
    %v931 = vpop.f32.mrf.mxu0
    %932 = vmatprep.mubr.f32.mxu0 0.0
    %933 = vmatmul.mubr.f32.gmra.mxu0 %v363
    %v934 = vpop.f32.mrf.mxu0
    %v935 = vadd.f32 %v182, %v934
    %v936 = vpop.f32.mrf.mxu0
    %937 = vmatprep.mubr.f32.mxu0 0.0
    %938 = vmatmul.mubr.f32.gmra.mxu0 %v366
    %v939 = vpop.f32.mrf.mxu0
    %v940 = vadd.f32 %v182, %v939
    %v941 = vpop.f32.mrf.mxu0
    %942 = vmatprep.mubr.f32.mxu0 0.0
    %943 = vmatmul.mubr.f32.gmra.mxu0 %v369
    %v944 = vpop.f32.mrf.mxu0
    %v945 = vadd.f32 %v182, %v944
    %v946 = vpop.f32.mrf.mxu0
    %947 = vmatprep.mubr.f32.mxu0 0.0
    %948 = vmatmul.mubr.f32.gmra.mxu0 %v372
    %v949 = vpop.f32.mrf.mxu0
    %v950 = vadd.f32 %v182, %v949
    %v951 = vpop.f32.mrf.mxu0
    %952 = vmatprep.mubr.f32.mxu0 0.0
    %953 = vmatmul.mubr.f32.gmra.mxu0 %v375
    %v954 = vpop.f32.mrf.mxu0
    %v955 = vadd.f32 %v182, %v954
    %v956 = vpop.f32.mrf.mxu0
    %957 = vmatprep.mubr.f32.mxu0 0.0
    %958 = vmatmul.mubr.f32.gmra.mxu0 %v378
    %v959 = vpop.f32.mrf.mxu0
    %v960 = vadd.f32 %v182, %v959
    %v961 = vpop.f32.mrf.mxu0
    %962 = vmatprep.mubr.f32.mxu0 0.0
    %963 = vmatmul.mubr.f32.gmra.mxu0 %v381
    %v964 = vpop.f32.mrf.mxu0
    %v965 = vadd.f32 %v182, %v964
    %v966 = vpop.f32.mrf.mxu0
    %967 = vmatprep.mubr.f32.mxu0 0.0
    %968 = vmatmul.mubr.f32.gmra.mxu0 %v384
    %v969 = vpop.f32.mrf.mxu0
    %v970 = vadd.f32 %v182, %v969
    %v971 = vpop.f32.mrf.mxu0
    %972 = vmatprep.mubr.f32.mxu0 0.0
    %973 = vmatmul.mubr.f32.gmra.mxu0 %v387
    %v974 = vpop.f32.mrf.mxu0
    %v975 = vadd.f32 %v182, %v974
    %v976 = vpop.f32.mrf.mxu0
    %977 = vmatprep.mubr.f32.mxu0 0.0
    %978 = vmatmul.mubr.f32.gmra.mxu0 %v390
    %v979 = vpop.f32.mrf.mxu0
    %v980 = vadd.f32 %v182, %v979
    %v981 = vpop.f32.mrf.mxu0
    %982 = vmatprep.mubr.f32.mxu0 0.0
    %983 = vmatmul.mubr.f32.gmra.mxu0 %v393
    %v984 = vpop.f32.mrf.mxu0
    %v985 = vadd.f32 %v182, %v984
    %v986 = vpop.f32.mrf.mxu0
    %987 = vmatprep.mubr.f32.mxu0 0.0
    %988 = vmatmul.mubr.f32.gmra.mxu0 %v396
    %v989 = vpop.f32.mrf.mxu0
    %v990 = vadd.f32 %v182, %v989
    %v991 = vpop.f32.mrf.mxu0
    %992 = vmatprep.mubr.f32.mxu0 0.0
    %993 = vmatmul.mubr.f32.gmra.mxu0 %v399
    %v994 = vpop.f32.mrf.mxu0
    %v995 = vadd.f32 %v182, %v994
    %v996 = vpop.f32.mrf.mxu0
    %997 = vmatprep.mubr.f32.mxu0 0.0
    %998 = vmatmul.mubr.f32.gmra.mxu0 %v402
    %v999 = vpop.f32.mrf.mxu0
    %v1000 = vadd.f32 %v182, %v999
    %v1001 = vpop.f32.mrf.mxu0
    %1002 = vmatprep.mubr.f32.mxu0 0.0
    %1003 = vmatmul.mubr.f32.gmra.mxu0 %v405
    %v1004 = vpop.f32.mrf.mxu0
    %v1005 = vadd.f32 %v182, %v1004
    %v1006 = vpop.f32.mrf.mxu0
    %1007 = vmatprep.mubr.f32.mxu0 0.0
    %1008 = vmatmul.mubr.f32.gmra.mxu0 %v408
    %v1009 = vpop.f32.mrf.mxu0
    %v1010 = vadd.f32 %v182, %v1009
    %v1011 = vpop.f32.mrf.mxu0
    %1012 = vmatprep.mubr.f32.mxu0 0.0
    %1013 = vmatmul.mubr.f32.gmra.mxu0 %v411
    %v1014 = vpop.f32.mrf.mxu0
    %v1015 = vadd.f32 %v182, %v1014
    %v1016 = vpop.f32.mrf.mxu0
    %1017 = vmatprep.mubr.f32.mxu0 0.0
    %1018 = vmatmul.mubr.f32.gmra.mxu0 %v414
    %v1019 = vpop.f32.mrf.mxu0
    %v1020 = vadd.f32 %v182, %v1019
    %v1021 = vpop.f32.mrf.mxu0
    %1022 = vmatprep.mubr.f32.mxu0 0.0
    %1023 = vmatmul.mubr.f32.gmra.mxu0 %v417
    %v1024 = vpop.f32.mrf.mxu0
    %v1025 = vadd.f32 %v182, %v1024
    %v1026 = vpop.f32.mrf.mxu0
    %1027 = vmatprep.mubr.f32.mxu0 0.0
    %1028 = vmatmul.mubr.f32.gmra.mxu0 %v420
    %v1029 = vpop.f32.mrf.mxu0
    %v1030 = vadd.f32 %v182, %v1029
    %v1031 = vpop.f32.mrf.mxu0
    %1032 = vmatprep.mubr.f32.mxu0 0.0
    %1033 = vmatmul.mubr.f32.gmra.mxu0 %v423
    %v1034 = vpop.f32.mrf.mxu0
    %v1035 = vadd.f32 %v182, %v1034
    %v1036 = vpop.f32.mrf.mxu0
    %1037 = vmatprep.mubr.f32.mxu0 0.0
    %1038 = vmatmul.mubr.f32.gmra.mxu0 %v426
    %v1039 = vpop.f32.mrf.mxu0
    %v1040 = vadd.f32 %v182, %v1039
    %v1041 = vpop.f32.mrf.mxu0
    %1042 = vmatprep.mubr.f32.mxu0 0.0
    %1043 = vmatmul.mubr.f32.gmra.mxu0 %v429
    %v1044 = vpop.f32.mrf.mxu0
    %v1045 = vadd.f32 %v182, %v1044
    %v1046 = vpop.f32.mrf.mxu0
    %1047 = vmatprep.mubr.f32.mxu0 0.0
    %1048 = vmatmul.mubr.f32.gmra.mxu0 %v432
    %v1049 = vpop.f32.mrf.mxu0
    %v1050 = vadd.f32 %v182, %v1049
    %v1051 = vpop.f32.mrf.mxu0
    %1052 = vmatprep.mubr.f32.mxu0 0.0
    %1053 = vmatmul.mubr.f32.gmra.mxu0 %v435
    %v1054 = vpop.f32.mrf.mxu0
    %v1055 = vadd.f32 %v182, %v1054
    %v1056 = vpop.f32.mrf.mxu0
    %1057 = vmatprep.mubr.f32.mxu0 0.0
    %1058 = vmatmul.mubr.f32.gmra.mxu0 %v438
    %v1059 = vpop.f32.mrf.mxu0
    %v1060 = vadd.f32 %v182, %v1059
    %v1061 = vpop.f32.mrf.mxu0
    %1062 = vmatprep.mubr.f32.mxu0 0.0
    %1063 = vmatmul.mubr.f32.gmra.mxu0 %v441
    %v1064 = vpop.f32.mrf.mxu0
    %v1065 = vadd.f32 %v182, %v1064
    %v1066 = vpop.f32.mrf.mxu0
    %1067 = vmatprep.mubr.f32.mxu0 0.0
    %1068 = vmatmul.mubr.f32.gmra.mxu0 %v444
    %v1069 = vpop.f32.mrf.mxu0
    %v1070 = vadd.f32 %v182, %v1069
    %v1071 = vpop.f32.mrf.mxu0
    %1072 = vmatprep.mubr.f32.mxu0 0.0
    %1073 = vmatmul.mubr.f32.gmra.mxu0 %v447
    %v1074 = vpop.f32.mrf.mxu0
    %v1075 = vadd.f32 %v182, %v1074
    %v1076 = vpop.f32.mrf.mxu0
    %1077 = vmatprep.mubr.f32.mxu0 0.0
    %1078 = vmatmul.mubr.f32.gmra.mxu0 %v450
    %v1079 = vpop.f32.mrf.mxu0
    %v1080 = vadd.f32 %v182, %v1079
    %v1081 = vpop.f32.mrf.mxu0
    %1082 = vmatprep.mubr.f32.mxu0 0.0
    %1083 = vmatmul.mubr.f32.gmra.mxu0 %v453
    %v1084 = vpop.f32.mrf.mxu0
    %v1085 = vadd.f32 %v182, %v1084
    %v1086 = vpop.f32.mrf.mxu0
    %1087 = vmatprep.mubr.f32.mxu0 0.0
    %1088 = vmatmul.mubr.f32.gmra.mxu0 %v456
    %v1089 = vpop.f32.mrf.mxu0
    %v1090 = vadd.f32 %v182, %v1089
    %v1091 = vpop.f32.mrf.mxu0
    %1092 = vmatprep.mubr.f32.mxu0 0.0
    %1093 = vmatmul.mubr.f32.gmra.mxu0 %v459
    %v1094 = vpop.f32.mrf.mxu0
    %v1095 = vadd.f32 %v182, %v1094
    %v1096 = vpop.f32.mrf.mxu0
    %1097 = vmatprep.mubr.f32.mxu0 0.0
    %1098 = vmatmul.mubr.f32.gmra.mxu0 %v462
    %v1099 = vpop.f32.mrf.mxu0
    %v1100 = vadd.f32 %v182, %v1099
    %v1101 = vpop.f32.mrf.mxu0
    %1102 = vmatprep.mubr.f32.mxu0 0.0
    %1103 = vmatmul.mubr.f32.gmra.mxu0 %v465
    %v1104 = vpop.f32.mrf.mxu0
    %v1105 = vadd.f32 %v182, %v1104
    %v1106 = vpop.f32.mrf.mxu0
    %1107 = vmatprep.mubr.f32.mxu0 0.0
    %1108 = vmatmul.mubr.f32.gmra.mxu0 %v468
    %v1109 = vpop.f32.mrf.mxu0
    %v1110 = vadd.f32 %v182, %v1109
    %v1111 = vpop.f32.mrf.mxu0
    %1112 = vmatprep.mubr.f32.mxu0 0.0
    %1113 = vmatmul.mubr.f32.gmra.mxu0 %v471
    %v1114 = vpop.f32.mrf.mxu0
    %v1115 = vadd.f32 %v182, %v1114
    %v1116 = vpop.f32.mrf.mxu0
    %1117 = vmatprep.mubr.f32.mxu0 0.0
    %1118 = vmatmul.mubr.f32.gmra.mxu0 %v474
    %v1119 = vpop.f32.mrf.mxu0
    %v1120 = vadd.f32 %v182, %v1119
    %v1121 = vpop.f32.mrf.mxu0
    %1122 = vmatprep.mubr.f32.mxu0 0.0
    %1123 = vmatmul.mubr.f32.gmra.mxu0 %v477
    %v1124 = vpop.f32.mrf.mxu0
    %v1125 = vadd.f32 %v182, %v1124
    %v1126 = vpop.f32.mrf.mxu0
    %1127 = vmatprep.mubr.f32.mxu0 0.0
    %1128 = vmatmul.mubr.f32.gmra.mxu0 %v480
    %v1129 = vpop.f32.mrf.mxu0
    %v1130 = vadd.f32 %v182, %v1129
    %v1131 = vpop.f32.mrf.mxu0
    %1132 = vmatprep.mubr.f32.mxu0 0.0
    %1133 = vmatmul.mubr.f32.gmra.mxu0 %v483
    %v1134 = vpop.f32.mrf.mxu0
    %v1135 = vadd.f32 %v182, %v1134
    %v1136 = vpop.f32.mrf.mxu0
    %1137 = vmatprep.mubr.f32.mxu0 0.0
    %1138 = vmatmul.mubr.f32.gmra.mxu0 %v486
    %v1139 = vpop.f32.mrf.mxu0
    %v1140 = vadd.f32 %v182, %v1139
    %v1141 = vpop.f32.mrf.mxu0
    %1142 = vmatprep.mubr.f32.mxu0 0.0
    %1143 = vmatmul.mubr.f32.gmra.mxu0 %v489
    %v1144 = vpop.f32.mrf.mxu0
    %v1145 = vadd.f32 %v182, %v1144
    %v1146 = vpop.f32.mrf.mxu0
    %1147 = vmatprep.mubr.f32.mxu0 0.0
    %1148 = vmatmul.mubr.f32.gmra.mxu0 %v492
    %v1149 = vpop.f32.mrf.mxu0
    %v1150 = vadd.f32 %v182, %v1149
    %v1151 = vpop.f32.mrf.mxu0
    %1152 = vmatprep.mubr.f32.mxu0 0.0
    %1153 = vmatmul.mubr.f32.gmra.mxu0 %v495
    %v1154 = vpop.f32.mrf.mxu0
    %v1155 = vadd.f32 %v182, %v1154
    %v1156 = vpop.f32.mrf.mxu0
    %1157 = vmatprep.mubr.f32.mxu0 0.0
    %1158 = vmatmul.mubr.f32.gmra.mxu0 %v498
    %v1159 = vpop.f32.mrf.mxu0
    %v1160 = vadd.f32 %v182, %v1159
    %v1161 = vpop.f32.mrf.mxu0
    %1162 = vmatprep.mubr.f32.mxu0 0.0
    %1163 = vmatmul.mubr.f32.gmra.mxu0 %v501
    %v1164 = vpop.f32.mrf.mxu0
    %v1165 = vadd.f32 %v182, %v1164
    %v1166 = vpop.f32.mrf.mxu0
    %1167 = vmatprep.mubr.f32.mxu0 0.0
    %1168 = vmatmul.mubr.f32.gmra.mxu0 %v504
    %v1169 = vpop.f32.mrf.mxu0
    %v1170 = vadd.f32 %v182, %v1169
    %v1171 = vpop.f32.mrf.mxu0
    %1172 = vmatprep.mubr.f32.mxu0 0.0
    %1173 = vmatmul.mubr.f32.gmra.mxu0 %v507
    %v1174 = vpop.f32.mrf.mxu0
    %v1175 = vadd.f32 %v182, %v1174
    %v1176 = vpop.f32.mrf.mxu0
    %1177 = vmatprep.mubr.f32.mxu0 0.0
    %1178 = vmatmul.mubr.f32.gmra.mxu0 %v510
    %v1179 = vpop.f32.mrf.mxu0
    %v1180 = vadd.f32 %v182, %v1179
    %v1181 = vpop.f32.mrf.mxu0
    %1182 = vmatprep.mubr.f32.mxu0 0.0
    %1183 = vmatmul.mubr.f32.gmra.mxu0 %v513
    %v1184 = vpop.f32.mrf.mxu0
    %v1185 = vadd.f32 %v182, %v1184
    %v1186 = vpop.f32.mrf.mxu0
    %1187 = vmatprep.mubr.f32.mxu0 0.0
    %1188 = vmatmul.mubr.f32.gmra.mxu0 %v516
    %v1189 = vpop.f32.mrf.mxu0
    %v1190 = vadd.f32 %v182, %v1189
    %v1191 = vpop.f32.mrf.mxu0
    %1192 = vmatprep.mubr.f32.mxu0 0.0
    %1193 = vmatmul.mubr.f32.gmra.mxu0 %v519
    %v1194 = vpop.f32.mrf.mxu0
    %v1195 = vadd.f32 %v182, %v1194
    %v1196 = vpop.f32.mrf.mxu0
    %1197 = vmatprep.mubr.f32.mxu0 0.0
    %1198 = vmatmul.mubr.f32.gmra.mxu0 %v522
    %v1199 = vpop.f32.mrf.mxu0
    %v1200 = vadd.f32 %v182, %v1199
    %v1201 = vpop.f32.mrf.mxu0
    %1202 = vmatprep.mubr.f32.mxu0 0.0
    %1203 = vmatmul.mubr.f32.gmra.mxu0 %v525
    %v1204 = vpop.f32.mrf.mxu0
    %v1205 = vadd.f32 %v182, %v1204
    %v1206 = vpop.f32.mrf.mxu0
    %1207 = vmatprep.mubr.f32.mxu0 0.0
    %1208 = vmatmul.mubr.f32.gmra.mxu0 %v528
    %v1209 = vpop.f32.mrf.mxu0
    %v1210 = vadd.f32 %v182, %v1209
    %v1211 = vpop.f32.mrf.mxu0
    %1212 = vmatprep.mubr.f32.mxu0 0.0
    %1213 = vmatmul.mubr.f32.gmra.mxu0 %v531
    %v1214 = vpop.f32.mrf.mxu0
    %v1215 = vadd.f32 %v182, %v1214
    %v1216 = vpop.f32.mrf.mxu0
    %1217 = vmatprep.mubr.f32.mxu0 0.0
    %1218 = vmatmul.mubr.f32.gmra.mxu0 %v534
    %v1219 = vpop.f32.mrf.mxu0
    %v1220 = vadd.f32 %v182, %v1219
    %v1221 = vpop.f32.mrf.mxu0
    %1222 = vmatprep.mubr.f32.mxu0 0.0
    %1223 = vmatmul.mubr.f32.gmra.mxu0 %v537
    %v1224 = vpop.f32.mrf.mxu0
    %v1225 = vadd.f32 %v182, %v1224
    %v1226 = vpop.f32.mrf.mxu0
    %1227 = vmatprep.mubr.f32.mxu0 0.0
    %1228 = vmatmul.mubr.f32.gmra.mxu0 %v540
    %v1229 = vpop.f32.mrf.mxu0
    %v1230 = vadd.f32 %v182, %v1229
    %v1231 = vpop.f32.mrf.mxu0
    %1232 = vmatprep.mubr.f32.mxu0 0.0
    %1233 = vmatmul.mubr.f32.gmra.mxu0 %v543
    %v1234 = vpop.f32.mrf.mxu0
    %v1235 = vadd.f32 %v182, %v1234
    %v1236 = vpop.f32.mrf.mxu0
    %1237 = vmatprep.mubr.f32.mxu0 0.0
    %1238 = vmatmul.mubr.f32.gmra.mxu0 %v546
    %v1239 = vpop.f32.mrf.mxu0
    %v1240 = vadd.f32 %v182, %v1239
    %v1241 = vpop.f32.mrf.mxu0
    %1242 = vmatprep.mubr.f32.mxu0 0.0
    %1243 = vmatmul.mubr.f32.gmra.mxu0 %v549
    %v1244 = vpop.f32.mrf.mxu0
    %v1245 = vadd.f32 %v182, %v1244
    %v1246 = vpop.f32.mrf.mxu0
    %1247 = vmatprep.mubr.f32.mxu0 0.0
    %1248 = vmatmul.mubr.f32.gmra.mxu0 %v552
    %v1249 = vpop.f32.mrf.mxu0
    %v1250 = vadd.f32 %v182, %v1249
    %v1251 = vpop.f32.mrf.mxu0
    %1252 = vmatprep.mubr.f32.mxu0 0.0
    %1253 = vmatmul.mubr.f32.gmra.mxu0 %v555
    %v1254 = vpop.f32.mrf.mxu0
    %v1255 = vadd.f32 %v182, %v1254
    %v1256 = vpop.f32.mrf.mxu0
    %1257 = vmatprep.mubr.f32.mxu0 0.0
    %1258 = vmatmul.mubr.f32.gmra.mxu0 %v558
    %v1259 = vpop.f32.mrf.mxu0
    %v1260 = vadd.f32 %v182, %v1259
    %v1261 = vpop.f32.mrf.mxu0
    %1262 = vmatprep.mubr.f32.mxu0 0.0
    %1263 = vmatmul.mubr.f32.gmra.mxu0 %v561
    %v1264 = vpop.f32.mrf.mxu0
    %v1265 = vadd.f32 %v182, %v1264
    %v1266 = vpop.f32.mrf.mxu0
    %1267 = vmatprep.mubr.f32.mxu0 0.0
    %1268 = vmatmul.mubr.f32.gmra.mxu0 %v564
    %v1269 = vpop.f32.mrf.mxu0
    %v1270 = vadd.f32 %v182, %v1269
    %v1271 = vpop.f32.mrf.mxu0
    %1272 = vmatprep.mubr.f32.mxu0 0.0
    %1273 = vmatmul.mubr.f32.gmra.mxu0 %v567
    %v1274 = vpop.f32.mrf.mxu0
    %v1275 = vadd.f32 %v182, %v1274
    %v1276 = vpop.f32.mrf.mxu0
    %1277 = vdwg.mxu0
    %v1278 = vmax.f32 %v640, 0.0
    %v1279 = vmax.f32 %v645, 0.0
    %v1280 = vmax.f32 %v650, 0.0
    %v1281 = vmax.f32 %v655, 0.0
    %v1282 = vmax.f32 %v660, 0.0
    %v1283 = vmax.f32 %v665, 0.0
    %v1284 = vmax.f32 %v670, 0.0
    %v1285 = vmax.f32 %v675, 0.0
    %v1286 = vmax.f32 %v680, 0.0
    %v1287 = vmax.f32 %v685, 0.0
    %v1288 = vmax.f32 %v690, 0.0
    %v1289 = vmax.f32 %v695, 0.0
    %v1290 = vmax.f32 %v700, 0.0
    %v1291 = vmax.f32 %v705, 0.0
    %v1292 = vmax.f32 %v710, 0.0
    %v1293 = vmax.f32 %v715, 0.0
    %v1294 = vmax.f32 %v720, 0.0
    %v1295 = vmax.f32 %v725, 0.0
    %v1296 = vmax.f32 %v730, 0.0
    %v1297 = vmax.f32 %v735, 0.0
    %v1298 = vmax.f32 %v740, 0.0
    %v1299 = vmax.f32 %v745, 0.0
    %v1300 = vmax.f32 %v750, 0.0
    %v1301 = vmax.f32 %v755, 0.0
    %v1302 = vmax.f32 %v760, 0.0
    %v1303 = vmax.f32 %v765, 0.0
    %v1304 = vmax.f32 %v770, 0.0
    %v1305 = vmax.f32 %v775, 0.0
    %v1306 = vmax.f32 %v780, 0.0
    %v1307 = vmax.f32 %v785, 0.0
    %v1308 = vmax.f32 %v790, 0.0
    %v1309 = vmax.f32 %v795, 0.0
    %v1310 = vmax.f32 %v800, 0.0
    %v1311 = vmax.f32 %v805, 0.0
    %v1312 = vmax.f32 %v810, 0.0
    %v1313 = vmax.f32 %v815, 0.0
    %v1314 = vmax.f32 %v820, 0.0
    %v1315 = vmax.f32 %v825, 0.0
    %v1316 = vmax.f32 %v830, 0.0
    %v1317 = vmax.f32 %v835, 0.0
    %v1318 = vmax.f32 %v840, 0.0
    %v1319 = vmax.f32 %v845, 0.0
    %v1320 = vmax.f32 %v850, 0.0
    %v1321 = vmax.f32 %v855, 0.0
    %v1322 = vmax.f32 %v860, 0.0
    %v1323 = vmax.f32 %v865, 0.0
    %v1324 = vmax.f32 %v870, 0.0
    %v1325 = vmax.f32 %v875, 0.0
    %v1326 = vmax.f32 %v880, 0.0
    %v1327 = vmax.f32 %v885, 0.0
    %v1328 = vmax.f32 %v890, 0.0
    %v1329 = vmax.f32 %v895, 0.0
    %v1330 = vmax.f32 %v900, 0.0
    %v1331 = vmax.f32 %v905, 0.0
    %v1332 = vmax.f32 %v910, 0.0
    %v1333 = vmax.f32 %v915, 0.0
    %v1334 = vmax.f32 %v920, 0.0
    %v1335 = vmax.f32 %v925, 0.0
    %v1336 = vmax.f32 %v930, 0.0
    %v1337 = vmax.f32 %v935, 0.0
    %v1338 = vmax.f32 %v940, 0.0
    %v1339 = vmax.f32 %v945, 0.0
    %v1340 = vmax.f32 %v950, 0.0
    %v1341 = vmax.f32 %v955, 0.0
    %v1342 = vmax.f32 %v960, 0.0
    %v1343 = vmax.f32 %v965, 0.0
    %v1344 = vmax.f32 %v970, 0.0
    %v1345 = vmax.f32 %v975, 0.0
    %v1346 = vmax.f32 %v980, 0.0
    %v1347 = vmax.f32 %v985, 0.0
    %v1348 = vmax.f32 %v990, 0.0
    %v1349 = vmax.f32 %v995, 0.0
    %v1350 = vmax.f32 %v1000, 0.0
    %v1351 = vmax.f32 %v1005, 0.0
    %v1352 = vmax.f32 %v1010, 0.0
    %v1353 = vmax.f32 %v1015, 0.0
    %v1354 = vmax.f32 %v1020, 0.0
    %v1355 = vmax.f32 %v1025, 0.0
    %v1356 = vmax.f32 %v1030, 0.0
    %v1357 = vmax.f32 %v1035, 0.0
    %v1358 = vmax.f32 %v1040, 0.0
    %v1359 = vmax.f32 %v1045, 0.0
    %v1360 = vmax.f32 %v1050, 0.0
    %v1361 = vmax.f32 %v1055, 0.0
    %v1362 = vmax.f32 %v1060, 0.0
    %v1363 = vmax.f32 %v1065, 0.0
    %v1364 = vmax.f32 %v1070, 0.0
    %v1365 = vmax.f32 %v1075, 0.0
    %v1366 = vmax.f32 %v1080, 0.0
    %v1367 = vmax.f32 %v1085, 0.0
    %v1368 = vmax.f32 %v1090, 0.0
    %v1369 = vmax.f32 %v1095, 0.0
    %v1370 = vmax.f32 %v1100, 0.0
    %v1371 = vmax.f32 %v1105, 0.0
    %v1372 = vmax.f32 %v1110, 0.0
    %v1373 = vmax.f32 %v1115, 0.0
    %v1374 = vmax.f32 %v1120, 0.0
    %v1375 = vmax.f32 %v1125, 0.0
    %v1376 = vmax.f32 %v1130, 0.0
    %v1377 = vmax.f32 %v1135, 0.0
    %v1378 = vmax.f32 %v1140, 0.0
    %v1379 = vmax.f32 %v1145, 0.0
    %v1380 = vmax.f32 %v1150, 0.0
    %v1381 = vmax.f32 %v1155, 0.0
    %v1382 = vmax.f32 %v1160, 0.0
    %v1383 = vmax.f32 %v1165, 0.0
    %v1384 = vmax.f32 %v1170, 0.0
    %v1385 = vmax.f32 %v1175, 0.0
    %v1386 = vmax.f32 %v1180, 0.0
    %v1387 = vmax.f32 %v1185, 0.0
    %v1388 = vmax.f32 %v1190, 0.0
    %v1389 = vmax.f32 %v1195, 0.0
    %v1390 = vmax.f32 %v1200, 0.0
    %v1391 = vmax.f32 %v1205, 0.0
    %v1392 = vmax.f32 %v1210, 0.0
    %v1393 = vmax.f32 %v1215, 0.0
    %v1394 = vmax.f32 %v1220, 0.0
    %v1395 = vmax.f32 %v1225, 0.0
    %v1396 = vmax.f32 %v1230, 0.0
    %v1397 = vmax.f32 %v1235, 0.0
    %v1398 = vmax.f32 %v1240, 0.0
    %v1399 = vmax.f32 %v1245, 0.0
    %v1400 = vmax.f32 %v1250, 0.0
    %v1401 = vmax.f32 %v1255, 0.0
    %v1402 = vmax.f32 %v1260, 0.0
    %v1403 = vmax.f32 %v1265, 0.0
    %v1404 = vmax.f32 %v1270, 0.0
    %v1405 = vmax.f32 %v1275, 0.0
    %v1406 = vld [vmem:[%s3] sm:$0xff]
    %v1407 = vld [vmem:[%s3 + $0x8] sm:$0xff]
    %v1408 = vld [vmem:[%s3 + $0x10] sm:$0xff]
    %v1409 = vld [vmem:[%s3 + $0x18] sm:$0xff]
    %v1410 = vld [vmem:[%s3 + $0x20] sm:$0xff]
    %v1411 = vld [vmem:[%s3 + $0x28] sm:$0xff]
    %v1412 = vld [vmem:[%s3 + $0x30] sm:$0xff]
    %v1413 = vld [vmem:[%s3 + $0x38] sm:$0xff]
    %v1414 = vld [vmem:[%s3 + $0x40] sm:$0xff]
    %v1415 = vld [vmem:[%s3 + $0x48] sm:$0xff]
    %v1416 = vld [vmem:[%s3 + $0x50] sm:$0xff]
    %v1417 = vld [vmem:[%s3 + $0x58] sm:$0xff]
    %v1418 = vld [vmem:[%s3 + $0x60] sm:$0xff]
    %v1419 = vld [vmem:[%s3 + $0x68] sm:$0xff]
    %v1420 = vld [vmem:[%s3 + $0x70] sm:$0xff]
    %v1421 = vld [vmem:[%s3 + $0x78] sm:$0xff]
    %v1422 = vld [vmem:[%s4] sm:$0x1]
    %v1424 = vlaneseq
    %v1425 = vshrl.u32 %v1424, 7
    %v1426 = vsub.s32 0, %v1425
    %v1427 = vrot.slane %v1422, %v1426
    %1429 = vmatprep.subr.mxu0 0.0
    %1430 = vmatpush1.msra.mxu0 %v1421
    %1431 = vmatprep.subr.mxu0 0.0
    %1432 = vmatpush1.msra.mxu0 %v1420
    %1433 = vmatprep.subr.mxu0 0.0
    %1434 = vmatpush1.msra.mxu0 %v1419
    %1435 = vmatprep.subr.mxu0 0.0
    %1436 = vmatpush1.msra.mxu0 %v1418
    %1437 = vmatprep.subr.mxu0 0.0
    %1438 = vmatpush1.msra.mxu0 %v1417
    %1439 = vmatprep.subr.mxu0 0.0
    %1440 = vmatpush1.msra.mxu0 %v1416
    %1441 = vmatprep.subr.mxu0 0.0
    %1442 = vmatpush1.msra.mxu0 %v1415
    %1443 = vmatprep.subr.mxu0 0.0
    %1444 = vmatpush1.msra.mxu0 %v1414
    %1445 = vmatprep.subr.mxu0 0.0
    %1446 = vmatpush1.msra.mxu0 %v1413
    %1447 = vmatprep.subr.mxu0 0.0
    %1448 = vmatpush1.msra.mxu0 %v1412
    %1449 = vmatprep.subr.mxu0 0.0
    %1450 = vmatpush1.msra.mxu0 %v1411
    %1451 = vmatprep.subr.mxu0 0.0
    %1452 = vmatpush1.msra.mxu0 %v1410
    %1453 = vmatprep.subr.mxu0 0.0
    %1454 = vmatpush1.msra.mxu0 %v1409
    %1455 = vmatprep.subr.mxu0 0.0
    %1456 = vmatpush1.msra.mxu0 %v1408
    %1457 = vmatprep.subr.mxu0 0.0
    %1458 = vmatpush1.msra.mxu0 %v1407
    %1459 = vmatprep.subr.mxu0 0.0
    %1460 = vmatpush1.msra.mxu0 %v1406
    %1461 = vmatprep.subr.mxu0 0.0
    %1462 = vmatpush2.msra.mxu0 0.0
    %1463 = vmatprep.subr.mxu0 0.0
    %1464 = vmatpush2.msra.mxu0 0.0
    %1465 = vmatprep.subr.mxu0 0.0
    %1466 = vmatpush2.msra.mxu0 0.0
    %1467 = vmatprep.subr.mxu0 0.0
    %1468 = vmatpush2.msra.mxu0 0.0
    %1469 = vmatprep.subr.mxu0 0.0
    %1470 = vmatpush2.msra.mxu0 0.0
    %1471 = vmatprep.subr.mxu0 0.0
    %1472 = vmatpush2.msra.mxu0 0.0
    %1473 = vmatprep.subr.mxu0 0.0
    %1474 = vmatpush2.msra.mxu0 0.0
    %1475 = vmatprep.subr.mxu0 0.0
    %1476 = vmatpush2.msra.mxu0 0.0
    %1477 = vmatprep.subr.mxu0 0.0
    %1478 = vmatpush2.msra.mxu0 0.0
    %1479 = vmatprep.subr.mxu0 0.0
    %1480 = vmatpush2.msra.mxu0 0.0
    %1481 = vmatprep.subr.mxu0 0.0
    %1482 = vmatpush2.msra.mxu0 0.0
    %1483 = vmatprep.subr.mxu0 0.0
    %1484 = vmatpush2.msra.mxu0 0.0
    %1485 = vmatprep.subr.mxu0 0.0
    %1486 = vmatpush2.msra.mxu0 0.0
    %1487 = vmatprep.subr.mxu0 0.0
    %1488 = vmatpush2.msra.mxu0 0.0
    %1489 = vmatprep.subr.mxu0 0.0
    %1490 = vmatpush2.msra.mxu0 0.0
    %1491 = vmatprep.subr.mxu0 0.0
    %1492 = vmatpush2.msra.mxu0 0.0
    %1493 = vmatprep.mubr.f32.mxu0 0.0
    %1494 = vmatmul.mubr.f32.gmra.mxu0 %v1278
    %v1495 = vpop.f32.mrf.mxu0
    %v1496 = vadd.f32 %v1427, %v1495
    %v1497 = vpop.f32.mrf.mxu0
    %1498 = vmatprep.mubr.f32.mxu0 0.0
    %1499 = vmatmul.mubr.f32.gmra.mxu0 %v1279
    %v1500 = vpop.f32.mrf.mxu0
    %v1501 = vadd.f32 %v1427, %v1500
    %v1502 = vpop.f32.mrf.mxu0
    %1503 = vmatprep.mubr.f32.mxu0 0.0
    %1504 = vmatmul.mubr.f32.gmra.mxu0 %v1280
    %v1505 = vpop.f32.mrf.mxu0
    %v1506 = vadd.f32 %v1427, %v1505
    %v1507 = vpop.f32.mrf.mxu0
    %1508 = vmatprep.mubr.f32.mxu0 0.0
    %1509 = vmatmul.mubr.f32.gmra.mxu0 %v1281
    %v1510 = vpop.f32.mrf.mxu0
    %v1511 = vadd.f32 %v1427, %v1510
    %v1512 = vpop.f32.mrf.mxu0
    %1513 = vmatprep.mubr.f32.mxu0 0.0
    %1514 = vmatmul.mubr.f32.gmra.mxu0 %v1282
    %v1515 = vpop.f32.mrf.mxu0
    %v1516 = vadd.f32 %v1427, %v1515
    %v1517 = vpop.f32.mrf.mxu0
    %1518 = vmatprep.mubr.f32.mxu0 0.0
    %1519 = vmatmul.mubr.f32.gmra.mxu0 %v1283
    %v1520 = vpop.f32.mrf.mxu0
    %v1521 = vadd.f32 %v1427, %v1520
    %v1522 = vpop.f32.mrf.mxu0
    %1523 = vmatprep.mubr.f32.mxu0 0.0
    %1524 = vmatmul.mubr.f32.gmra.mxu0 %v1284
    %v1525 = vpop.f32.mrf.mxu0
    %v1526 = vadd.f32 %v1427, %v1525
    %v1527 = vpop.f32.mrf.mxu0
    %1528 = vmatprep.mubr.f32.mxu0 0.0
    %1529 = vmatmul.mubr.f32.gmra.mxu0 %v1285
    %v1530 = vpop.f32.mrf.mxu0
    %v1531 = vadd.f32 %v1427, %v1530
    %v1532 = vpop.f32.mrf.mxu0
    %1533 = vmatprep.mubr.f32.mxu0 0.0
    %1534 = vmatmul.mubr.f32.gmra.mxu0 %v1286
    %v1535 = vpop.f32.mrf.mxu0
    %v1536 = vadd.f32 %v1427, %v1535
    %v1537 = vpop.f32.mrf.mxu0
    %1538 = vmatprep.mubr.f32.mxu0 0.0
    %1539 = vmatmul.mubr.f32.gmra.mxu0 %v1287
    %v1540 = vpop.f32.mrf.mxu0
    %v1541 = vadd.f32 %v1427, %v1540
    %v1542 = vpop.f32.mrf.mxu0
    %1543 = vmatprep.mubr.f32.mxu0 0.0
    %1544 = vmatmul.mubr.f32.gmra.mxu0 %v1288
    %v1545 = vpop.f32.mrf.mxu0
    %v1546 = vadd.f32 %v1427, %v1545
    %v1547 = vpop.f32.mrf.mxu0
    %1548 = vmatprep.mubr.f32.mxu0 0.0
    %1549 = vmatmul.mubr.f32.gmra.mxu0 %v1289
    %v1550 = vpop.f32.mrf.mxu0
    %v1551 = vadd.f32 %v1427, %v1550
    %v1552 = vpop.f32.mrf.mxu0
    %1553 = vmatprep.mubr.f32.mxu0 0.0
    %1554 = vmatmul.mubr.f32.gmra.mxu0 %v1290
    %v1555 = vpop.f32.mrf.mxu0
    %v1556 = vadd.f32 %v1427, %v1555
    %v1557 = vpop.f32.mrf.mxu0
    %1558 = vmatprep.mubr.f32.mxu0 0.0
    %1559 = vmatmul.mubr.f32.gmra.mxu0 %v1291
    %v1560 = vpop.f32.mrf.mxu0
    %v1561 = vadd.f32 %v1427, %v1560
    %v1562 = vpop.f32.mrf.mxu0
    %1563 = vmatprep.mubr.f32.mxu0 0.0
    %1564 = vmatmul.mubr.f32.gmra.mxu0 %v1292
    %v1565 = vpop.f32.mrf.mxu0
    %v1566 = vadd.f32 %v1427, %v1565
    %v1567 = vpop.f32.mrf.mxu0
    %1568 = vmatprep.mubr.f32.mxu0 0.0
    %1569 = vmatmul.mubr.f32.gmra.mxu0 %v1293
    %v1570 = vpop.f32.mrf.mxu0
    %v1571 = vadd.f32 %v1427, %v1570
    %v1572 = vpop.f32.mrf.mxu0
    %1573 = vmatprep.mubr.f32.mxu0 0.0
    %1574 = vmatmul.mubr.f32.gmra.mxu0 %v1294
    %v1575 = vpop.f32.mrf.mxu0
    %v1576 = vadd.f32 %v1427, %v1575
    %v1577 = vpop.f32.mrf.mxu0
    %1578 = vmatprep.mubr.f32.mxu0 0.0
    %1579 = vmatmul.mubr.f32.gmra.mxu0 %v1295
    %v1580 = vpop.f32.mrf.mxu0
    %v1581 = vadd.f32 %v1427, %v1580
    %v1582 = vpop.f32.mrf.mxu0
    %1583 = vmatprep.mubr.f32.mxu0 0.0
    %1584 = vmatmul.mubr.f32.gmra.mxu0 %v1296
    %v1585 = vpop.f32.mrf.mxu0
    %v1586 = vadd.f32 %v1427, %v1585
    %v1587 = vpop.f32.mrf.mxu0
    %1588 = vmatprep.mubr.f32.mxu0 0.0
    %1589 = vmatmul.mubr.f32.gmra.mxu0 %v1297
    %v1590 = vpop.f32.mrf.mxu0
    %v1591 = vadd.f32 %v1427, %v1590
    %v1592 = vpop.f32.mrf.mxu0
    %1593 = vmatprep.mubr.f32.mxu0 0.0
    %1594 = vmatmul.mubr.f32.gmra.mxu0 %v1298
    %v1595 = vpop.f32.mrf.mxu0
    %v1596 = vadd.f32 %v1427, %v1595
    %v1597 = vpop.f32.mrf.mxu0
    %1598 = vmatprep.mubr.f32.mxu0 0.0
    %1599 = vmatmul.mubr.f32.gmra.mxu0 %v1299
    %v1600 = vpop.f32.mrf.mxu0
    %v1601 = vadd.f32 %v1427, %v1600
    %v1602 = vpop.f32.mrf.mxu0
    %1603 = vmatprep.mubr.f32.mxu0 0.0
    %1604 = vmatmul.mubr.f32.gmra.mxu0 %v1300
    %v1605 = vpop.f32.mrf.mxu0
    %v1606 = vadd.f32 %v1427, %v1605
    %v1607 = vpop.f32.mrf.mxu0
    %1608 = vmatprep.mubr.f32.mxu0 0.0
    %1609 = vmatmul.mubr.f32.gmra.mxu0 %v1301
    %v1610 = vpop.f32.mrf.mxu0
    %v1611 = vadd.f32 %v1427, %v1610
    %v1612 = vpop.f32.mrf.mxu0
    %1613 = vmatprep.mubr.f32.mxu0 0.0
    %1614 = vmatmul.mubr.f32.gmra.mxu0 %v1302
    %v1615 = vpop.f32.mrf.mxu0
    %v1616 = vadd.f32 %v1427, %v1615
    %v1617 = vpop.f32.mrf.mxu0
    %1618 = vmatprep.mubr.f32.mxu0 0.0
    %1619 = vmatmul.mubr.f32.gmra.mxu0 %v1303
    %v1620 = vpop.f32.mrf.mxu0
    %v1621 = vadd.f32 %v1427, %v1620
    %v1622 = vpop.f32.mrf.mxu0
    %1623 = vmatprep.mubr.f32.mxu0 0.0
    %1624 = vmatmul.mubr.f32.gmra.mxu0 %v1304
    %v1625 = vpop.f32.mrf.mxu0
    %v1626 = vadd.f32 %v1427, %v1625
    %v1627 = vpop.f32.mrf.mxu0
    %1628 = vmatprep.mubr.f32.mxu0 0.0
    %1629 = vmatmul.mubr.f32.gmra.mxu0 %v1305
    %v1630 = vpop.f32.mrf.mxu0
    %v1631 = vadd.f32 %v1427, %v1630
    %v1632 = vpop.f32.mrf.mxu0
    %1633 = vmatprep.mubr.f32.mxu0 0.0
    %1634 = vmatmul.mubr.f32.gmra.mxu0 %v1306
    %v1635 = vpop.f32.mrf.mxu0
    %v1636 = vadd.f32 %v1427, %v1635
    %v1637 = vpop.f32.mrf.mxu0
    %1638 = vmatprep.mubr.f32.mxu0 0.0
    %1639 = vmatmul.mubr.f32.gmra.mxu0 %v1307
    %v1640 = vpop.f32.mrf.mxu0
    %v1641 = vadd.f32 %v1427, %v1640
    %v1642 = vpop.f32.mrf.mxu0
    %1643 = vmatprep.mubr.f32.mxu0 0.0
    %1644 = vmatmul.mubr.f32.gmra.mxu0 %v1308
    %v1645 = vpop.f32.mrf.mxu0
    %v1646 = vadd.f32 %v1427, %v1645
    %v1647 = vpop.f32.mrf.mxu0
    %1648 = vmatprep.mubr.f32.mxu0 0.0
    %1649 = vmatmul.mubr.f32.gmra.mxu0 %v1309
    %v1650 = vpop.f32.mrf.mxu0
    %v1651 = vadd.f32 %v1427, %v1650
    %v1652 = vpop.f32.mrf.mxu0
    %1653 = vmatprep.mubr.f32.mxu0 0.0
    %1654 = vmatmul.mubr.f32.gmra.mxu0 %v1310
    %v1655 = vpop.f32.mrf.mxu0
    %v1656 = vadd.f32 %v1427, %v1655
    %v1657 = vpop.f32.mrf.mxu0
    %1658 = vmatprep.mubr.f32.mxu0 0.0
    %1659 = vmatmul.mubr.f32.gmra.mxu0 %v1311
    %v1660 = vpop.f32.mrf.mxu0
    %v1661 = vadd.f32 %v1427, %v1660
    %v1662 = vpop.f32.mrf.mxu0
    %1663 = vmatprep.mubr.f32.mxu0 0.0
    %1664 = vmatmul.mubr.f32.gmra.mxu0 %v1312
    %v1665 = vpop.f32.mrf.mxu0
    %v1666 = vadd.f32 %v1427, %v1665
    %v1667 = vpop.f32.mrf.mxu0
    %1668 = vmatprep.mubr.f32.mxu0 0.0
    %1669 = vmatmul.mubr.f32.gmra.mxu0 %v1313
    %v1670 = vpop.f32.mrf.mxu0
    %v1671 = vadd.f32 %v1427, %v1670
    %v1672 = vpop.f32.mrf.mxu0
    %1673 = vmatprep.mubr.f32.mxu0 0.0
    %1674 = vmatmul.mubr.f32.gmra.mxu0 %v1314
    %v1675 = vpop.f32.mrf.mxu0
    %v1676 = vadd.f32 %v1427, %v1675
    %v1677 = vpop.f32.mrf.mxu0
    %1678 = vmatprep.mubr.f32.mxu0 0.0
    %1679 = vmatmul.mubr.f32.gmra.mxu0 %v1315
    %v1680 = vpop.f32.mrf.mxu0
    %v1681 = vadd.f32 %v1427, %v1680
    %v1682 = vpop.f32.mrf.mxu0
    %1683 = vmatprep.mubr.f32.mxu0 0.0
    %1684 = vmatmul.mubr.f32.gmra.mxu0 %v1316
    %v1685 = vpop.f32.mrf.mxu0
    %v1686 = vadd.f32 %v1427, %v1685
    %v1687 = vpop.f32.mrf.mxu0
    %1688 = vmatprep.mubr.f32.mxu0 0.0
    %1689 = vmatmul.mubr.f32.gmra.mxu0 %v1317
    %v1690 = vpop.f32.mrf.mxu0
    %v1691 = vadd.f32 %v1427, %v1690
    %v1692 = vpop.f32.mrf.mxu0
    %1693 = vmatprep.mubr.f32.mxu0 0.0
    %1694 = vmatmul.mubr.f32.gmra.mxu0 %v1318
    %v1695 = vpop.f32.mrf.mxu0
    %v1696 = vadd.f32 %v1427, %v1695
    %v1697 = vpop.f32.mrf.mxu0
    %1698 = vmatprep.mubr.f32.mxu0 0.0
    %1699 = vmatmul.mubr.f32.gmra.mxu0 %v1319
    %v1700 = vpop.f32.mrf.mxu0
    %v1701 = vadd.f32 %v1427, %v1700
    %v1702 = vpop.f32.mrf.mxu0
    %1703 = vmatprep.mubr.f32.mxu0 0.0
    %1704 = vmatmul.mubr.f32.gmra.mxu0 %v1320
    %v1705 = vpop.f32.mrf.mxu0
    %v1706 = vadd.f32 %v1427, %v1705
    %v1707 = vpop.f32.mrf.mxu0
    %1708 = vmatprep.mubr.f32.mxu0 0.0
    %1709 = vmatmul.mubr.f32.gmra.mxu0 %v1321
    %v1710 = vpop.f32.mrf.mxu0
    %v1711 = vadd.f32 %v1427, %v1710
    %v1712 = vpop.f32.mrf.mxu0
    %1713 = vmatprep.mubr.f32.mxu0 0.0
    %1714 = vmatmul.mubr.f32.gmra.mxu0 %v1322
    %v1715 = vpop.f32.mrf.mxu0
    %v1716 = vadd.f32 %v1427, %v1715
    %v1717 = vpop.f32.mrf.mxu0
    %1718 = vmatprep.mubr.f32.mxu0 0.0
    %1719 = vmatmul.mubr.f32.gmra.mxu0 %v1323
    %v1720 = vpop.f32.mrf.mxu0
    %v1721 = vadd.f32 %v1427, %v1720
    %v1722 = vpop.f32.mrf.mxu0
    %1723 = vmatprep.mubr.f32.mxu0 0.0
    %1724 = vmatmul.mubr.f32.gmra.mxu0 %v1324
    %v1725 = vpop.f32.mrf.mxu0
    %v1726 = vadd.f32 %v1427, %v1725
    %v1727 = vpop.f32.mrf.mxu0
    %1728 = vmatprep.mubr.f32.mxu0 0.0
    %1729 = vmatmul.mubr.f32.gmra.mxu0 %v1325
    %v1730 = vpop.f32.mrf.mxu0
    %v1731 = vadd.f32 %v1427, %v1730
    %v1732 = vpop.f32.mrf.mxu0
    %1733 = vmatprep.mubr.f32.mxu0 0.0
    %1734 = vmatmul.mubr.f32.gmra.mxu0 %v1326
    %v1735 = vpop.f32.mrf.mxu0
    %v1736 = vadd.f32 %v1427, %v1735
    %v1737 = vpop.f32.mrf.mxu0
    %1738 = vmatprep.mubr.f32.mxu0 0.0
    %1739 = vmatmul.mubr.f32.gmra.mxu0 %v1327
    %v1740 = vpop.f32.mrf.mxu0
    %v1741 = vadd.f32 %v1427, %v1740
    %v1742 = vpop.f32.mrf.mxu0
    %1743 = vmatprep.mubr.f32.mxu0 0.0
    %1744 = vmatmul.mubr.f32.gmra.mxu0 %v1328
    %v1745 = vpop.f32.mrf.mxu0
    %v1746 = vadd.f32 %v1427, %v1745
    %v1747 = vpop.f32.mrf.mxu0
    %1748 = vmatprep.mubr.f32.mxu0 0.0
    %1749 = vmatmul.mubr.f32.gmra.mxu0 %v1329
    %v1750 = vpop.f32.mrf.mxu0
    %v1751 = vadd.f32 %v1427, %v1750
    %v1752 = vpop.f32.mrf.mxu0
    %1753 = vmatprep.mubr.f32.mxu0 0.0
    %1754 = vmatmul.mubr.f32.gmra.mxu0 %v1330
    %v1755 = vpop.f32.mrf.mxu0
    %v1756 = vadd.f32 %v1427, %v1755
    %v1757 = vpop.f32.mrf.mxu0
    %1758 = vmatprep.mubr.f32.mxu0 0.0
    %1759 = vmatmul.mubr.f32.gmra.mxu0 %v1331
    %v1760 = vpop.f32.mrf.mxu0
    %v1761 = vadd.f32 %v1427, %v1760
    %v1762 = vpop.f32.mrf.mxu0
    %1763 = vmatprep.mubr.f32.mxu0 0.0
    %1764 = vmatmul.mubr.f32.gmra.mxu0 %v1332
    %v1765 = vpop.f32.mrf.mxu0
    %v1766 = vadd.f32 %v1427, %v1765
    %v1767 = vpop.f32.mrf.mxu0
    %1768 = vmatprep.mubr.f32.mxu0 0.0
    %1769 = vmatmul.mubr.f32.gmra.mxu0 %v1333
    %v1770 = vpop.f32.mrf.mxu0
    %v1771 = vadd.f32 %v1427, %v1770
    %v1772 = vpop.f32.mrf.mxu0
    %1773 = vmatprep.mubr.f32.mxu0 0.0
    %1774 = vmatmul.mubr.f32.gmra.mxu0 %v1334
    %v1775 = vpop.f32.mrf.mxu0
    %v1776 = vadd.f32 %v1427, %v1775
    %v1777 = vpop.f32.mrf.mxu0
    %1778 = vmatprep.mubr.f32.mxu0 0.0
    %1779 = vmatmul.mubr.f32.gmra.mxu0 %v1335
    %v1780 = vpop.f32.mrf.mxu0
    %v1781 = vadd.f32 %v1427, %v1780
    %v1782 = vpop.f32.mrf.mxu0
    %1783 = vmatprep.mubr.f32.mxu0 0.0
    %1784 = vmatmul.mubr.f32.gmra.mxu0 %v1336
    %v1785 = vpop.f32.mrf.mxu0
    %v1786 = vadd.f32 %v1427, %v1785
    %v1787 = vpop.f32.mrf.mxu0
    %1788 = vmatprep.mubr.f32.mxu0 0.0
    %1789 = vmatmul.mubr.f32.gmra.mxu0 %v1337
    %v1790 = vpop.f32.mrf.mxu0
    %v1791 = vadd.f32 %v1427, %v1790
    %v1792 = vpop.f32.mrf.mxu0
    %1793 = vmatprep.mubr.f32.mxu0 0.0
    %1794 = vmatmul.mubr.f32.gmra.mxu0 %v1338
    %v1795 = vpop.f32.mrf.mxu0
    %v1796 = vadd.f32 %v1427, %v1795
    %v1797 = vpop.f32.mrf.mxu0
    %1798 = vmatprep.mubr.f32.mxu0 0.0
    %1799 = vmatmul.mubr.f32.gmra.mxu0 %v1339
    %v1800 = vpop.f32.mrf.mxu0
    %v1801 = vadd.f32 %v1427, %v1800
    %v1802 = vpop.f32.mrf.mxu0
    %1803 = vmatprep.mubr.f32.mxu0 0.0
    %1804 = vmatmul.mubr.f32.gmra.mxu0 %v1340
    %v1805 = vpop.f32.mrf.mxu0
    %v1806 = vadd.f32 %v1427, %v1805
    %v1807 = vpop.f32.mrf.mxu0
    %1808 = vmatprep.mubr.f32.mxu0 0.0
    %1809 = vmatmul.mubr.f32.gmra.mxu0 %v1341
    %v1810 = vpop.f32.mrf.mxu0
    %v1811 = vadd.f32 %v1427, %v1810
    %v1812 = vpop.f32.mrf.mxu0
    %1813 = vmatprep.mubr.f32.mxu0 0.0
    %1814 = vmatmul.mubr.f32.gmra.mxu0 %v1342
    %v1815 = vpop.f32.mrf.mxu0
    %v1816 = vadd.f32 %v1427, %v1815
    %v1817 = vpop.f32.mrf.mxu0
    %1818 = vmatprep.mubr.f32.mxu0 0.0
    %1819 = vmatmul.mubr.f32.gmra.mxu0 %v1343
    %v1820 = vpop.f32.mrf.mxu0
    %v1821 = vadd.f32 %v1427, %v1820
    %v1822 = vpop.f32.mrf.mxu0
    %1823 = vmatprep.mubr.f32.mxu0 0.0
    %1824 = vmatmul.mubr.f32.gmra.mxu0 %v1344
    %v1825 = vpop.f32.mrf.mxu0
    %v1826 = vadd.f32 %v1427, %v1825
    %v1827 = vpop.f32.mrf.mxu0
    %1828 = vmatprep.mubr.f32.mxu0 0.0
    %1829 = vmatmul.mubr.f32.gmra.mxu0 %v1345
    %v1830 = vpop.f32.mrf.mxu0
    %v1831 = vadd.f32 %v1427, %v1830
    %v1832 = vpop.f32.mrf.mxu0
    %1833 = vmatprep.mubr.f32.mxu0 0.0
    %1834 = vmatmul.mubr.f32.gmra.mxu0 %v1346
    %v1835 = vpop.f32.mrf.mxu0
    %v1836 = vadd.f32 %v1427, %v1835
    %v1837 = vpop.f32.mrf.mxu0
    %1838 = vmatprep.mubr.f32.mxu0 0.0
    %1839 = vmatmul.mubr.f32.gmra.mxu0 %v1347
    %v1840 = vpop.f32.mrf.mxu0
    %v1841 = vadd.f32 %v1427, %v1840
    %v1842 = vpop.f32.mrf.mxu0
    %1843 = vmatprep.mubr.f32.mxu0 0.0
    %1844 = vmatmul.mubr.f32.gmra.mxu0 %v1348
    %v1845 = vpop.f32.mrf.mxu0
    %v1846 = vadd.f32 %v1427, %v1845
    %v1847 = vpop.f32.mrf.mxu0
    %1848 = vmatprep.mubr.f32.mxu0 0.0
    %1849 = vmatmul.mubr.f32.gmra.mxu0 %v1349
    %v1850 = vpop.f32.mrf.mxu0
    %v1851 = vadd.f32 %v1427, %v1850
    %v1852 = vpop.f32.mrf.mxu0
    %1853 = vmatprep.mubr.f32.mxu0 0.0
    %1854 = vmatmul.mubr.f32.gmra.mxu0 %v1350
    %v1855 = vpop.f32.mrf.mxu0
    %v1856 = vadd.f32 %v1427, %v1855
    %v1857 = vpop.f32.mrf.mxu0
    %1858 = vmatprep.mubr.f32.mxu0 0.0
    %1859 = vmatmul.mubr.f32.gmra.mxu0 %v1351
    %v1860 = vpop.f32.mrf.mxu0
    %v1861 = vadd.f32 %v1427, %v1860
    %v1862 = vpop.f32.mrf.mxu0
    %1863 = vmatprep.mubr.f32.mxu0 0.0
    %1864 = vmatmul.mubr.f32.gmra.mxu0 %v1352
    %v1865 = vpop.f32.mrf.mxu0
    %v1866 = vadd.f32 %v1427, %v1865
    %v1867 = vpop.f32.mrf.mxu0
    %1868 = vmatprep.mubr.f32.mxu0 0.0
    %1869 = vmatmul.mubr.f32.gmra.mxu0 %v1353
    %v1870 = vpop.f32.mrf.mxu0
    %v1871 = vadd.f32 %v1427, %v1870
    %v1872 = vpop.f32.mrf.mxu0
    %1873 = vmatprep.mubr.f32.mxu0 0.0
    %1874 = vmatmul.mubr.f32.gmra.mxu0 %v1354
    %v1875 = vpop.f32.mrf.mxu0
    %v1876 = vadd.f32 %v1427, %v1875
    %v1877 = vpop.f32.mrf.mxu0
    %1878 = vmatprep.mubr.f32.mxu0 0.0
    %1879 = vmatmul.mubr.f32.gmra.mxu0 %v1355
    %v1880 = vpop.f32.mrf.mxu0
    %v1881 = vadd.f32 %v1427, %v1880
    %v1882 = vpop.f32.mrf.mxu0
    %1883 = vmatprep.mubr.f32.mxu0 0.0
    %1884 = vmatmul.mubr.f32.gmra.mxu0 %v1356
    %v1885 = vpop.f32.mrf.mxu0
    %v1886 = vadd.f32 %v1427, %v1885
    %v1887 = vpop.f32.mrf.mxu0
    %1888 = vmatprep.mubr.f32.mxu0 0.0
    %1889 = vmatmul.mubr.f32.gmra.mxu0 %v1357
    %v1890 = vpop.f32.mrf.mxu0
    %v1891 = vadd.f32 %v1427, %v1890
    %v1892 = vpop.f32.mrf.mxu0
    %1893 = vmatprep.mubr.f32.mxu0 0.0
    %1894 = vmatmul.mubr.f32.gmra.mxu0 %v1358
    %v1895 = vpop.f32.mrf.mxu0
    %v1896 = vadd.f32 %v1427, %v1895
    %v1897 = vpop.f32.mrf.mxu0
    %1898 = vmatprep.mubr.f32.mxu0 0.0
    %1899 = vmatmul.mubr.f32.gmra.mxu0 %v1359
    %v1900 = vpop.f32.mrf.mxu0
    %v1901 = vadd.f32 %v1427, %v1900
    %v1902 = vpop.f32.mrf.mxu0
    %1903 = vmatprep.mubr.f32.mxu0 0.0
    %1904 = vmatmul.mubr.f32.gmra.mxu0 %v1360
    %v1905 = vpop.f32.mrf.mxu0
    %v1906 = vadd.f32 %v1427, %v1905
    %v1907 = vpop.f32.mrf.mxu0
    %1908 = vmatprep.mubr.f32.mxu0 0.0
    %1909 = vmatmul.mubr.f32.gmra.mxu0 %v1361
    %v1910 = vpop.f32.mrf.mxu0
    %v1911 = vadd.f32 %v1427, %v1910
    %v1912 = vpop.f32.mrf.mxu0
    %1913 = vmatprep.mubr.f32.mxu0 0.0
    %1914 = vmatmul.mubr.f32.gmra.mxu0 %v1362
    %v1915 = vpop.f32.mrf.mxu0
    %v1916 = vadd.f32 %v1427, %v1915
    %v1917 = vpop.f32.mrf.mxu0
    %1918 = vmatprep.mubr.f32.mxu0 0.0
    %1919 = vmatmul.mubr.f32.gmra.mxu0 %v1363
    %v1920 = vpop.f32.mrf.mxu0
    %v1921 = vadd.f32 %v1427, %v1920
    %v1922 = vpop.f32.mrf.mxu0
    %1923 = vmatprep.mubr.f32.mxu0 0.0
    %1924 = vmatmul.mubr.f32.gmra.mxu0 %v1364
    %v1925 = vpop.f32.mrf.mxu0
    %v1926 = vadd.f32 %v1427, %v1925
    %v1927 = vpop.f32.mrf.mxu0
    %1928 = vmatprep.mubr.f32.mxu0 0.0
    %1929 = vmatmul.mubr.f32.gmra.mxu0 %v1365
    %v1930 = vpop.f32.mrf.mxu0
    %v1931 = vadd.f32 %v1427, %v1930
    %v1932 = vpop.f32.mrf.mxu0
    %1933 = vmatprep.mubr.f32.mxu0 0.0
    %1934 = vmatmul.mubr.f32.gmra.mxu0 %v1366
    %v1935 = vpop.f32.mrf.mxu0
    %v1936 = vadd.f32 %v1427, %v1935
    %v1937 = vpop.f32.mrf.mxu0
    %1938 = vmatprep.mubr.f32.mxu0 0.0
    %1939 = vmatmul.mubr.f32.gmra.mxu0 %v1367
    %v1940 = vpop.f32.mrf.mxu0
    %v1941 = vadd.f32 %v1427, %v1940
    %v1942 = vpop.f32.mrf.mxu0
    %1943 = vmatprep.mubr.f32.mxu0 0.0
    %1944 = vmatmul.mubr.f32.gmra.mxu0 %v1368
    %v1945 = vpop.f32.mrf.mxu0
    %v1946 = vadd.f32 %v1427, %v1945
    %v1947 = vpop.f32.mrf.mxu0
    %1948 = vmatprep.mubr.f32.mxu0 0.0
    %1949 = vmatmul.mubr.f32.gmra.mxu0 %v1369
    %v1950 = vpop.f32.mrf.mxu0
    %v1951 = vadd.f32 %v1427, %v1950
    %v1952 = vpop.f32.mrf.mxu0
    %1953 = vmatprep.mubr.f32.mxu0 0.0
    %1954 = vmatmul.mubr.f32.gmra.mxu0 %v1370
    %v1955 = vpop.f32.mrf.mxu0
    %v1956 = vadd.f32 %v1427, %v1955
    %v1957 = vpop.f32.mrf.mxu0
    %1958 = vmatprep.mubr.f32.mxu0 0.0
    %1959 = vmatmul.mubr.f32.gmra.mxu0 %v1371
    %v1960 = vpop.f32.mrf.mxu0
    %v1961 = vadd.f32 %v1427, %v1960
    %v1962 = vpop.f32.mrf.mxu0
    %1963 = vmatprep.mubr.f32.mxu0 0.0
    %1964 = vmatmul.mubr.f32.gmra.mxu0 %v1372
    %v1965 = vpop.f32.mrf.mxu0
    %v1966 = vadd.f32 %v1427, %v1965
    %v1967 = vpop.f32.mrf.mxu0
    %1968 = vmatprep.mubr.f32.mxu0 0.0
    %1969 = vmatmul.mubr.f32.gmra.mxu0 %v1373
    %v1970 = vpop.f32.mrf.mxu0
    %v1971 = vadd.f32 %v1427, %v1970
    %v1972 = vpop.f32.mrf.mxu0
    %1973 = vmatprep.mubr.f32.mxu0 0.0
    %1974 = vmatmul.mubr.f32.gmra.mxu0 %v1374
    %v1975 = vpop.f32.mrf.mxu0
    %v1976 = vadd.f32 %v1427, %v1975
    %v1977 = vpop.f32.mrf.mxu0
    %1978 = vmatprep.mubr.f32.mxu0 0.0
    %1979 = vmatmul.mubr.f32.gmra.mxu0 %v1375
    %v1980 = vpop.f32.mrf.mxu0
    %v1981 = vadd.f32 %v1427, %v1980
    %v1982 = vpop.f32.mrf.mxu0
    %1983 = vmatprep.mubr.f32.mxu0 0.0
    %1984 = vmatmul.mubr.f32.gmra.mxu0 %v1376
    %v1985 = vpop.f32.mrf.mxu0
    %v1986 = vadd.f32 %v1427, %v1985
    %v1987 = vpop.f32.mrf.mxu0
    %1988 = vmatprep.mubr.f32.mxu0 0.0
    %1989 = vmatmul.mubr.f32.gmra.mxu0 %v1377
    %v1990 = vpop.f32.mrf.mxu0
    %v1991 = vadd.f32 %v1427, %v1990
    %v1992 = vpop.f32.mrf.mxu0
    %1993 = vmatprep.mubr.f32.mxu0 0.0
    %1994 = vmatmul.mubr.f32.gmra.mxu0 %v1378
    %v1995 = vpop.f32.mrf.mxu0
    %v1996 = vadd.f32 %v1427, %v1995
    %v1997 = vpop.f32.mrf.mxu0
    %1998 = vmatprep.mubr.f32.mxu0 0.0
    %1999 = vmatmul.mubr.f32.gmra.mxu0 %v1379
    %v2000 = vpop.f32.mrf.mxu0
    %v2001 = vadd.f32 %v1427, %v2000
    %v2002 = vpop.f32.mrf.mxu0
    %2003 = vmatprep.mubr.f32.mxu0 0.0
    %2004 = vmatmul.mubr.f32.gmra.mxu0 %v1380
    %v2005 = vpop.f32.mrf.mxu0
    %v2006 = vadd.f32 %v1427, %v2005
    %v2007 = vpop.f32.mrf.mxu0
    %2008 = vmatprep.mubr.f32.mxu0 0.0
    %2009 = vmatmul.mubr.f32.gmra.mxu0 %v1381
    %v2010 = vpop.f32.mrf.mxu0
    %v2011 = vadd.f32 %v1427, %v2010
    %v2012 = vpop.f32.mrf.mxu0
    %2013 = vmatprep.mubr.f32.mxu0 0.0
    %2014 = vmatmul.mubr.f32.gmra.mxu0 %v1382
    %v2015 = vpop.f32.mrf.mxu0
    %v2016 = vadd.f32 %v1427, %v2015
    %v2017 = vpop.f32.mrf.mxu0
    %2018 = vmatprep.mubr.f32.mxu0 0.0
    %2019 = vmatmul.mubr.f32.gmra.mxu0 %v1383
    %v2020 = vpop.f32.mrf.mxu0
    %v2021 = vadd.f32 %v1427, %v2020
    %v2022 = vpop.f32.mrf.mxu0
    %2023 = vmatprep.mubr.f32.mxu0 0.0
    %2024 = vmatmul.mubr.f32.gmra.mxu0 %v1384
    %v2025 = vpop.f32.mrf.mxu0
    %v2026 = vadd.f32 %v1427, %v2025
    %v2027 = vpop.f32.mrf.mxu0
    %2028 = vmatprep.mubr.f32.mxu0 0.0
    %2029 = vmatmul.mubr.f32.gmra.mxu0 %v1385
    %v2030 = vpop.f32.mrf.mxu0
    %v2031 = vadd.f32 %v1427, %v2030
    %v2032 = vpop.f32.mrf.mxu0
    %2033 = vmatprep.mubr.f32.mxu0 0.0
    %2034 = vmatmul.mubr.f32.gmra.mxu0 %v1386
    %v2035 = vpop.f32.mrf.mxu0
    %v2036 = vadd.f32 %v1427, %v2035
    %v2037 = vpop.f32.mrf.mxu0
    %2038 = vmatprep.mubr.f32.mxu0 0.0
    %2039 = vmatmul.mubr.f32.gmra.mxu0 %v1387
    %v2040 = vpop.f32.mrf.mxu0
    %v2041 = vadd.f32 %v1427, %v2040
    %v2042 = vpop.f32.mrf.mxu0
    %2043 = vmatprep.mubr.f32.mxu0 0.0
    %2044 = vmatmul.mubr.f32.gmra.mxu0 %v1388
    %v2045 = vpop.f32.mrf.mxu0
    %v2046 = vadd.f32 %v1427, %v2045
    %v2047 = vpop.f32.mrf.mxu0
    %2048 = vmatprep.mubr.f32.mxu0 0.0
    %2049 = vmatmul.mubr.f32.gmra.mxu0 %v1389
    %v2050 = vpop.f32.mrf.mxu0
    %v2051 = vadd.f32 %v1427, %v2050
    %v2052 = vpop.f32.mrf.mxu0
    %2053 = vmatprep.mubr.f32.mxu0 0.0
    %2054 = vmatmul.mubr.f32.gmra.mxu0 %v1390
    %v2055 = vpop.f32.mrf.mxu0
    %v2056 = vadd.f32 %v1427, %v2055
    %v2057 = vpop.f32.mrf.mxu0
    %2058 = vmatprep.mubr.f32.mxu0 0.0
    %2059 = vmatmul.mubr.f32.gmra.mxu0 %v1391
    %v2060 = vpop.f32.mrf.mxu0
    %v2061 = vadd.f32 %v1427, %v2060
    %v2062 = vpop.f32.mrf.mxu0
    %2063 = vmatprep.mubr.f32.mxu0 0.0
    %2064 = vmatmul.mubr.f32.gmra.mxu0 %v1392
    %v2065 = vpop.f32.mrf.mxu0
    %v2066 = vadd.f32 %v1427, %v2065
    %v2067 = vpop.f32.mrf.mxu0
    %2068 = vmatprep.mubr.f32.mxu0 0.0
    %2069 = vmatmul.mubr.f32.gmra.mxu0 %v1393
    %v2070 = vpop.f32.mrf.mxu0
    %v2071 = vadd.f32 %v1427, %v2070
    %v2072 = vpop.f32.mrf.mxu0
    %2073 = vmatprep.mubr.f32.mxu0 0.0
    %2074 = vmatmul.mubr.f32.gmra.mxu0 %v1394
    %v2075 = vpop.f32.mrf.mxu0
    %v2076 = vadd.f32 %v1427, %v2075
    %v2077 = vpop.f32.mrf.mxu0
    %2078 = vmatprep.mubr.f32.mxu0 0.0
    %2079 = vmatmul.mubr.f32.gmra.mxu0 %v1395
    %v2080 = vpop.f32.mrf.mxu0
    %v2081 = vadd.f32 %v1427, %v2080
    %v2082 = vpop.f32.mrf.mxu0
    %2083 = vmatprep.mubr.f32.mxu0 0.0
    %2084 = vmatmul.mubr.f32.gmra.mxu0 %v1396
    %v2085 = vpop.f32.mrf.mxu0
    %v2086 = vadd.f32 %v1427, %v2085
    %v2087 = vpop.f32.mrf.mxu0
    %2088 = vmatprep.mubr.f32.mxu0 0.0
    %2089 = vmatmul.mubr.f32.gmra.mxu0 %v1397
    %v2090 = vpop.f32.mrf.mxu0
    %v2091 = vadd.f32 %v1427, %v2090
    %v2092 = vpop.f32.mrf.mxu0
    %2093 = vmatprep.mubr.f32.mxu0 0.0
    %2094 = vmatmul.mubr.f32.gmra.mxu0 %v1398
    %v2095 = vpop.f32.mrf.mxu0
    %v2096 = vadd.f32 %v1427, %v2095
    %v2097 = vpop.f32.mrf.mxu0
    %2098 = vmatprep.mubr.f32.mxu0 0.0
    %2099 = vmatmul.mubr.f32.gmra.mxu0 %v1399
    %v2100 = vpop.f32.mrf.mxu0
    %v2101 = vadd.f32 %v1427, %v2100
    %v2102 = vpop.f32.mrf.mxu0
    %2103 = vmatprep.mubr.f32.mxu0 0.0
    %2104 = vmatmul.mubr.f32.gmra.mxu0 %v1400
    %v2105 = vpop.f32.mrf.mxu0
    %v2106 = vadd.f32 %v1427, %v2105
    %v2107 = vpop.f32.mrf.mxu0
    %2108 = vmatprep.mubr.f32.mxu0 0.0
    %2109 = vmatmul.mubr.f32.gmra.mxu0 %v1401
    %v2110 = vpop.f32.mrf.mxu0
    %v2111 = vadd.f32 %v1427, %v2110
    %v2112 = vpop.f32.mrf.mxu0
    %2113 = vmatprep.mubr.f32.mxu0 0.0
    %2114 = vmatmul.mubr.f32.gmra.mxu0 %v1402
    %v2115 = vpop.f32.mrf.mxu0
    %v2116 = vadd.f32 %v1427, %v2115
    %v2117 = vpop.f32.mrf.mxu0
    %2118 = vmatprep.mubr.f32.mxu0 0.0
    %2119 = vmatmul.mubr.f32.gmra.mxu0 %v1403
    %v2120 = vpop.f32.mrf.mxu0
    %v2121 = vadd.f32 %v1427, %v2120
    %v2122 = vpop.f32.mrf.mxu0
    %2123 = vmatprep.mubr.f32.mxu0 0.0
    %2124 = vmatmul.mubr.f32.gmra.mxu0 %v1404
    %v2125 = vpop.f32.mrf.mxu0
    %v2126 = vadd.f32 %v1427, %v2125
    %v2127 = vpop.f32.mrf.mxu0
    %2128 = vmatprep.mubr.f32.mxu0 0.0
    %2129 = vmatmul.mubr.f32.gmra.mxu0 %v1405
    %v2130 = vpop.f32.mrf.mxu0
    %v2131 = vadd.f32 %v1427, %v2130
    %v2132 = vpop.f32.mrf.mxu0
    %2133 = vdwg.mxu0
    %v2134 = vmax.f32 %v1496, 0.0
    %v2135 = vmax.f32 %v1501, 0.0
    %v2136 = vmax.f32 %v1506, 0.0
    %v2137 = vmax.f32 %v1511, 0.0
    %v2138 = vmax.f32 %v1516, 0.0
    %v2139 = vmax.f32 %v1521, 0.0
    %v2140 = vmax.f32 %v1526, 0.0
    %v2141 = vmax.f32 %v1531, 0.0
    %v2142 = vmax.f32 %v1536, 0.0
    %v2143 = vmax.f32 %v1541, 0.0
    %v2144 = vmax.f32 %v1546, 0.0
    %v2145 = vmax.f32 %v1551, 0.0
    %v2146 = vmax.f32 %v1556, 0.0
    %v2147 = vmax.f32 %v1561, 0.0
    %v2148 = vmax.f32 %v1566, 0.0
    %v2149 = vmax.f32 %v1571, 0.0
    %v2150 = vmax.f32 %v1576, 0.0
    %v2151 = vmax.f32 %v1581, 0.0
    %v2152 = vmax.f32 %v1586, 0.0
    %v2153 = vmax.f32 %v1591, 0.0
    %v2154 = vmax.f32 %v1596, 0.0
    %v2155 = vmax.f32 %v1601, 0.0
    %v2156 = vmax.f32 %v1606, 0.0
    %v2157 = vmax.f32 %v1611, 0.0
    %v2158 = vmax.f32 %v1616, 0.0
    %v2159 = vmax.f32 %v1621, 0.0
    %v2160 = vmax.f32 %v1626, 0.0
    %v2161 = vmax.f32 %v1631, 0.0
    %v2162 = vmax.f32 %v1636, 0.0
    %v2163 = vmax.f32 %v1641, 0.0
    %v2164 = vmax.f32 %v1646, 0.0
    %v2165 = vmax.f32 %v1651, 0.0
    %v2166 = vmax.f32 %v1656, 0.0
    %v2167 = vmax.f32 %v1661, 0.0
    %v2168 = vmax.f32 %v1666, 0.0
    %v2169 = vmax.f32 %v1671, 0.0
    %v2170 = vmax.f32 %v1676, 0.0
    %v2171 = vmax.f32 %v1681, 0.0
    %v2172 = vmax.f32 %v1686, 0.0
    %v2173 = vmax.f32 %v1691, 0.0
    %v2174 = vmax.f32 %v1696, 0.0
    %v2175 = vmax.f32 %v1701, 0.0
    %v2176 = vmax.f32 %v1706, 0.0
    %v2177 = vmax.f32 %v1711, 0.0
    %v2178 = vmax.f32 %v1716, 0.0
    %v2179 = vmax.f32 %v1721, 0.0
    %v2180 = vmax.f32 %v1726, 0.0
    %v2181 = vmax.f32 %v1731, 0.0
    %v2182 = vmax.f32 %v1736, 0.0
    %v2183 = vmax.f32 %v1741, 0.0
    %v2184 = vmax.f32 %v1746, 0.0
    %v2185 = vmax.f32 %v1751, 0.0
    %v2186 = vmax.f32 %v1756, 0.0
    %v2187 = vmax.f32 %v1761, 0.0
    %v2188 = vmax.f32 %v1766, 0.0
    %v2189 = vmax.f32 %v1771, 0.0
    %v2190 = vmax.f32 %v1776, 0.0
    %v2191 = vmax.f32 %v1781, 0.0
    %v2192 = vmax.f32 %v1786, 0.0
    %v2193 = vmax.f32 %v1791, 0.0
    %v2194 = vmax.f32 %v1796, 0.0
    %v2195 = vmax.f32 %v1801, 0.0
    %v2196 = vmax.f32 %v1806, 0.0
    %v2197 = vmax.f32 %v1811, 0.0
    %v2198 = vmax.f32 %v1816, 0.0
    %v2199 = vmax.f32 %v1821, 0.0
    %v2200 = vmax.f32 %v1826, 0.0
    %v2201 = vmax.f32 %v1831, 0.0
    %v2202 = vmax.f32 %v1836, 0.0
    %v2203 = vmax.f32 %v1841, 0.0
    %v2204 = vmax.f32 %v1846, 0.0
    %v2205 = vmax.f32 %v1851, 0.0
    %v2206 = vmax.f32 %v1856, 0.0
    %v2207 = vmax.f32 %v1861, 0.0
    %v2208 = vmax.f32 %v1866, 0.0
    %v2209 = vmax.f32 %v1871, 0.0
    %v2210 = vmax.f32 %v1876, 0.0
    %v2211 = vmax.f32 %v1881, 0.0
    %v2212 = vmax.f32 %v1886, 0.0
    %v2213 = vmax.f32 %v1891, 0.0
    %v2214 = vmax.f32 %v1896, 0.0
    %v2215 = vmax.f32 %v1901, 0.0
    %v2216 = vmax.f32 %v1906, 0.0
    %v2217 = vmax.f32 %v1911, 0.0
    %v2218 = vmax.f32 %v1916, 0.0
    %v2219 = vmax.f32 %v1921, 0.0
    %v2220 = vmax.f32 %v1926, 0.0
    %v2221 = vmax.f32 %v1931, 0.0
    %v2222 = vmax.f32 %v1936, 0.0
    %v2223 = vmax.f32 %v1941, 0.0
    %v2224 = vmax.f32 %v1946, 0.0
    %v2225 = vmax.f32 %v1951, 0.0
    %v2226 = vmax.f32 %v1956, 0.0
    %v2227 = vmax.f32 %v1961, 0.0
    %v2228 = vmax.f32 %v1966, 0.0
    %v2229 = vmax.f32 %v1971, 0.0
    %v2230 = vmax.f32 %v1976, 0.0
    %v2231 = vmax.f32 %v1981, 0.0
    %v2232 = vmax.f32 %v1986, 0.0
    %v2233 = vmax.f32 %v1991, 0.0
    %v2234 = vmax.f32 %v1996, 0.0
    %v2235 = vmax.f32 %v2001, 0.0
    %v2236 = vmax.f32 %v2006, 0.0
    %v2237 = vmax.f32 %v2011, 0.0
    %v2238 = vmax.f32 %v2016, 0.0
    %v2239 = vmax.f32 %v2021, 0.0
    %v2240 = vmax.f32 %v2026, 0.0
    %v2241 = vmax.f32 %v2031, 0.0
    %v2242 = vmax.f32 %v2036, 0.0
    %v2243 = vmax.f32 %v2041, 0.0
    %v2244 = vmax.f32 %v2046, 0.0
    %v2245 = vmax.f32 %v2051, 0.0
    %v2246 = vmax.f32 %v2056, 0.0
    %v2247 = vmax.f32 %v2061, 0.0
    %v2248 = vmax.f32 %v2066, 0.0
    %v2249 = vmax.f32 %v2071, 0.0
    %v2250 = vmax.f32 %v2076, 0.0
    %v2251 = vmax.f32 %v2081, 0.0
    %v2252 = vmax.f32 %v2086, 0.0
    %v2253 = vmax.f32 %v2091, 0.0
    %v2254 = vmax.f32 %v2096, 0.0
    %v2255 = vmax.f32 %v2101, 0.0
    %v2256 = vmax.f32 %v2106, 0.0
    %v2257 = vmax.f32 %v2111, 0.0
    %v2258 = vmax.f32 %v2116, 0.0
    %v2259 = vmax.f32 %v2121, 0.0
    %v2260 = vmax.f32 %v2126, 0.0
    %v2261 = vmax.f32 %v2131, 0.0
    %v2262 = vld [vmem:[%s5] sm:$0xff]
    %v2263 = vld [vmem:[%s5 + $0x8] sm:$0xff]
    %v2264 = vld [vmem:[%s5 + $0x10] sm:$0xff]
    %v2265 = vld [vmem:[%s5 + $0x18] sm:$0xff]
    %v2266 = vld [vmem:[%s5 + $0x20] sm:$0xff]
    %v2267 = vld [vmem:[%s5 + $0x28] sm:$0xff]
    %v2268 = vld [vmem:[%s5 + $0x30] sm:$0xff]
    %v2269 = vld [vmem:[%s5 + $0x38] sm:$0xff]
    %v2270 = vld [vmem:[%s5 + $0x40] sm:$0xff]
    %v2271 = vld [vmem:[%s5 + $0x48] sm:$0xff]
    %v2272 = vld [vmem:[%s5 + $0x50] sm:$0xff]
    %v2273 = vld [vmem:[%s5 + $0x58] sm:$0xff]
    %v2274 = vld [vmem:[%s5 + $0x60] sm:$0xff]
    %v2275 = vld [vmem:[%s5 + $0x68] sm:$0xff]
    %v2276 = vld [vmem:[%s5 + $0x70] sm:$0xff]
    %v2277 = vld [vmem:[%s5 + $0x78] sm:$0xff]
    %v2278 = vld [vmem:[%s6] sm:$0x1]
    %v2280 = vlaneseq
    %v2281 = vshrl.u32 %v2280, 7
    %v2282 = vsub.s32 0, %v2281
    %v2283 = vrot.slane %v2278, %v2282
    %2285 = vmatprep.subr.mxu0 0.0
    %2286 = vmatpush1.msra.mxu0 %v2277
    %2287 = vmatprep.subr.mxu0 0.0
    %2288 = vmatpush1.msra.mxu0 %v2276
    %2289 = vmatprep.subr.mxu0 0.0
    %2290 = vmatpush1.msra.mxu0 %v2275
    %2291 = vmatprep.subr.mxu0 0.0
    %2292 = vmatpush1.msra.mxu0 %v2274
    %2293 = vmatprep.subr.mxu0 0.0
    %2294 = vmatpush1.msra.mxu0 %v2273
    %2295 = vmatprep.subr.mxu0 0.0
    %2296 = vmatpush1.msra.mxu0 %v2272
    %2297 = vmatprep.subr.mxu0 0.0
    %2298 = vmatpush1.msra.mxu0 %v2271
    %2299 = vmatprep.subr.mxu0 0.0
    %2300 = vmatpush1.msra.mxu0 %v2270
    %2301 = vmatprep.subr.mxu0 0.0
    %2302 = vmatpush1.msra.mxu0 %v2269
    %2303 = vmatprep.subr.mxu0 0.0
    %2304 = vmatpush1.msra.mxu0 %v2268
    %2305 = vmatprep.subr.mxu0 0.0
    %2306 = vmatpush1.msra.mxu0 %v2267
    %2307 = vmatprep.subr.mxu0 0.0
    %2308 = vmatpush1.msra.mxu0 %v2266
    %2309 = vmatprep.subr.mxu0 0.0
    %2310 = vmatpush1.msra.mxu0 %v2265
    %2311 = vmatprep.subr.mxu0 0.0
    %2312 = vmatpush1.msra.mxu0 %v2264
    %2313 = vmatprep.subr.mxu0 0.0
    %2314 = vmatpush1.msra.mxu0 %v2263
    %2315 = vmatprep.subr.mxu0 0.0
    %2316 = vmatpush1.msra.mxu0 %v2262
    %2317 = vmatprep.subr.mxu0 0.0
    %2318 = vmatpush2.msra.mxu0 0.0
    %2319 = vmatprep.subr.mxu0 0.0
    %2320 = vmatpush2.msra.mxu0 0.0
    %2321 = vmatprep.subr.mxu0 0.0
    %2322 = vmatpush2.msra.mxu0 0.0
    %2323 = vmatprep.subr.mxu0 0.0
    %2324 = vmatpush2.msra.mxu0 0.0
    %2325 = vmatprep.subr.mxu0 0.0
    %2326 = vmatpush2.msra.mxu0 0.0
    %2327 = vmatprep.subr.mxu0 0.0
    %2328 = vmatpush2.msra.mxu0 0.0
    %2329 = vmatprep.subr.mxu0 0.0
    %2330 = vmatpush2.msra.mxu0 0.0
    %2331 = vmatprep.subr.mxu0 0.0
    %2332 = vmatpush2.msra.mxu0 0.0
    %2333 = vmatprep.subr.mxu0 0.0
    %2334 = vmatpush2.msra.mxu0 0.0
    %2335 = vmatprep.subr.mxu0 0.0
    %2336 = vmatpush2.msra.mxu0 0.0
    %2337 = vmatprep.subr.mxu0 0.0
    %2338 = vmatpush2.msra.mxu0 0.0
    %2339 = vmatprep.subr.mxu0 0.0
    %2340 = vmatpush2.msra.mxu0 0.0
    %2341 = vmatprep.subr.mxu0 0.0
    %2342 = vmatpush2.msra.mxu0 0.0
    %2343 = vmatprep.subr.mxu0 0.0
    %2344 = vmatpush2.msra.mxu0 0.0
    %2345 = vmatprep.subr.mxu0 0.0
    %2346 = vmatpush2.msra.mxu0 0.0
    %2347 = vmatprep.subr.mxu0 0.0
    %2348 = vmatpush2.msra.mxu0 0.0
    %2349 = vmatprep.mubr.f32.mxu0 0.0
    %2350 = vmatmul.mubr.f32.gmra.mxu0 %v2134
    %v2351 = vpop.f32.mrf.mxu0
    %v2352 = vadd.f32 %v2283, %v2351
    %v2353 = vpop.f32.mrf.mxu0
    %2354 = vmatprep.mubr.f32.mxu0 0.0
    %2355 = vmatmul.mubr.f32.gmra.mxu0 %v2135
    %v2356 = vpop.f32.mrf.mxu0
    %v2357 = vadd.f32 %v2283, %v2356
    %v2358 = vpop.f32.mrf.mxu0
    %2359 = vmatprep.mubr.f32.mxu0 0.0
    %2360 = vmatmul.mubr.f32.gmra.mxu0 %v2136
    %v2361 = vpop.f32.mrf.mxu0
    %v2362 = vadd.f32 %v2283, %v2361
    %v2363 = vpop.f32.mrf.mxu0
    %2364 = vmatprep.mubr.f32.mxu0 0.0
    %2365 = vmatmul.mubr.f32.gmra.mxu0 %v2137
    %v2366 = vpop.f32.mrf.mxu0
    %v2367 = vadd.f32 %v2283, %v2366
    %v2368 = vpop.f32.mrf.mxu0
    %2369 = vmatprep.mubr.f32.mxu0 0.0
    %2370 = vmatmul.mubr.f32.gmra.mxu0 %v2138
    %v2371 = vpop.f32.mrf.mxu0
    %v2372 = vadd.f32 %v2283, %v2371
    %v2373 = vpop.f32.mrf.mxu0
    %2374 = vmatprep.mubr.f32.mxu0 0.0
    %2375 = vmatmul.mubr.f32.gmra.mxu0 %v2139
    %v2376 = vpop.f32.mrf.mxu0
    %v2377 = vadd.f32 %v2283, %v2376
    %v2378 = vpop.f32.mrf.mxu0
    %2379 = vmatprep.mubr.f32.mxu0 0.0
    %2380 = vmatmul.mubr.f32.gmra.mxu0 %v2140
    %v2381 = vpop.f32.mrf.mxu0
    %v2382 = vadd.f32 %v2283, %v2381
    %v2383 = vpop.f32.mrf.mxu0
    %2384 = vmatprep.mubr.f32.mxu0 0.0
    %2385 = vmatmul.mubr.f32.gmra.mxu0 %v2141
    %v2386 = vpop.f32.mrf.mxu0
    %v2387 = vadd.f32 %v2283, %v2386
    %v2388 = vpop.f32.mrf.mxu0
    %2389 = vmatprep.mubr.f32.mxu0 0.0
    %2390 = vmatmul.mubr.f32.gmra.mxu0 %v2142
    %v2391 = vpop.f32.mrf.mxu0
    %v2392 = vadd.f32 %v2283, %v2391
    %v2393 = vpop.f32.mrf.mxu0
    %2394 = vmatprep.mubr.f32.mxu0 0.0
    %2395 = vmatmul.mubr.f32.gmra.mxu0 %v2143
    %v2396 = vpop.f32.mrf.mxu0
    %v2397 = vadd.f32 %v2283, %v2396
    %v2398 = vpop.f32.mrf.mxu0
    %2399 = vmatprep.mubr.f32.mxu0 0.0
    %2400 = vmatmul.mubr.f32.gmra.mxu0 %v2144
    %v2401 = vpop.f32.mrf.mxu0
    %v2402 = vadd.f32 %v2283, %v2401
    %v2403 = vpop.f32.mrf.mxu0
    %2404 = vmatprep.mubr.f32.mxu0 0.0
    %2405 = vmatmul.mubr.f32.gmra.mxu0 %v2145
    %v2406 = vpop.f32.mrf.mxu0
    %v2407 = vadd.f32 %v2283, %v2406
    %v2408 = vpop.f32.mrf.mxu0
    %2409 = vmatprep.mubr.f32.mxu0 0.0
    %2410 = vmatmul.mubr.f32.gmra.mxu0 %v2146
    %v2411 = vpop.f32.mrf.mxu0
    %v2412 = vadd.f32 %v2283, %v2411
    %v2413 = vpop.f32.mrf.mxu0
    %2414 = vmatprep.mubr.f32.mxu0 0.0
    %2415 = vmatmul.mubr.f32.gmra.mxu0 %v2147
    %v2416 = vpop.f32.mrf.mxu0
    %v2417 = vadd.f32 %v2283, %v2416
    %v2418 = vpop.f32.mrf.mxu0
    %2419 = vmatprep.mubr.f32.mxu0 0.0
    %2420 = vmatmul.mubr.f32.gmra.mxu0 %v2148
    %v2421 = vpop.f32.mrf.mxu0
    %v2422 = vadd.f32 %v2283, %v2421
    %v2423 = vpop.f32.mrf.mxu0
    %2424 = vmatprep.mubr.f32.mxu0 0.0
    %2425 = vmatmul.mubr.f32.gmra.mxu0 %v2149
    %v2426 = vpop.f32.mrf.mxu0
    %v2427 = vadd.f32 %v2283, %v2426
    %v2428 = vpop.f32.mrf.mxu0
    %2429 = vmatprep.mubr.f32.mxu0 0.0
    %2430 = vmatmul.mubr.f32.gmra.mxu0 %v2150
    %v2431 = vpop.f32.mrf.mxu0
    %v2432 = vadd.f32 %v2283, %v2431
    %v2433 = vpop.f32.mrf.mxu0
    %2434 = vmatprep.mubr.f32.mxu0 0.0
    %2435 = vmatmul.mubr.f32.gmra.mxu0 %v2151
    %v2436 = vpop.f32.mrf.mxu0
    %v2437 = vadd.f32 %v2283, %v2436
    %v2438 = vpop.f32.mrf.mxu0
    %2439 = vmatprep.mubr.f32.mxu0 0.0
    %2440 = vmatmul.mubr.f32.gmra.mxu0 %v2152
    %v2441 = vpop.f32.mrf.mxu0
    %v2442 = vadd.f32 %v2283, %v2441
    %v2443 = vpop.f32.mrf.mxu0
    %2444 = vmatprep.mubr.f32.mxu0 0.0
    %2445 = vmatmul.mubr.f32.gmra.mxu0 %v2153
    %v2446 = vpop.f32.mrf.mxu0
    %v2447 = vadd.f32 %v2283, %v2446
    %v2448 = vpop.f32.mrf.mxu0
    %2449 = vmatprep.mubr.f32.mxu0 0.0
    %2450 = vmatmul.mubr.f32.gmra.mxu0 %v2154
    %v2451 = vpop.f32.mrf.mxu0
    %v2452 = vadd.f32 %v2283, %v2451
    %v2453 = vpop.f32.mrf.mxu0
    %2454 = vmatprep.mubr.f32.mxu0 0.0
    %2455 = vmatmul.mubr.f32.gmra.mxu0 %v2155
    %v2456 = vpop.f32.mrf.mxu0
    %v2457 = vadd.f32 %v2283, %v2456
    %v2458 = vpop.f32.mrf.mxu0
    %2459 = vmatprep.mubr.f32.mxu0 0.0
    %2460 = vmatmul.mubr.f32.gmra.mxu0 %v2156
    %v2461 = vpop.f32.mrf.mxu0
    %v2462 = vadd.f32 %v2283, %v2461
    %v2463 = vpop.f32.mrf.mxu0
    %2464 = vmatprep.mubr.f32.mxu0 0.0
    %2465 = vmatmul.mubr.f32.gmra.mxu0 %v2157
    %v2466 = vpop.f32.mrf.mxu0
    %v2467 = vadd.f32 %v2283, %v2466
    %v2468 = vpop.f32.mrf.mxu0
    %2469 = vmatprep.mubr.f32.mxu0 0.0
    %2470 = vmatmul.mubr.f32.gmra.mxu0 %v2158
    %v2471 = vpop.f32.mrf.mxu0
    %v2472 = vadd.f32 %v2283, %v2471
    %v2473 = vpop.f32.mrf.mxu0
    %2474 = vmatprep.mubr.f32.mxu0 0.0
    %2475 = vmatmul.mubr.f32.gmra.mxu0 %v2159
    %v2476 = vpop.f32.mrf.mxu0
    %v2477 = vadd.f32 %v2283, %v2476
    %v2478 = vpop.f32.mrf.mxu0
    %2479 = vmatprep.mubr.f32.mxu0 0.0
    %2480 = vmatmul.mubr.f32.gmra.mxu0 %v2160
    %v2481 = vpop.f32.mrf.mxu0
    %v2482 = vadd.f32 %v2283, %v2481
    %v2483 = vpop.f32.mrf.mxu0
    %2484 = vmatprep.mubr.f32.mxu0 0.0
    %2485 = vmatmul.mubr.f32.gmra.mxu0 %v2161
    %v2486 = vpop.f32.mrf.mxu0
    %v2487 = vadd.f32 %v2283, %v2486
    %v2488 = vpop.f32.mrf.mxu0
    %2489 = vmatprep.mubr.f32.mxu0 0.0
    %2490 = vmatmul.mubr.f32.gmra.mxu0 %v2162
    %v2491 = vpop.f32.mrf.mxu0
    %v2492 = vadd.f32 %v2283, %v2491
    %v2493 = vpop.f32.mrf.mxu0
    %2494 = vmatprep.mubr.f32.mxu0 0.0
    %2495 = vmatmul.mubr.f32.gmra.mxu0 %v2163
    %v2496 = vpop.f32.mrf.mxu0
    %v2497 = vadd.f32 %v2283, %v2496
    %v2498 = vpop.f32.mrf.mxu0
    %2499 = vmatprep.mubr.f32.mxu0 0.0
    %2500 = vmatmul.mubr.f32.gmra.mxu0 %v2164
    %v2501 = vpop.f32.mrf.mxu0
    %v2502 = vadd.f32 %v2283, %v2501
    %v2503 = vpop.f32.mrf.mxu0
    %2504 = vmatprep.mubr.f32.mxu0 0.0
    %2505 = vmatmul.mubr.f32.gmra.mxu0 %v2165
    %v2506 = vpop.f32.mrf.mxu0
    %v2507 = vadd.f32 %v2283, %v2506
    %v2508 = vpop.f32.mrf.mxu0
    %2509 = vmatprep.mubr.f32.mxu0 0.0
    %2510 = vmatmul.mubr.f32.gmra.mxu0 %v2166
    %v2511 = vpop.f32.mrf.mxu0
    %v2512 = vadd.f32 %v2283, %v2511
    %v2513 = vpop.f32.mrf.mxu0
    %2514 = vmatprep.mubr.f32.mxu0 0.0
    %2515 = vmatmul.mubr.f32.gmra.mxu0 %v2167
    %v2516 = vpop.f32.mrf.mxu0
    %v2517 = vadd.f32 %v2283, %v2516
    %v2518 = vpop.f32.mrf.mxu0
    %2519 = vmatprep.mubr.f32.mxu0 0.0
    %2520 = vmatmul.mubr.f32.gmra.mxu0 %v2168
    %v2521 = vpop.f32.mrf.mxu0
    %v2522 = vadd.f32 %v2283, %v2521
    %v2523 = vpop.f32.mrf.mxu0
    %2524 = vmatprep.mubr.f32.mxu0 0.0
    %2525 = vmatmul.mubr.f32.gmra.mxu0 %v2169
    %v2526 = vpop.f32.mrf.mxu0
    %v2527 = vadd.f32 %v2283, %v2526
    %v2528 = vpop.f32.mrf.mxu0
    %2529 = vmatprep.mubr.f32.mxu0 0.0
    %2530 = vmatmul.mubr.f32.gmra.mxu0 %v2170
    %v2531 = vpop.f32.mrf.mxu0
    %v2532 = vadd.f32 %v2283, %v2531
    %v2533 = vpop.f32.mrf.mxu0
    %2534 = vmatprep.mubr.f32.mxu0 0.0
    %2535 = vmatmul.mubr.f32.gmra.mxu0 %v2171
    %v2536 = vpop.f32.mrf.mxu0
    %v2537 = vadd.f32 %v2283, %v2536
    %v2538 = vpop.f32.mrf.mxu0
    %2539 = vmatprep.mubr.f32.mxu0 0.0
    %2540 = vmatmul.mubr.f32.gmra.mxu0 %v2172
    %v2541 = vpop.f32.mrf.mxu0
    %v2542 = vadd.f32 %v2283, %v2541
    %v2543 = vpop.f32.mrf.mxu0
    %2544 = vmatprep.mubr.f32.mxu0 0.0
    %2545 = vmatmul.mubr.f32.gmra.mxu0 %v2173
    %v2546 = vpop.f32.mrf.mxu0
    %v2547 = vadd.f32 %v2283, %v2546
    %v2548 = vpop.f32.mrf.mxu0
    %2549 = vmatprep.mubr.f32.mxu0 0.0
    %2550 = vmatmul.mubr.f32.gmra.mxu0 %v2174
    %v2551 = vpop.f32.mrf.mxu0
    %v2552 = vadd.f32 %v2283, %v2551
    %v2553 = vpop.f32.mrf.mxu0
    %2554 = vmatprep.mubr.f32.mxu0 0.0
    %2555 = vmatmul.mubr.f32.gmra.mxu0 %v2175
    %v2556 = vpop.f32.mrf.mxu0
    %v2557 = vadd.f32 %v2283, %v2556
    %v2558 = vpop.f32.mrf.mxu0
    %2559 = vmatprep.mubr.f32.mxu0 0.0
    %2560 = vmatmul.mubr.f32.gmra.mxu0 %v2176
    %v2561 = vpop.f32.mrf.mxu0
    %v2562 = vadd.f32 %v2283, %v2561
    %v2563 = vpop.f32.mrf.mxu0
    %2564 = vmatprep.mubr.f32.mxu0 0.0
    %2565 = vmatmul.mubr.f32.gmra.mxu0 %v2177
    %v2566 = vpop.f32.mrf.mxu0
    %v2567 = vadd.f32 %v2283, %v2566
    %v2568 = vpop.f32.mrf.mxu0
    %2569 = vmatprep.mubr.f32.mxu0 0.0
    %2570 = vmatmul.mubr.f32.gmra.mxu0 %v2178
    %v2571 = vpop.f32.mrf.mxu0
    %v2572 = vadd.f32 %v2283, %v2571
    %v2573 = vpop.f32.mrf.mxu0
    %2574 = vmatprep.mubr.f32.mxu0 0.0
    %2575 = vmatmul.mubr.f32.gmra.mxu0 %v2179
    %v2576 = vpop.f32.mrf.mxu0
    %v2577 = vadd.f32 %v2283, %v2576
    %v2578 = vpop.f32.mrf.mxu0
    %2579 = vmatprep.mubr.f32.mxu0 0.0
    %2580 = vmatmul.mubr.f32.gmra.mxu0 %v2180
    %v2581 = vpop.f32.mrf.mxu0
    %v2582 = vadd.f32 %v2283, %v2581
    %v2583 = vpop.f32.mrf.mxu0
    %2584 = vmatprep.mubr.f32.mxu0 0.0
    %2585 = vmatmul.mubr.f32.gmra.mxu0 %v2181
    %v2586 = vpop.f32.mrf.mxu0
    %v2587 = vadd.f32 %v2283, %v2586
    %v2588 = vpop.f32.mrf.mxu0
    %2589 = vmatprep.mubr.f32.mxu0 0.0
    %2590 = vmatmul.mubr.f32.gmra.mxu0 %v2182
    %v2591 = vpop.f32.mrf.mxu0
    %v2592 = vadd.f32 %v2283, %v2591
    %v2593 = vpop.f32.mrf.mxu0
    %2594 = vmatprep.mubr.f32.mxu0 0.0
    %2595 = vmatmul.mubr.f32.gmra.mxu0 %v2183
    %v2596 = vpop.f32.mrf.mxu0
    %v2597 = vadd.f32 %v2283, %v2596
    %v2598 = vpop.f32.mrf.mxu0
    %2599 = vmatprep.mubr.f32.mxu0 0.0
    %2600 = vmatmul.mubr.f32.gmra.mxu0 %v2184
    %v2601 = vpop.f32.mrf.mxu0
    %v2602 = vadd.f32 %v2283, %v2601
    %v2603 = vpop.f32.mrf.mxu0
    %2604 = vmatprep.mubr.f32.mxu0 0.0
    %2605 = vmatmul.mubr.f32.gmra.mxu0 %v2185
    %v2606 = vpop.f32.mrf.mxu0
    %v2607 = vadd.f32 %v2283, %v2606
    %v2608 = vpop.f32.mrf.mxu0
    %2609 = vmatprep.mubr.f32.mxu0 0.0
    %2610 = vmatmul.mubr.f32.gmra.mxu0 %v2186
    %v2611 = vpop.f32.mrf.mxu0
    %v2612 = vadd.f32 %v2283, %v2611
    %v2613 = vpop.f32.mrf.mxu0
    %2614 = vmatprep.mubr.f32.mxu0 0.0
    %2615 = vmatmul.mubr.f32.gmra.mxu0 %v2187
    %v2616 = vpop.f32.mrf.mxu0
    %v2617 = vadd.f32 %v2283, %v2616
    %v2618 = vpop.f32.mrf.mxu0
    %2619 = vmatprep.mubr.f32.mxu0 0.0
    %2620 = vmatmul.mubr.f32.gmra.mxu0 %v2188
    %v2621 = vpop.f32.mrf.mxu0
    %v2622 = vadd.f32 %v2283, %v2621
    %v2623 = vpop.f32.mrf.mxu0
    %2624 = vmatprep.mubr.f32.mxu0 0.0
    %2625 = vmatmul.mubr.f32.gmra.mxu0 %v2189
    %v2626 = vpop.f32.mrf.mxu0
    %v2627 = vadd.f32 %v2283, %v2626
    %v2628 = vpop.f32.mrf.mxu0
    %2629 = vmatprep.mubr.f32.mxu0 0.0
    %2630 = vmatmul.mubr.f32.gmra.mxu0 %v2190
    %v2631 = vpop.f32.mrf.mxu0
    %v2632 = vadd.f32 %v2283, %v2631
    %v2633 = vpop.f32.mrf.mxu0
    %2634 = vmatprep.mubr.f32.mxu0 0.0
    %2635 = vmatmul.mubr.f32.gmra.mxu0 %v2191
    %v2636 = vpop.f32.mrf.mxu0
    %v2637 = vadd.f32 %v2283, %v2636
    %v2638 = vpop.f32.mrf.mxu0
    %2639 = vmatprep.mubr.f32.mxu0 0.0
    %2640 = vmatmul.mubr.f32.gmra.mxu0 %v2192
    %v2641 = vpop.f32.mrf.mxu0
    %v2642 = vadd.f32 %v2283, %v2641
    %v2643 = vpop.f32.mrf.mxu0
    %2644 = vmatprep.mubr.f32.mxu0 0.0
    %2645 = vmatmul.mubr.f32.gmra.mxu0 %v2193
    %v2646 = vpop.f32.mrf.mxu0
    %v2647 = vadd.f32 %v2283, %v2646
    %v2648 = vpop.f32.mrf.mxu0
    %2649 = vmatprep.mubr.f32.mxu0 0.0
    %2650 = vmatmul.mubr.f32.gmra.mxu0 %v2194
    %v2651 = vpop.f32.mrf.mxu0
    %v2652 = vadd.f32 %v2283, %v2651
    %v2653 = vpop.f32.mrf.mxu0
    %2654 = vmatprep.mubr.f32.mxu0 0.0
    %2655 = vmatmul.mubr.f32.gmra.mxu0 %v2195
    %v2656 = vpop.f32.mrf.mxu0
    %v2657 = vadd.f32 %v2283, %v2656
    %v2658 = vpop.f32.mrf.mxu0
    %2659 = vmatprep.mubr.f32.mxu0 0.0
    %2660 = vmatmul.mubr.f32.gmra.mxu0 %v2196
    %v2661 = vpop.f32.mrf.mxu0
    %v2662 = vadd.f32 %v2283, %v2661
    %v2663 = vpop.f32.mrf.mxu0
    %2664 = vmatprep.mubr.f32.mxu0 0.0
    %2665 = vmatmul.mubr.f32.gmra.mxu0 %v2197
    %v2666 = vpop.f32.mrf.mxu0
    %v2667 = vadd.f32 %v2283, %v2666
    %v2668 = vpop.f32.mrf.mxu0
    %2669 = vmatprep.mubr.f32.mxu0 0.0
    %2670 = vmatmul.mubr.f32.gmra.mxu0 %v2198
    %v2671 = vpop.f32.mrf.mxu0
    %v2672 = vadd.f32 %v2283, %v2671
    %v2673 = vpop.f32.mrf.mxu0
    %2674 = vmatprep.mubr.f32.mxu0 0.0
    %2675 = vmatmul.mubr.f32.gmra.mxu0 %v2199
    %v2676 = vpop.f32.mrf.mxu0
    %v2677 = vadd.f32 %v2283, %v2676
    %v2678 = vpop.f32.mrf.mxu0
    %2679 = vmatprep.mubr.f32.mxu0 0.0
    %2680 = vmatmul.mubr.f32.gmra.mxu0 %v2200
    %v2681 = vpop.f32.mrf.mxu0
    %v2682 = vadd.f32 %v2283, %v2681
    %v2683 = vpop.f32.mrf.mxu0
    %2684 = vmatprep.mubr.f32.mxu0 0.0
    %2685 = vmatmul.mubr.f32.gmra.mxu0 %v2201
    %v2686 = vpop.f32.mrf.mxu0
    %v2687 = vadd.f32 %v2283, %v2686
    %v2688 = vpop.f32.mrf.mxu0
    %2689 = vmatprep.mubr.f32.mxu0 0.0
    %2690 = vmatmul.mubr.f32.gmra.mxu0 %v2202
    %v2691 = vpop.f32.mrf.mxu0
    %v2692 = vadd.f32 %v2283, %v2691
    %v2693 = vpop.f32.mrf.mxu0
    %2694 = vmatprep.mubr.f32.mxu0 0.0
    %2695 = vmatmul.mubr.f32.gmra.mxu0 %v2203
    %v2696 = vpop.f32.mrf.mxu0
    %v2697 = vadd.f32 %v2283, %v2696
    %v2698 = vpop.f32.mrf.mxu0
    %2699 = vmatprep.mubr.f32.mxu0 0.0
    %2700 = vmatmul.mubr.f32.gmra.mxu0 %v2204
    %v2701 = vpop.f32.mrf.mxu0
    %v2702 = vadd.f32 %v2283, %v2701
    %v2703 = vpop.f32.mrf.mxu0
    %2704 = vmatprep.mubr.f32.mxu0 0.0
    %2705 = vmatmul.mubr.f32.gmra.mxu0 %v2205
    %v2706 = vpop.f32.mrf.mxu0
    %v2707 = vadd.f32 %v2283, %v2706
    %v2708 = vpop.f32.mrf.mxu0
    %2709 = vmatprep.mubr.f32.mxu0 0.0
    %2710 = vmatmul.mubr.f32.gmra.mxu0 %v2206
    %v2711 = vpop.f32.mrf.mxu0
    %v2712 = vadd.f32 %v2283, %v2711
    %v2713 = vpop.f32.mrf.mxu0
    %2714 = vmatprep.mubr.f32.mxu0 0.0
    %2715 = vmatmul.mubr.f32.gmra.mxu0 %v2207
    %v2716 = vpop.f32.mrf.mxu0
    %v2717 = vadd.f32 %v2283, %v2716
    %v2718 = vpop.f32.mrf.mxu0
    %2719 = vmatprep.mubr.f32.mxu0 0.0
    %2720 = vmatmul.mubr.f32.gmra.mxu0 %v2208
    %v2721 = vpop.f32.mrf.mxu0
    %v2722 = vadd.f32 %v2283, %v2721
    %v2723 = vpop.f32.mrf.mxu0
    %2724 = vmatprep.mubr.f32.mxu0 0.0
    %2725 = vmatmul.mubr.f32.gmra.mxu0 %v2209
    %v2726 = vpop.f32.mrf.mxu0
    %v2727 = vadd.f32 %v2283, %v2726
    %v2728 = vpop.f32.mrf.mxu0
    %2729 = vmatprep.mubr.f32.mxu0 0.0
    %2730 = vmatmul.mubr.f32.gmra.mxu0 %v2210
    %v2731 = vpop.f32.mrf.mxu0
    %v2732 = vadd.f32 %v2283, %v2731
    %v2733 = vpop.f32.mrf.mxu0
    %2734 = vmatprep.mubr.f32.mxu0 0.0
    %2735 = vmatmul.mubr.f32.gmra.mxu0 %v2211
    %v2736 = vpop.f32.mrf.mxu0
    %v2737 = vadd.f32 %v2283, %v2736
    %v2738 = vpop.f32.mrf.mxu0
    %2739 = vmatprep.mubr.f32.mxu0 0.0
    %2740 = vmatmul.mubr.f32.gmra.mxu0 %v2212
    %v2741 = vpop.f32.mrf.mxu0
    %v2742 = vadd.f32 %v2283, %v2741
    %v2743 = vpop.f32.mrf.mxu0
    %2744 = vmatprep.mubr.f32.mxu0 0.0
    %2745 = vmatmul.mubr.f32.gmra.mxu0 %v2213
    %v2746 = vpop.f32.mrf.mxu0
    %v2747 = vadd.f32 %v2283, %v2746
    %v2748 = vpop.f32.mrf.mxu0
    %2749 = vmatprep.mubr.f32.mxu0 0.0
    %2750 = vmatmul.mubr.f32.gmra.mxu0 %v2214
    %v2751 = vpop.f32.mrf.mxu0
    %v2752 = vadd.f32 %v2283, %v2751
    %v2753 = vpop.f32.mrf.mxu0
    %2754 = vmatprep.mubr.f32.mxu0 0.0
    %2755 = vmatmul.mubr.f32.gmra.mxu0 %v2215
    %v2756 = vpop.f32.mrf.mxu0
    %v2757 = vadd.f32 %v2283, %v2756
    %v2758 = vpop.f32.mrf.mxu0
    %2759 = vmatprep.mubr.f32.mxu0 0.0
    %2760 = vmatmul.mubr.f32.gmra.mxu0 %v2216
    %v2761 = vpop.f32.mrf.mxu0
    %v2762 = vadd.f32 %v2283, %v2761
    %v2763 = vpop.f32.mrf.mxu0
    %2764 = vmatprep.mubr.f32.mxu0 0.0
    %2765 = vmatmul.mubr.f32.gmra.mxu0 %v2217
    %v2766 = vpop.f32.mrf.mxu0
    %v2767 = vadd.f32 %v2283, %v2766
    %v2768 = vpop.f32.mrf.mxu0
    %2769 = vmatprep.mubr.f32.mxu0 0.0
    %2770 = vmatmul.mubr.f32.gmra.mxu0 %v2218
    %v2771 = vpop.f32.mrf.mxu0
    %v2772 = vadd.f32 %v2283, %v2771
    %v2773 = vpop.f32.mrf.mxu0
    %2774 = vmatprep.mubr.f32.mxu0 0.0
    %2775 = vmatmul.mubr.f32.gmra.mxu0 %v2219
    %v2776 = vpop.f32.mrf.mxu0
    %v2777 = vadd.f32 %v2283, %v2776
    %v2778 = vpop.f32.mrf.mxu0
    %2779 = vmatprep.mubr.f32.mxu0 0.0
    %2780 = vmatmul.mubr.f32.gmra.mxu0 %v2220
    %v2781 = vpop.f32.mrf.mxu0
    %v2782 = vadd.f32 %v2283, %v2781
    %v2783 = vpop.f32.mrf.mxu0
    %2784 = vmatprep.mubr.f32.mxu0 0.0
    %2785 = vmatmul.mubr.f32.gmra.mxu0 %v2221
    %v2786 = vpop.f32.mrf.mxu0
    %v2787 = vadd.f32 %v2283, %v2786
    %v2788 = vpop.f32.mrf.mxu0
    %2789 = vmatprep.mubr.f32.mxu0 0.0
    %2790 = vmatmul.mubr.f32.gmra.mxu0 %v2222
    %v2791 = vpop.f32.mrf.mxu0
    %v2792 = vadd.f32 %v2283, %v2791
    %v2793 = vpop.f32.mrf.mxu0
    %2794 = vmatprep.mubr.f32.mxu0 0.0
    %2795 = vmatmul.mubr.f32.gmra.mxu0 %v2223
    %v2796 = vpop.f32.mrf.mxu0
    %v2797 = vadd.f32 %v2283, %v2796
    %v2798 = vpop.f32.mrf.mxu0
    %2799 = vmatprep.mubr.f32.mxu0 0.0
    %2800 = vmatmul.mubr.f32.gmra.mxu0 %v2224
    %v2801 = vpop.f32.mrf.mxu0
    %v2802 = vadd.f32 %v2283, %v2801
    %v2803 = vpop.f32.mrf.mxu0
    %2804 = vmatprep.mubr.f32.mxu0 0.0
    %2805 = vmatmul.mubr.f32.gmra.mxu0 %v2225
    %v2806 = vpop.f32.mrf.mxu0
    %v2807 = vadd.f32 %v2283, %v2806
    %v2808 = vpop.f32.mrf.mxu0
    %2809 = vmatprep.mubr.f32.mxu0 0.0
    %2810 = vmatmul.mubr.f32.gmra.mxu0 %v2226
    %v2811 = vpop.f32.mrf.mxu0
    %v2812 = vadd.f32 %v2283, %v2811
    %v2813 = vpop.f32.mrf.mxu0
    %2814 = vmatprep.mubr.f32.mxu0 0.0
    %2815 = vmatmul.mubr.f32.gmra.mxu0 %v2227
    %v2816 = vpop.f32.mrf.mxu0
    %v2817 = vadd.f32 %v2283, %v2816
    %v2818 = vpop.f32.mrf.mxu0
    %2819 = vmatprep.mubr.f32.mxu0 0.0
    %2820 = vmatmul.mubr.f32.gmra.mxu0 %v2228
    %v2821 = vpop.f32.mrf.mxu0
    %v2822 = vadd.f32 %v2283, %v2821
    %v2823 = vpop.f32.mrf.mxu0
    %2824 = vmatprep.mubr.f32.mxu0 0.0
    %2825 = vmatmul.mubr.f32.gmra.mxu0 %v2229
    %v2826 = vpop.f32.mrf.mxu0
    %v2827 = vadd.f32 %v2283, %v2826
    %v2828 = vpop.f32.mrf.mxu0
    %2829 = vmatprep.mubr.f32.mxu0 0.0
    %2830 = vmatmul.mubr.f32.gmra.mxu0 %v2230
    %v2831 = vpop.f32.mrf.mxu0
    %v2832 = vadd.f32 %v2283, %v2831
    %v2833 = vpop.f32.mrf.mxu0
    %2834 = vmatprep.mubr.f32.mxu0 0.0
    %2835 = vmatmul.mubr.f32.gmra.mxu0 %v2231
    %v2836 = vpop.f32.mrf.mxu0
    %v2837 = vadd.f32 %v2283, %v2836
    %v2838 = vpop.f32.mrf.mxu0
    %2839 = vmatprep.mubr.f32.mxu0 0.0
    %2840 = vmatmul.mubr.f32.gmra.mxu0 %v2232
    %v2841 = vpop.f32.mrf.mxu0
    %v2842 = vadd.f32 %v2283, %v2841
    %v2843 = vpop.f32.mrf.mxu0
    %2844 = vmatprep.mubr.f32.mxu0 0.0
    %2845 = vmatmul.mubr.f32.gmra.mxu0 %v2233
    %v2846 = vpop.f32.mrf.mxu0
    %v2847 = vadd.f32 %v2283, %v2846
    %v2848 = vpop.f32.mrf.mxu0
    %2849 = vmatprep.mubr.f32.mxu0 0.0
    %2850 = vmatmul.mubr.f32.gmra.mxu0 %v2234
    %v2851 = vpop.f32.mrf.mxu0
    %v2852 = vadd.f32 %v2283, %v2851
    %v2853 = vpop.f32.mrf.mxu0
    %2854 = vmatprep.mubr.f32.mxu0 0.0
    %2855 = vmatmul.mubr.f32.gmra.mxu0 %v2235
    %v2856 = vpop.f32.mrf.mxu0
    %v2857 = vadd.f32 %v2283, %v2856
    %v2858 = vpop.f32.mrf.mxu0
    %2859 = vmatprep.mubr.f32.mxu0 0.0
    %2860 = vmatmul.mubr.f32.gmra.mxu0 %v2236
    %v2861 = vpop.f32.mrf.mxu0
    %v2862 = vadd.f32 %v2283, %v2861
    %v2863 = vpop.f32.mrf.mxu0
    %2864 = vmatprep.mubr.f32.mxu0 0.0
    %2865 = vmatmul.mubr.f32.gmra.mxu0 %v2237
    %v2866 = vpop.f32.mrf.mxu0
    %v2867 = vadd.f32 %v2283, %v2866
    %v2868 = vpop.f32.mrf.mxu0
    %2869 = vmatprep.mubr.f32.mxu0 0.0
    %2870 = vmatmul.mubr.f32.gmra.mxu0 %v2238
    %v2871 = vpop.f32.mrf.mxu0
    %v2872 = vadd.f32 %v2283, %v2871
    %v2873 = vpop.f32.mrf.mxu0
    %2874 = vmatprep.mubr.f32.mxu0 0.0
    %2875 = vmatmul.mubr.f32.gmra.mxu0 %v2239
    %v2876 = vpop.f32.mrf.mxu0
    %v2877 = vadd.f32 %v2283, %v2876
    %v2878 = vpop.f32.mrf.mxu0
    %2879 = vmatprep.mubr.f32.mxu0 0.0
    %2880 = vmatmul.mubr.f32.gmra.mxu0 %v2240
    %v2881 = vpop.f32.mrf.mxu0
    %v2882 = vadd.f32 %v2283, %v2881
    %v2883 = vpop.f32.mrf.mxu0
    %2884 = vmatprep.mubr.f32.mxu0 0.0
    %2885 = vmatmul.mubr.f32.gmra.mxu0 %v2241
    %v2886 = vpop.f32.mrf.mxu0
    %v2887 = vadd.f32 %v2283, %v2886
    %v2888 = vpop.f32.mrf.mxu0
    %2889 = vmatprep.mubr.f32.mxu0 0.0
    %2890 = vmatmul.mubr.f32.gmra.mxu0 %v2242
    %v2891 = vpop.f32.mrf.mxu0
    %v2892 = vadd.f32 %v2283, %v2891
    %v2893 = vpop.f32.mrf.mxu0
    %2894 = vmatprep.mubr.f32.mxu0 0.0
    %2895 = vmatmul.mubr.f32.gmra.mxu0 %v2243
    %v2896 = vpop.f32.mrf.mxu0
    %v2897 = vadd.f32 %v2283, %v2896
    %v2898 = vpop.f32.mrf.mxu0
    %2899 = vmatprep.mubr.f32.mxu0 0.0
    %2900 = vmatmul.mubr.f32.gmra.mxu0 %v2244
    %v2901 = vpop.f32.mrf.mxu0
    %v2902 = vadd.f32 %v2283, %v2901
    %v2903 = vpop.f32.mrf.mxu0
    %2904 = vmatprep.mubr.f32.mxu0 0.0
    %2905 = vmatmul.mubr.f32.gmra.mxu0 %v2245
    %v2906 = vpop.f32.mrf.mxu0
    %v2907 = vadd.f32 %v2283, %v2906
    %v2908 = vpop.f32.mrf.mxu0
    %2909 = vmatprep.mubr.f32.mxu0 0.0
    %2910 = vmatmul.mubr.f32.gmra.mxu0 %v2246
    %v2911 = vpop.f32.mrf.mxu0
    %v2912 = vadd.f32 %v2283, %v2911
    %v2913 = vpop.f32.mrf.mxu0
    %2914 = vmatprep.mubr.f32.mxu0 0.0
    %2915 = vmatmul.mubr.f32.gmra.mxu0 %v2247
    %v2916 = vpop.f32.mrf.mxu0
    %v2917 = vadd.f32 %v2283, %v2916
    %v2918 = vpop.f32.mrf.mxu0
    %2919 = vmatprep.mubr.f32.mxu0 0.0
    %2920 = vmatmul.mubr.f32.gmra.mxu0 %v2248
    %v2921 = vpop.f32.mrf.mxu0
    %v2922 = vadd.f32 %v2283, %v2921
    %v2923 = vpop.f32.mrf.mxu0
    %2924 = vmatprep.mubr.f32.mxu0 0.0
    %2925 = vmatmul.mubr.f32.gmra.mxu0 %v2249
    %v2926 = vpop.f32.mrf.mxu0
    %v2927 = vadd.f32 %v2283, %v2926
    %v2928 = vpop.f32.mrf.mxu0
    %2929 = vmatprep.mubr.f32.mxu0 0.0
    %2930 = vmatmul.mubr.f32.gmra.mxu0 %v2250
    %v2931 = vpop.f32.mrf.mxu0
    %v2932 = vadd.f32 %v2283, %v2931
    %v2933 = vpop.f32.mrf.mxu0
    %2934 = vmatprep.mubr.f32.mxu0 0.0
    %2935 = vmatmul.mubr.f32.gmra.mxu0 %v2251
    %v2936 = vpop.f32.mrf.mxu0
    %v2937 = vadd.f32 %v2283, %v2936
    %v2938 = vpop.f32.mrf.mxu0
    %2939 = vmatprep.mubr.f32.mxu0 0.0
    %2940 = vmatmul.mubr.f32.gmra.mxu0 %v2252
    %v2941 = vpop.f32.mrf.mxu0
    %v2942 = vadd.f32 %v2283, %v2941
    %v2943 = vpop.f32.mrf.mxu0
    %2944 = vmatprep.mubr.f32.mxu0 0.0
    %2945 = vmatmul.mubr.f32.gmra.mxu0 %v2253
    %v2946 = vpop.f32.mrf.mxu0
    %v2947 = vadd.f32 %v2283, %v2946
    %v2948 = vpop.f32.mrf.mxu0
    %2949 = vmatprep.mubr.f32.mxu0 0.0
    %2950 = vmatmul.mubr.f32.gmra.mxu0 %v2254
    %v2951 = vpop.f32.mrf.mxu0
    %v2952 = vadd.f32 %v2283, %v2951
    %v2953 = vpop.f32.mrf.mxu0
    %2954 = vmatprep.mubr.f32.mxu0 0.0
    %2955 = vmatmul.mubr.f32.gmra.mxu0 %v2255
    %v2956 = vpop.f32.mrf.mxu0
    %v2957 = vadd.f32 %v2283, %v2956
    %v2958 = vpop.f32.mrf.mxu0
    %2959 = vmatprep.mubr.f32.mxu0 0.0
    %2960 = vmatmul.mubr.f32.gmra.mxu0 %v2256
    %v2961 = vpop.f32.mrf.mxu0
    %v2962 = vadd.f32 %v2283, %v2961
    %v2963 = vpop.f32.mrf.mxu0
    %2964 = vmatprep.mubr.f32.mxu0 0.0
    %2965 = vmatmul.mubr.f32.gmra.mxu0 %v2257
    %v2966 = vpop.f32.mrf.mxu0
    %v2967 = vadd.f32 %v2283, %v2966
    %v2968 = vpop.f32.mrf.mxu0
    %2969 = vmatprep.mubr.f32.mxu0 0.0
    %2970 = vmatmul.mubr.f32.gmra.mxu0 %v2258
    %v2971 = vpop.f32.mrf.mxu0
    %v2972 = vadd.f32 %v2283, %v2971
    %v2973 = vpop.f32.mrf.mxu0
    %2974 = vmatprep.mubr.f32.mxu0 0.0
    %2975 = vmatmul.mubr.f32.gmra.mxu0 %v2259
    %v2976 = vpop.f32.mrf.mxu0
    %v2977 = vadd.f32 %v2283, %v2976
    %v2978 = vpop.f32.mrf.mxu0
    %2979 = vmatprep.mubr.f32.mxu0 0.0
    %2980 = vmatmul.mubr.f32.gmra.mxu0 %v2260
    %v2981 = vpop.f32.mrf.mxu0
    %v2982 = vadd.f32 %v2283, %v2981
    %v2983 = vpop.f32.mrf.mxu0
    %2984 = vmatprep.mubr.f32.mxu0 0.0
    %2985 = vmatmul.mubr.f32.gmra.mxu0 %v2261
    %v2986 = vpop.f32.mrf.mxu0
    %v2987 = vadd.f32 %v2283, %v2986
    %v2988 = vpop.f32.mrf.mxu0
    %2989 = vdwg.mxu0
    %v2990 = vmax.f32 %v2352, 0.0
    %v2991 = vmax.f32 %v2357, 0.0
    %v2992 = vmax.f32 %v2362, 0.0
    %v2993 = vmax.f32 %v2367, 0.0
    %v2994 = vmax.f32 %v2372, 0.0
    %v2995 = vmax.f32 %v2377, 0.0
    %v2996 = vmax.f32 %v2382, 0.0
    %v2997 = vmax.f32 %v2387, 0.0
    %v2998 = vmax.f32 %v2392, 0.0
    %v2999 = vmax.f32 %v2397, 0.0
    %v3000 = vmax.f32 %v2402, 0.0
    %v3001 = vmax.f32 %v2407, 0.0
    %v3002 = vmax.f32 %v2412, 0.0
    %v3003 = vmax.f32 %v2417, 0.0
    %v3004 = vmax.f32 %v2422, 0.0
    %v3005 = vmax.f32 %v2427, 0.0
    %v3006 = vmax.f32 %v2432, 0.0
    %v3007 = vmax.f32 %v2437, 0.0
    %v3008 = vmax.f32 %v2442, 0.0
    %v3009 = vmax.f32 %v2447, 0.0
    %v3010 = vmax.f32 %v2452, 0.0
    %v3011 = vmax.f32 %v2457, 0.0
    %v3012 = vmax.f32 %v2462, 0.0
    %v3013 = vmax.f32 %v2467, 0.0
    %v3014 = vmax.f32 %v2472, 0.0
    %v3015 = vmax.f32 %v2477, 0.0
    %v3016 = vmax.f32 %v2482, 0.0
    %v3017 = vmax.f32 %v2487, 0.0
    %v3018 = vmax.f32 %v2492, 0.0
    %v3019 = vmax.f32 %v2497, 0.0
    %v3020 = vmax.f32 %v2502, 0.0
    %v3021 = vmax.f32 %v2507, 0.0
    %v3022 = vmax.f32 %v2512, 0.0
    %v3023 = vmax.f32 %v2517, 0.0
    %v3024 = vmax.f32 %v2522, 0.0
    %v3025 = vmax.f32 %v2527, 0.0
    %v3026 = vmax.f32 %v2532, 0.0
    %v3027 = vmax.f32 %v2537, 0.0
    %v3028 = vmax.f32 %v2542, 0.0
    %v3029 = vmax.f32 %v2547, 0.0
    %v3030 = vmax.f32 %v2552, 0.0
    %v3031 = vmax.f32 %v2557, 0.0
    %v3032 = vmax.f32 %v2562, 0.0
    %v3033 = vmax.f32 %v2567, 0.0
    %v3034 = vmax.f32 %v2572, 0.0
    %v3035 = vmax.f32 %v2577, 0.0
    %v3036 = vmax.f32 %v2582, 0.0
    %v3037 = vmax.f32 %v2587, 0.0
    %v3038 = vmax.f32 %v2592, 0.0
    %v3039 = vmax.f32 %v2597, 0.0
    %v3040 = vmax.f32 %v2602, 0.0
    %v3041 = vmax.f32 %v2607, 0.0
    %v3042 = vmax.f32 %v2612, 0.0
    %v3043 = vmax.f32 %v2617, 0.0
    %v3044 = vmax.f32 %v2622, 0.0
    %v3045 = vmax.f32 %v2627, 0.0
    %v3046 = vmax.f32 %v2632, 0.0
    %v3047 = vmax.f32 %v2637, 0.0
    %v3048 = vmax.f32 %v2642, 0.0
    %v3049 = vmax.f32 %v2647, 0.0
    %v3050 = vmax.f32 %v2652, 0.0
    %v3051 = vmax.f32 %v2657, 0.0
    %v3052 = vmax.f32 %v2662, 0.0
    %v3053 = vmax.f32 %v2667, 0.0
    %v3054 = vmax.f32 %v2672, 0.0
    %v3055 = vmax.f32 %v2677, 0.0
    %v3056 = vmax.f32 %v2682, 0.0
    %v3057 = vmax.f32 %v2687, 0.0
    %v3058 = vmax.f32 %v2692, 0.0
    %v3059 = vmax.f32 %v2697, 0.0
    %v3060 = vmax.f32 %v2702, 0.0
    %v3061 = vmax.f32 %v2707, 0.0
    %v3062 = vmax.f32 %v2712, 0.0
    %v3063 = vmax.f32 %v2717, 0.0
    %v3064 = vmax.f32 %v2722, 0.0
    %v3065 = vmax.f32 %v2727, 0.0
    %v3066 = vmax.f32 %v2732, 0.0
    %v3067 = vmax.f32 %v2737, 0.0
    %v3068 = vmax.f32 %v2742, 0.0
    %v3069 = vmax.f32 %v2747, 0.0
    %v3070 = vmax.f32 %v2752, 0.0
    %v3071 = vmax.f32 %v2757, 0.0
    %v3072 = vmax.f32 %v2762, 0.0
    %v3073 = vmax.f32 %v2767, 0.0
    %v3074 = vmax.f32 %v2772, 0.0
    %v3075 = vmax.f32 %v2777, 0.0
    %v3076 = vmax.f32 %v2782, 0.0
    %v3077 = vmax.f32 %v2787, 0.0
    %v3078 = vmax.f32 %v2792, 0.0
    %v3079 = vmax.f32 %v2797, 0.0
    %v3080 = vmax.f32 %v2802, 0.0
    %v3081 = vmax.f32 %v2807, 0.0
    %v3082 = vmax.f32 %v2812, 0.0
    %v3083 = vmax.f32 %v2817, 0.0
    %v3084 = vmax.f32 %v2822, 0.0
    %v3085 = vmax.f32 %v2827, 0.0
    %v3086 = vmax.f32 %v2832, 0.0
    %v3087 = vmax.f32 %v2837, 0.0
    %v3088 = vmax.f32 %v2842, 0.0
    %v3089 = vmax.f32 %v2847, 0.0
    %v3090 = vmax.f32 %v2852, 0.0
    %v3091 = vmax.f32 %v2857, 0.0
    %v3092 = vmax.f32 %v2862, 0.0
    %v3093 = vmax.f32 %v2867, 0.0
    %v3094 = vmax.f32 %v2872, 0.0
    %v3095 = vmax.f32 %v2877, 0.0
    %v3096 = vmax.f32 %v2882, 0.0
    %v3097 = vmax.f32 %v2887, 0.0
    %v3098 = vmax.f32 %v2892, 0.0
    %v3099 = vmax.f32 %v2897, 0.0
    %v3100 = vmax.f32 %v2902, 0.0
    %v3101 = vmax.f32 %v2907, 0.0
    %v3102 = vmax.f32 %v2912, 0.0
    %v3103 = vmax.f32 %v2917, 0.0
    %v3104 = vmax.f32 %v2922, 0.0
    %v3105 = vmax.f32 %v2927, 0.0
    %v3106 = vmax.f32 %v2932, 0.0
    %v3107 = vmax.f32 %v2937, 0.0
    %v3108 = vmax.f32 %v2942, 0.0
    %v3109 = vmax.f32 %v2947, 0.0
    %v3110 = vmax.f32 %v2952, 0.0
    %v3111 = vmax.f32 %v2957, 0.0
    %v3112 = vmax.f32 %v2962, 0.0
    %v3113 = vmax.f32 %v2967, 0.0
    %v3114 = vmax.f32 %v2972, 0.0
    %v3115 = vmax.f32 %v2977, 0.0
    %v3116 = vmax.f32 %v2982, 0.0
    %v3117 = vmax.f32 %v2987, 0.0
    %v3118 = vld [vmem:[%s7] sm:$0xff]
    %v3119 = vld [vmem:[%s7 + $0x8] sm:$0xff]
    %v3120 = vld [vmem:[%s7 + $0x10] sm:$0xff]
    %v3121 = vld [vmem:[%s7 + $0x18] sm:$0xff]
    %v3122 = vld [vmem:[%s7 + $0x20] sm:$0xff]
    %v3123 = vld [vmem:[%s7 + $0x28] sm:$0xff]
    %v3124 = vld [vmem:[%s7 + $0x30] sm:$0xff]
    %v3125 = vld [vmem:[%s7 + $0x38] sm:$0xff]
    %v3126 = vld [vmem:[%s7 + $0x40] sm:$0xff]
    %v3127 = vld [vmem:[%s7 + $0x48] sm:$0xff]
    %v3128 = vld [vmem:[%s7 + $0x50] sm:$0xff]
    %v3129 = vld [vmem:[%s7 + $0x58] sm:$0xff]
    %v3130 = vld [vmem:[%s7 + $0x60] sm:$0xff]
    %v3131 = vld [vmem:[%s7 + $0x68] sm:$0xff]
    %v3132 = vld [vmem:[%s7 + $0x70] sm:$0xff]
    %v3133 = vld [vmem:[%s7 + $0x78] sm:$0xff]
    %v3134 = vld [vmem:[%s8] sm:$0x1]
    %v3136 = vlaneseq
    %v3137 = vshrl.u32 %v3136, 7
    %v3138 = vsub.s32 0, %v3137
    %v3139 = vrot.slane %v3134, %v3138
    %3141 = vmatprep.subr.mxu0 0.0
    %3142 = vmatpush1.msra.mxu0 %v3133
    %3143 = vmatprep.subr.mxu0 0.0
    %3144 = vmatpush1.msra.mxu0 %v3132
    %3145 = vmatprep.subr.mxu0 0.0
    %3146 = vmatpush1.msra.mxu0 %v3131
    %3147 = vmatprep.subr.mxu0 0.0
    %3148 = vmatpush1.msra.mxu0 %v3130
    %3149 = vmatprep.subr.mxu0 0.0
    %3150 = vmatpush1.msra.mxu0 %v3129
    %3151 = vmatprep.subr.mxu0 0.0
    %3152 = vmatpush1.msra.mxu0 %v3128
    %3153 = vmatprep.subr.mxu0 0.0
    %3154 = vmatpush1.msra.mxu0 %v3127
    %3155 = vmatprep.subr.mxu0 0.0
    %3156 = vmatpush1.msra.mxu0 %v3126
    %3157 = vmatprep.subr.mxu0 0.0
    %3158 = vmatpush1.msra.mxu0 %v3125
    %3159 = vmatprep.subr.mxu0 0.0
    %3160 = vmatpush1.msra.mxu0 %v3124
    %3161 = vmatprep.subr.mxu0 0.0
    %3162 = vmatpush1.msra.mxu0 %v3123
    %3163 = vmatprep.subr.mxu0 0.0
    %3164 = vmatpush1.msra.mxu0 %v3122
    %3165 = vmatprep.subr.mxu0 0.0
    %3166 = vmatpush1.msra.mxu0 %v3121
    %3167 = vmatprep.subr.mxu0 0.0
    %3168 = vmatpush1.msra.mxu0 %v3120
    %3169 = vmatprep.subr.mxu0 0.0
    %3170 = vmatpush1.msra.mxu0 %v3119
    %3171 = vmatprep.subr.mxu0 0.0
    %3172 = vmatpush1.msra.mxu0 %v3118
    %3173 = vmatprep.subr.mxu0 0.0
    %3174 = vmatpush2.msra.mxu0 0.0
    %3175 = vmatprep.subr.mxu0 0.0
    %3176 = vmatpush2.msra.mxu0 0.0
    %3177 = vmatprep.subr.mxu0 0.0
    %3178 = vmatpush2.msra.mxu0 0.0
    %3179 = vmatprep.subr.mxu0 0.0
    %3180 = vmatpush2.msra.mxu0 0.0
    %3181 = vmatprep.subr.mxu0 0.0
    %3182 = vmatpush2.msra.mxu0 0.0
    %3183 = vmatprep.subr.mxu0 0.0
    %3184 = vmatpush2.msra.mxu0 0.0
    %3185 = vmatprep.subr.mxu0 0.0
    %3186 = vmatpush2.msra.mxu0 0.0
    %3187 = vmatprep.subr.mxu0 0.0
    %3188 = vmatpush2.msra.mxu0 0.0
    %3189 = vmatprep.subr.mxu0 0.0
    %3190 = vmatpush2.msra.mxu0 0.0
    %3191 = vmatprep.subr.mxu0 0.0
    %3192 = vmatpush2.msra.mxu0 0.0
    %3193 = vmatprep.subr.mxu0 0.0
    %3194 = vmatpush2.msra.mxu0 0.0
    %3195 = vmatprep.subr.mxu0 0.0
    %3196 = vmatpush2.msra.mxu0 0.0
    %3197 = vmatprep.subr.mxu0 0.0
    %3198 = vmatpush2.msra.mxu0 0.0
    %3199 = vmatprep.subr.mxu0 0.0
    %3200 = vmatpush2.msra.mxu0 0.0
    %3201 = vmatprep.subr.mxu0 0.0
    %3202 = vmatpush2.msra.mxu0 0.0
    %3203 = vmatprep.subr.mxu0 0.0
    %3204 = vmatpush2.msra.mxu0 0.0
    %3205 = vmatprep.mubr.f32.mxu0 0.0
    %3206 = vmatmul.mubr.f32.gmra.mxu0 %v2990
    %v3207 = vpop.f32.mrf.mxu0
    %v3208 = vadd.f32 %v3139, %v3207
    %v3209 = vpop.f32.mrf.mxu0
    %3210 = vmatprep.mubr.f32.mxu0 0.0
    %3211 = vmatmul.mubr.f32.gmra.mxu0 %v2991
    %v3212 = vpop.f32.mrf.mxu0
    %v3213 = vadd.f32 %v3139, %v3212
    %v3214 = vpop.f32.mrf.mxu0
    %3215 = vmatprep.mubr.f32.mxu0 0.0
    %3216 = vmatmul.mubr.f32.gmra.mxu0 %v2992
    %v3217 = vpop.f32.mrf.mxu0
    %v3218 = vadd.f32 %v3139, %v3217
    %v3219 = vpop.f32.mrf.mxu0
    %3220 = vmatprep.mubr.f32.mxu0 0.0
    %3221 = vmatmul.mubr.f32.gmra.mxu0 %v2993
    %v3222 = vpop.f32.mrf.mxu0
    %v3223 = vadd.f32 %v3139, %v3222
    %v3224 = vpop.f32.mrf.mxu0
    %3225 = vmatprep.mubr.f32.mxu0 0.0
    %3226 = vmatmul.mubr.f32.gmra.mxu0 %v2994
    %v3227 = vpop.f32.mrf.mxu0
    %v3228 = vadd.f32 %v3139, %v3227
    %v3229 = vpop.f32.mrf.mxu0
    %3230 = vmatprep.mubr.f32.mxu0 0.0
    %3231 = vmatmul.mubr.f32.gmra.mxu0 %v2995
    %v3232 = vpop.f32.mrf.mxu0
    %v3233 = vadd.f32 %v3139, %v3232
    %v3234 = vpop.f32.mrf.mxu0
    %3235 = vmatprep.mubr.f32.mxu0 0.0
    %3236 = vmatmul.mubr.f32.gmra.mxu0 %v2996
    %v3237 = vpop.f32.mrf.mxu0
    %v3238 = vadd.f32 %v3139, %v3237
    %v3239 = vpop.f32.mrf.mxu0
    %3240 = vmatprep.mubr.f32.mxu0 0.0
    %3241 = vmatmul.mubr.f32.gmra.mxu0 %v2997
    %v3242 = vpop.f32.mrf.mxu0
    %v3243 = vadd.f32 %v3139, %v3242
    %v3244 = vpop.f32.mrf.mxu0
    %3245 = vmatprep.mubr.f32.mxu0 0.0
    %3246 = vmatmul.mubr.f32.gmra.mxu0 %v2998
    %v3247 = vpop.f32.mrf.mxu0
    %v3248 = vadd.f32 %v3139, %v3247
    %v3249 = vpop.f32.mrf.mxu0
    %3250 = vmatprep.mubr.f32.mxu0 0.0
    %3251 = vmatmul.mubr.f32.gmra.mxu0 %v2999
    %v3252 = vpop.f32.mrf.mxu0
    %v3253 = vadd.f32 %v3139, %v3252
    %v3254 = vpop.f32.mrf.mxu0
    %3255 = vmatprep.mubr.f32.mxu0 0.0
    %3256 = vmatmul.mubr.f32.gmra.mxu0 %v3000
    %v3257 = vpop.f32.mrf.mxu0
    %v3258 = vadd.f32 %v3139, %v3257
    %v3259 = vpop.f32.mrf.mxu0
    %3260 = vmatprep.mubr.f32.mxu0 0.0
    %3261 = vmatmul.mubr.f32.gmra.mxu0 %v3001
    %v3262 = vpop.f32.mrf.mxu0
    %v3263 = vadd.f32 %v3139, %v3262
    %v3264 = vpop.f32.mrf.mxu0
    %3265 = vmatprep.mubr.f32.mxu0 0.0
    %3266 = vmatmul.mubr.f32.gmra.mxu0 %v3002
    %v3267 = vpop.f32.mrf.mxu0
    %v3268 = vadd.f32 %v3139, %v3267
    %v3269 = vpop.f32.mrf.mxu0
    %3270 = vmatprep.mubr.f32.mxu0 0.0
    %3271 = vmatmul.mubr.f32.gmra.mxu0 %v3003
    %v3272 = vpop.f32.mrf.mxu0
    %v3273 = vadd.f32 %v3139, %v3272
    %v3274 = vpop.f32.mrf.mxu0
    %3275 = vmatprep.mubr.f32.mxu0 0.0
    %3276 = vmatmul.mubr.f32.gmra.mxu0 %v3004
    %v3277 = vpop.f32.mrf.mxu0
    %v3278 = vadd.f32 %v3139, %v3277
    %v3279 = vpop.f32.mrf.mxu0
    %3280 = vmatprep.mubr.f32.mxu0 0.0
    %3281 = vmatmul.mubr.f32.gmra.mxu0 %v3005
    %v3282 = vpop.f32.mrf.mxu0
    %v3283 = vadd.f32 %v3139, %v3282
    %v3284 = vpop.f32.mrf.mxu0
    %3285 = vmatprep.mubr.f32.mxu0 0.0
    %3286 = vmatmul.mubr.f32.gmra.mxu0 %v3006
    %v3287 = vpop.f32.mrf.mxu0
    %v3288 = vadd.f32 %v3139, %v3287
    %v3289 = vpop.f32.mrf.mxu0
    %3290 = vmatprep.mubr.f32.mxu0 0.0
    %3291 = vmatmul.mubr.f32.gmra.mxu0 %v3007
    %v3292 = vpop.f32.mrf.mxu0
    %v3293 = vadd.f32 %v3139, %v3292
    %v3294 = vpop.f32.mrf.mxu0
    %3295 = vmatprep.mubr.f32.mxu0 0.0
    %3296 = vmatmul.mubr.f32.gmra.mxu0 %v3008
    %v3297 = vpop.f32.mrf.mxu0
    %v3298 = vadd.f32 %v3139, %v3297
    %v3299 = vpop.f32.mrf.mxu0
    %3300 = vmatprep.mubr.f32.mxu0 0.0
    %3301 = vmatmul.mubr.f32.gmra.mxu0 %v3009
    %v3302 = vpop.f32.mrf.mxu0
    %v3303 = vadd.f32 %v3139, %v3302
    %v3304 = vpop.f32.mrf.mxu0
    %3305 = vmatprep.mubr.f32.mxu0 0.0
    %3306 = vmatmul.mubr.f32.gmra.mxu0 %v3010
    %v3307 = vpop.f32.mrf.mxu0
    %v3308 = vadd.f32 %v3139, %v3307
    %v3309 = vpop.f32.mrf.mxu0
    %3310 = vmatprep.mubr.f32.mxu0 0.0
    %3311 = vmatmul.mubr.f32.gmra.mxu0 %v3011
    %v3312 = vpop.f32.mrf.mxu0
    %v3313 = vadd.f32 %v3139, %v3312
    %v3314 = vpop.f32.mrf.mxu0
    %3315 = vmatprep.mubr.f32.mxu0 0.0
    %3316 = vmatmul.mubr.f32.gmra.mxu0 %v3012
    %v3317 = vpop.f32.mrf.mxu0
    %v3318 = vadd.f32 %v3139, %v3317
    %v3319 = vpop.f32.mrf.mxu0
    %3320 = vmatprep.mubr.f32.mxu0 0.0
    %3321 = vmatmul.mubr.f32.gmra.mxu0 %v3013
    %v3322 = vpop.f32.mrf.mxu0
    %v3323 = vadd.f32 %v3139, %v3322
    %v3324 = vpop.f32.mrf.mxu0
    %3325 = vmatprep.mubr.f32.mxu0 0.0
    %3326 = vmatmul.mubr.f32.gmra.mxu0 %v3014
    %v3327 = vpop.f32.mrf.mxu0
    %v3328 = vadd.f32 %v3139, %v3327
    %v3329 = vpop.f32.mrf.mxu0
    %3330 = vmatprep.mubr.f32.mxu0 0.0
    %3331 = vmatmul.mubr.f32.gmra.mxu0 %v3015
    %v3332 = vpop.f32.mrf.mxu0
    %v3333 = vadd.f32 %v3139, %v3332
    %v3334 = vpop.f32.mrf.mxu0
    %3335 = vmatprep.mubr.f32.mxu0 0.0
    %3336 = vmatmul.mubr.f32.gmra.mxu0 %v3016
    %v3337 = vpop.f32.mrf.mxu0
    %v3338 = vadd.f32 %v3139, %v3337
    %v3339 = vpop.f32.mrf.mxu0
    %3340 = vmatprep.mubr.f32.mxu0 0.0
    %3341 = vmatmul.mubr.f32.gmra.mxu0 %v3017
    %v3342 = vpop.f32.mrf.mxu0
    %v3343 = vadd.f32 %v3139, %v3342
    %v3344 = vpop.f32.mrf.mxu0
    %3345 = vmatprep.mubr.f32.mxu0 0.0
    %3346 = vmatmul.mubr.f32.gmra.mxu0 %v3018
    %v3347 = vpop.f32.mrf.mxu0
    %v3348 = vadd.f32 %v3139, %v3347
    %v3349 = vpop.f32.mrf.mxu0
    %3350 = vmatprep.mubr.f32.mxu0 0.0
    %3351 = vmatmul.mubr.f32.gmra.mxu0 %v3019
    %v3352 = vpop.f32.mrf.mxu0
    %v3353 = vadd.f32 %v3139, %v3352
    %v3354 = vpop.f32.mrf.mxu0
    %3355 = vmatprep.mubr.f32.mxu0 0.0
    %3356 = vmatmul.mubr.f32.gmra.mxu0 %v3020
    %v3357 = vpop.f32.mrf.mxu0
    %v3358 = vadd.f32 %v3139, %v3357
    %v3359 = vpop.f32.mrf.mxu0
    %3360 = vmatprep.mubr.f32.mxu0 0.0
    %3361 = vmatmul.mubr.f32.gmra.mxu0 %v3021
    %v3362 = vpop.f32.mrf.mxu0
    %v3363 = vadd.f32 %v3139, %v3362
    %v3364 = vpop.f32.mrf.mxu0
    %3365 = vmatprep.mubr.f32.mxu0 0.0
    %3366 = vmatmul.mubr.f32.gmra.mxu0 %v3022
    %v3367 = vpop.f32.mrf.mxu0
    %v3368 = vadd.f32 %v3139, %v3367
    %v3369 = vpop.f32.mrf.mxu0
    %3370 = vmatprep.mubr.f32.mxu0 0.0
    %3371 = vmatmul.mubr.f32.gmra.mxu0 %v3023
    %v3372 = vpop.f32.mrf.mxu0
    %v3373 = vadd.f32 %v3139, %v3372
    %v3374 = vpop.f32.mrf.mxu0
    %3375 = vmatprep.mubr.f32.mxu0 0.0
    %3376 = vmatmul.mubr.f32.gmra.mxu0 %v3024
    %v3377 = vpop.f32.mrf.mxu0
    %v3378 = vadd.f32 %v3139, %v3377
    %v3379 = vpop.f32.mrf.mxu0
    %3380 = vmatprep.mubr.f32.mxu0 0.0
    %3381 = vmatmul.mubr.f32.gmra.mxu0 %v3025
    %v3382 = vpop.f32.mrf.mxu0
    %v3383 = vadd.f32 %v3139, %v3382
    %v3384 = vpop.f32.mrf.mxu0
    %3385 = vmatprep.mubr.f32.mxu0 0.0
    %3386 = vmatmul.mubr.f32.gmra.mxu0 %v3026
    %v3387 = vpop.f32.mrf.mxu0
    %v3388 = vadd.f32 %v3139, %v3387
    %v3389 = vpop.f32.mrf.mxu0
    %3390 = vmatprep.mubr.f32.mxu0 0.0
    %3391 = vmatmul.mubr.f32.gmra.mxu0 %v3027
    %v3392 = vpop.f32.mrf.mxu0
    %v3393 = vadd.f32 %v3139, %v3392
    %v3394 = vpop.f32.mrf.mxu0
    %3395 = vmatprep.mubr.f32.mxu0 0.0
    %3396 = vmatmul.mubr.f32.gmra.mxu0 %v3028
    %v3397 = vpop.f32.mrf.mxu0
    %v3398 = vadd.f32 %v3139, %v3397
    %v3399 = vpop.f32.mrf.mxu0
    %3400 = vmatprep.mubr.f32.mxu0 0.0
    %3401 = vmatmul.mubr.f32.gmra.mxu0 %v3029
    %v3402 = vpop.f32.mrf.mxu0
    %v3403 = vadd.f32 %v3139, %v3402
    %v3404 = vpop.f32.mrf.mxu0
    %3405 = vmatprep.mubr.f32.mxu0 0.0
    %3406 = vmatmul.mubr.f32.gmra.mxu0 %v3030
    %v3407 = vpop.f32.mrf.mxu0
    %v3408 = vadd.f32 %v3139, %v3407
    %v3409 = vpop.f32.mrf.mxu0
    %3410 = vmatprep.mubr.f32.mxu0 0.0
    %3411 = vmatmul.mubr.f32.gmra.mxu0 %v3031
    %v3412 = vpop.f32.mrf.mxu0
    %v3413 = vadd.f32 %v3139, %v3412
    %v3414 = vpop.f32.mrf.mxu0
    %3415 = vmatprep.mubr.f32.mxu0 0.0
    %3416 = vmatmul.mubr.f32.gmra.mxu0 %v3032
    %v3417 = vpop.f32.mrf.mxu0
    %v3418 = vadd.f32 %v3139, %v3417
    %v3419 = vpop.f32.mrf.mxu0
    %3420 = vmatprep.mubr.f32.mxu0 0.0
    %3421 = vmatmul.mubr.f32.gmra.mxu0 %v3033
    %v3422 = vpop.f32.mrf.mxu0
    %v3423 = vadd.f32 %v3139, %v3422
    %v3424 = vpop.f32.mrf.mxu0
    %3425 = vmatprep.mubr.f32.mxu0 0.0
    %3426 = vmatmul.mubr.f32.gmra.mxu0 %v3034
    %v3427 = vpop.f32.mrf.mxu0
    %v3428 = vadd.f32 %v3139, %v3427
    %v3429 = vpop.f32.mrf.mxu0
    %3430 = vmatprep.mubr.f32.mxu0 0.0
    %3431 = vmatmul.mubr.f32.gmra.mxu0 %v3035
    %v3432 = vpop.f32.mrf.mxu0
    %v3433 = vadd.f32 %v3139, %v3432
    %v3434 = vpop.f32.mrf.mxu0
    %3435 = vmatprep.mubr.f32.mxu0 0.0
    %3436 = vmatmul.mubr.f32.gmra.mxu0 %v3036
    %v3437 = vpop.f32.mrf.mxu0
    %v3438 = vadd.f32 %v3139, %v3437
    %v3439 = vpop.f32.mrf.mxu0
    %3440 = vmatprep.mubr.f32.mxu0 0.0
    %3441 = vmatmul.mubr.f32.gmra.mxu0 %v3037
    %v3442 = vpop.f32.mrf.mxu0
    %v3443 = vadd.f32 %v3139, %v3442
    %v3444 = vpop.f32.mrf.mxu0
    %3445 = vmatprep.mubr.f32.mxu0 0.0
    %3446 = vmatmul.mubr.f32.gmra.mxu0 %v3038
    %v3447 = vpop.f32.mrf.mxu0
    %v3448 = vadd.f32 %v3139, %v3447
    %v3449 = vpop.f32.mrf.mxu0
    %3450 = vmatprep.mubr.f32.mxu0 0.0
    %3451 = vmatmul.mubr.f32.gmra.mxu0 %v3039
    %v3452 = vpop.f32.mrf.mxu0
    %v3453 = vadd.f32 %v3139, %v3452
    %v3454 = vpop.f32.mrf.mxu0
    %3455 = vmatprep.mubr.f32.mxu0 0.0
    %3456 = vmatmul.mubr.f32.gmra.mxu0 %v3040
    %v3457 = vpop.f32.mrf.mxu0
    %v3458 = vadd.f32 %v3139, %v3457
    %v3459 = vpop.f32.mrf.mxu0
    %3460 = vmatprep.mubr.f32.mxu0 0.0
    %3461 = vmatmul.mubr.f32.gmra.mxu0 %v3041
    %v3462 = vpop.f32.mrf.mxu0
    %v3463 = vadd.f32 %v3139, %v3462
    %v3464 = vpop.f32.mrf.mxu0
    %3465 = vmatprep.mubr.f32.mxu0 0.0
    %3466 = vmatmul.mubr.f32.gmra.mxu0 %v3042
    %v3467 = vpop.f32.mrf.mxu0
    %v3468 = vadd.f32 %v3139, %v3467
    %v3469 = vpop.f32.mrf.mxu0
    %3470 = vmatprep.mubr.f32.mxu0 0.0
    %3471 = vmatmul.mubr.f32.gmra.mxu0 %v3043
    %v3472 = vpop.f32.mrf.mxu0
    %v3473 = vadd.f32 %v3139, %v3472
    %v3474 = vpop.f32.mrf.mxu0
    %3475 = vmatprep.mubr.f32.mxu0 0.0
    %3476 = vmatmul.mubr.f32.gmra.mxu0 %v3044
    %v3477 = vpop.f32.mrf.mxu0
    %v3478 = vadd.f32 %v3139, %v3477
    %v3479 = vpop.f32.mrf.mxu0
    %3480 = vmatprep.mubr.f32.mxu0 0.0
    %3481 = vmatmul.mubr.f32.gmra.mxu0 %v3045
    %v3482 = vpop.f32.mrf.mxu0
    %v3483 = vadd.f32 %v3139, %v3482
    %v3484 = vpop.f32.mrf.mxu0
    %3485 = vmatprep.mubr.f32.mxu0 0.0
    %3486 = vmatmul.mubr.f32.gmra.mxu0 %v3046
    %v3487 = vpop.f32.mrf.mxu0
    %v3488 = vadd.f32 %v3139, %v3487
    %v3489 = vpop.f32.mrf.mxu0
    %3490 = vmatprep.mubr.f32.mxu0 0.0
    %3491 = vmatmul.mubr.f32.gmra.mxu0 %v3047
    %v3492 = vpop.f32.mrf.mxu0
    %v3493 = vadd.f32 %v3139, %v3492
    %v3494 = vpop.f32.mrf.mxu0
    %3495 = vmatprep.mubr.f32.mxu0 0.0
    %3496 = vmatmul.mubr.f32.gmra.mxu0 %v3048
    %v3497 = vpop.f32.mrf.mxu0
    %v3498 = vadd.f32 %v3139, %v3497
    %v3499 = vpop.f32.mrf.mxu0
    %3500 = vmatprep.mubr.f32.mxu0 0.0
    %3501 = vmatmul.mubr.f32.gmra.mxu0 %v3049
    %v3502 = vpop.f32.mrf.mxu0
    %v3503 = vadd.f32 %v3139, %v3502
    %v3504 = vpop.f32.mrf.mxu0
    %3505 = vmatprep.mubr.f32.mxu0 0.0
    %3506 = vmatmul.mubr.f32.gmra.mxu0 %v3050
    %v3507 = vpop.f32.mrf.mxu0
    %v3508 = vadd.f32 %v3139, %v3507
    %v3509 = vpop.f32.mrf.mxu0
    %3510 = vmatprep.mubr.f32.mxu0 0.0
    %3511 = vmatmul.mubr.f32.gmra.mxu0 %v3051
    %v3512 = vpop.f32.mrf.mxu0
    %v3513 = vadd.f32 %v3139, %v3512
    %v3514 = vpop.f32.mrf.mxu0
    %3515 = vmatprep.mubr.f32.mxu0 0.0
    %3516 = vmatmul.mubr.f32.gmra.mxu0 %v3052
    %v3517 = vpop.f32.mrf.mxu0
    %v3518 = vadd.f32 %v3139, %v3517
    %v3519 = vpop.f32.mrf.mxu0
    %3520 = vmatprep.mubr.f32.mxu0 0.0
    %3521 = vmatmul.mubr.f32.gmra.mxu0 %v3053
    %v3522 = vpop.f32.mrf.mxu0
    %v3523 = vadd.f32 %v3139, %v3522
    %v3524 = vpop.f32.mrf.mxu0
    %3525 = vmatprep.mubr.f32.mxu0 0.0
    %3526 = vmatmul.mubr.f32.gmra.mxu0 %v3054
    %v3527 = vpop.f32.mrf.mxu0
    %v3528 = vadd.f32 %v3139, %v3527
    %v3529 = vpop.f32.mrf.mxu0
    %3530 = vmatprep.mubr.f32.mxu0 0.0
    %3531 = vmatmul.mubr.f32.gmra.mxu0 %v3055
    %v3532 = vpop.f32.mrf.mxu0
    %v3533 = vadd.f32 %v3139, %v3532
    %v3534 = vpop.f32.mrf.mxu0
    %3535 = vmatprep.mubr.f32.mxu0 0.0
    %3536 = vmatmul.mubr.f32.gmra.mxu0 %v3056
    %v3537 = vpop.f32.mrf.mxu0
    %v3538 = vadd.f32 %v3139, %v3537
    %v3539 = vpop.f32.mrf.mxu0
    %3540 = vmatprep.mubr.f32.mxu0 0.0
    %3541 = vmatmul.mubr.f32.gmra.mxu0 %v3057
    %v3542 = vpop.f32.mrf.mxu0
    %v3543 = vadd.f32 %v3139, %v3542
    %v3544 = vpop.f32.mrf.mxu0
    %3545 = vmatprep.mubr.f32.mxu0 0.0
    %3546 = vmatmul.mubr.f32.gmra.mxu0 %v3058
    %v3547 = vpop.f32.mrf.mxu0
    %v3548 = vadd.f32 %v3139, %v3547
    %v3549 = vpop.f32.mrf.mxu0
    %3550 = vmatprep.mubr.f32.mxu0 0.0
    %3551 = vmatmul.mubr.f32.gmra.mxu0 %v3059
    %v3552 = vpop.f32.mrf.mxu0
    %v3553 = vadd.f32 %v3139, %v3552
    %v3554 = vpop.f32.mrf.mxu0
    %3555 = vmatprep.mubr.f32.mxu0 0.0
    %3556 = vmatmul.mubr.f32.gmra.mxu0 %v3060
    %v3557 = vpop.f32.mrf.mxu0
    %v3558 = vadd.f32 %v3139, %v3557
    %v3559 = vpop.f32.mrf.mxu0
    %3560 = vmatprep.mubr.f32.mxu0 0.0
    %3561 = vmatmul.mubr.f32.gmra.mxu0 %v3061
    %v3562 = vpop.f32.mrf.mxu0
    %v3563 = vadd.f32 %v3139, %v3562
    %v3564 = vpop.f32.mrf.mxu0
    %3565 = vmatprep.mubr.f32.mxu0 0.0
    %3566 = vmatmul.mubr.f32.gmra.mxu0 %v3062
    %v3567 = vpop.f32.mrf.mxu0
    %v3568 = vadd.f32 %v3139, %v3567
    %v3569 = vpop.f32.mrf.mxu0
    %3570 = vmatprep.mubr.f32.mxu0 0.0
    %3571 = vmatmul.mubr.f32.gmra.mxu0 %v3063
    %v3572 = vpop.f32.mrf.mxu0
    %v3573 = vadd.f32 %v3139, %v3572
    %v3574 = vpop.f32.mrf.mxu0
    %3575 = vmatprep.mubr.f32.mxu0 0.0
    %3576 = vmatmul.mubr.f32.gmra.mxu0 %v3064
    %v3577 = vpop.f32.mrf.mxu0
    %v3578 = vadd.f32 %v3139, %v3577
    %v3579 = vpop.f32.mrf.mxu0
    %3580 = vmatprep.mubr.f32.mxu0 0.0
    %3581 = vmatmul.mubr.f32.gmra.mxu0 %v3065
    %v3582 = vpop.f32.mrf.mxu0
    %v3583 = vadd.f32 %v3139, %v3582
    %v3584 = vpop.f32.mrf.mxu0
    %3585 = vmatprep.mubr.f32.mxu0 0.0
    %3586 = vmatmul.mubr.f32.gmra.mxu0 %v3066
    %v3587 = vpop.f32.mrf.mxu0
    %v3588 = vadd.f32 %v3139, %v3587
    %v3589 = vpop.f32.mrf.mxu0
    %3590 = vmatprep.mubr.f32.mxu0 0.0
    %3591 = vmatmul.mubr.f32.gmra.mxu0 %v3067
    %v3592 = vpop.f32.mrf.mxu0
    %v3593 = vadd.f32 %v3139, %v3592
    %v3594 = vpop.f32.mrf.mxu0
    %3595 = vmatprep.mubr.f32.mxu0 0.0
    %3596 = vmatmul.mubr.f32.gmra.mxu0 %v3068
    %v3597 = vpop.f32.mrf.mxu0
    %v3598 = vadd.f32 %v3139, %v3597
    %v3599 = vpop.f32.mrf.mxu0
    %3600 = vmatprep.mubr.f32.mxu0 0.0
    %3601 = vmatmul.mubr.f32.gmra.mxu0 %v3069
    %v3602 = vpop.f32.mrf.mxu0
    %v3603 = vadd.f32 %v3139, %v3602
    %v3604 = vpop.f32.mrf.mxu0
    %3605 = vmatprep.mubr.f32.mxu0 0.0
    %3606 = vmatmul.mubr.f32.gmra.mxu0 %v3070
    %v3607 = vpop.f32.mrf.mxu0
    %v3608 = vadd.f32 %v3139, %v3607
    %v3609 = vpop.f32.mrf.mxu0
    %3610 = vmatprep.mubr.f32.mxu0 0.0
    %3611 = vmatmul.mubr.f32.gmra.mxu0 %v3071
    %v3612 = vpop.f32.mrf.mxu0
    %v3613 = vadd.f32 %v3139, %v3612
    %v3614 = vpop.f32.mrf.mxu0
    %3615 = vmatprep.mubr.f32.mxu0 0.0
    %3616 = vmatmul.mubr.f32.gmra.mxu0 %v3072
    %v3617 = vpop.f32.mrf.mxu0
    %v3618 = vadd.f32 %v3139, %v3617
    %v3619 = vpop.f32.mrf.mxu0
    %3620 = vmatprep.mubr.f32.mxu0 0.0
    %3621 = vmatmul.mubr.f32.gmra.mxu0 %v3073
    %v3622 = vpop.f32.mrf.mxu0
    %v3623 = vadd.f32 %v3139, %v3622
    %v3624 = vpop.f32.mrf.mxu0
    %3625 = vmatprep.mubr.f32.mxu0 0.0
    %3626 = vmatmul.mubr.f32.gmra.mxu0 %v3074
    %v3627 = vpop.f32.mrf.mxu0
    %v3628 = vadd.f32 %v3139, %v3627
    %v3629 = vpop.f32.mrf.mxu0
    %3630 = vmatprep.mubr.f32.mxu0 0.0
    %3631 = vmatmul.mubr.f32.gmra.mxu0 %v3075
    %v3632 = vpop.f32.mrf.mxu0
    %v3633 = vadd.f32 %v3139, %v3632
    %v3634 = vpop.f32.mrf.mxu0
    %3635 = vmatprep.mubr.f32.mxu0 0.0
    %3636 = vmatmul.mubr.f32.gmra.mxu0 %v3076
    %v3637 = vpop.f32.mrf.mxu0
    %v3638 = vadd.f32 %v3139, %v3637
    %v3639 = vpop.f32.mrf.mxu0
    %3640 = vmatprep.mubr.f32.mxu0 0.0
    %3641 = vmatmul.mubr.f32.gmra.mxu0 %v3077
    %v3642 = vpop.f32.mrf.mxu0
    %v3643 = vadd.f32 %v3139, %v3642
    %v3644 = vpop.f32.mrf.mxu0
    %3645 = vmatprep.mubr.f32.mxu0 0.0
    %3646 = vmatmul.mubr.f32.gmra.mxu0 %v3078
    %v3647 = vpop.f32.mrf.mxu0
    %v3648 = vadd.f32 %v3139, %v3647
    %v3649 = vpop.f32.mrf.mxu0
    %3650 = vmatprep.mubr.f32.mxu0 0.0
    %3651 = vmatmul.mubr.f32.gmra.mxu0 %v3079
    %v3652 = vpop.f32.mrf.mxu0
    %v3653 = vadd.f32 %v3139, %v3652
    %v3654 = vpop.f32.mrf.mxu0
    %3655 = vmatprep.mubr.f32.mxu0 0.0
    %3656 = vmatmul.mubr.f32.gmra.mxu0 %v3080
    %v3657 = vpop.f32.mrf.mxu0
    %v3658 = vadd.f32 %v3139, %v3657
    %v3659 = vpop.f32.mrf.mxu0
    %3660 = vmatprep.mubr.f32.mxu0 0.0
    %3661 = vmatmul.mubr.f32.gmra.mxu0 %v3081
    %v3662 = vpop.f32.mrf.mxu0
    %v3663 = vadd.f32 %v3139, %v3662
    %v3664 = vpop.f32.mrf.mxu0
    %3665 = vmatprep.mubr.f32.mxu0 0.0
    %3666 = vmatmul.mubr.f32.gmra.mxu0 %v3082
    %v3667 = vpop.f32.mrf.mxu0
    %v3668 = vadd.f32 %v3139, %v3667
    %v3669 = vpop.f32.mrf.mxu0
    %3670 = vmatprep.mubr.f32.mxu0 0.0
    %3671 = vmatmul.mubr.f32.gmra.mxu0 %v3083
    %v3672 = vpop.f32.mrf.mxu0
    %v3673 = vadd.f32 %v3139, %v3672
    %v3674 = vpop.f32.mrf.mxu0
    %3675 = vmatprep.mubr.f32.mxu0 0.0
    %3676 = vmatmul.mubr.f32.gmra.mxu0 %v3084
    %v3677 = vpop.f32.mrf.mxu0
    %v3678 = vadd.f32 %v3139, %v3677
    %v3679 = vpop.f32.mrf.mxu0
    %3680 = vmatprep.mubr.f32.mxu0 0.0
    %3681 = vmatmul.mubr.f32.gmra.mxu0 %v3085
    %v3682 = vpop.f32.mrf.mxu0
    %v3683 = vadd.f32 %v3139, %v3682
    %v3684 = vpop.f32.mrf.mxu0
    %3685 = vmatprep.mubr.f32.mxu0 0.0
    %3686 = vmatmul.mubr.f32.gmra.mxu0 %v3086
    %v3687 = vpop.f32.mrf.mxu0
    %v3688 = vadd.f32 %v3139, %v3687
    %v3689 = vpop.f32.mrf.mxu0
    %3690 = vmatprep.mubr.f32.mxu0 0.0
    %3691 = vmatmul.mubr.f32.gmra.mxu0 %v3087
    %v3692 = vpop.f32.mrf.mxu0
    %v3693 = vadd.f32 %v3139, %v3692
    %v3694 = vpop.f32.mrf.mxu0
    %3695 = vmatprep.mubr.f32.mxu0 0.0
    %3696 = vmatmul.mubr.f32.gmra.mxu0 %v3088
    %v3697 = vpop.f32.mrf.mxu0
    %v3698 = vadd.f32 %v3139, %v3697
    %v3699 = vpop.f32.mrf.mxu0
    %3700 = vmatprep.mubr.f32.mxu0 0.0
    %3701 = vmatmul.mubr.f32.gmra.mxu0 %v3089
    %v3702 = vpop.f32.mrf.mxu0
    %v3703 = vadd.f32 %v3139, %v3702
    %v3704 = vpop.f32.mrf.mxu0
    %3705 = vmatprep.mubr.f32.mxu0 0.0
    %3706 = vmatmul.mubr.f32.gmra.mxu0 %v3090
    %v3707 = vpop.f32.mrf.mxu0
    %v3708 = vadd.f32 %v3139, %v3707
    %v3709 = vpop.f32.mrf.mxu0
    %3710 = vmatprep.mubr.f32.mxu0 0.0
    %3711 = vmatmul.mubr.f32.gmra.mxu0 %v3091
    %v3712 = vpop.f32.mrf.mxu0
    %v3713 = vadd.f32 %v3139, %v3712
    %v3714 = vpop.f32.mrf.mxu0
    %3715 = vmatprep.mubr.f32.mxu0 0.0
    %3716 = vmatmul.mubr.f32.gmra.mxu0 %v3092
    %v3717 = vpop.f32.mrf.mxu0
    %v3718 = vadd.f32 %v3139, %v3717
    %v3719 = vpop.f32.mrf.mxu0
    %3720 = vmatprep.mubr.f32.mxu0 0.0
    %3721 = vmatmul.mubr.f32.gmra.mxu0 %v3093
    %v3722 = vpop.f32.mrf.mxu0
    %v3723 = vadd.f32 %v3139, %v3722
    %v3724 = vpop.f32.mrf.mxu0
    %3725 = vmatprep.mubr.f32.mxu0 0.0
    %3726 = vmatmul.mubr.f32.gmra.mxu0 %v3094
    %v3727 = vpop.f32.mrf.mxu0
    %v3728 = vadd.f32 %v3139, %v3727
    %v3729 = vpop.f32.mrf.mxu0
    %3730 = vmatprep.mubr.f32.mxu0 0.0
    %3731 = vmatmul.mubr.f32.gmra.mxu0 %v3095
    %v3732 = vpop.f32.mrf.mxu0
    %v3733 = vadd.f32 %v3139, %v3732
    %v3734 = vpop.f32.mrf.mxu0
    %3735 = vmatprep.mubr.f32.mxu0 0.0
    %3736 = vmatmul.mubr.f32.gmra.mxu0 %v3096
    %v3737 = vpop.f32.mrf.mxu0
    %v3738 = vadd.f32 %v3139, %v3737
    %v3739 = vpop.f32.mrf.mxu0
    %3740 = vmatprep.mubr.f32.mxu0 0.0
    %3741 = vmatmul.mubr.f32.gmra.mxu0 %v3097
    %v3742 = vpop.f32.mrf.mxu0
    %v3743 = vadd.f32 %v3139, %v3742
    %v3744 = vpop.f32.mrf.mxu0
    %3745 = vmatprep.mubr.f32.mxu0 0.0
    %3746 = vmatmul.mubr.f32.gmra.mxu0 %v3098
    %v3747 = vpop.f32.mrf.mxu0
    %v3748 = vadd.f32 %v3139, %v3747
    %v3749 = vpop.f32.mrf.mxu0
    %3750 = vmatprep.mubr.f32.mxu0 0.0
    %3751 = vmatmul.mubr.f32.gmra.mxu0 %v3099
    %v3752 = vpop.f32.mrf.mxu0
    %v3753 = vadd.f32 %v3139, %v3752
    %v3754 = vpop.f32.mrf.mxu0
    %3755 = vmatprep.mubr.f32.mxu0 0.0
    %3756 = vmatmul.mubr.f32.gmra.mxu0 %v3100
    %v3757 = vpop.f32.mrf.mxu0
    %v3758 = vadd.f32 %v3139, %v3757
    %v3759 = vpop.f32.mrf.mxu0
    %3760 = vmatprep.mubr.f32.mxu0 0.0
    %3761 = vmatmul.mubr.f32.gmra.mxu0 %v3101
    %v3762 = vpop.f32.mrf.mxu0
    %v3763 = vadd.f32 %v3139, %v3762
    %v3764 = vpop.f32.mrf.mxu0
    %3765 = vmatprep.mubr.f32.mxu0 0.0
    %3766 = vmatmul.mubr.f32.gmra.mxu0 %v3102
    %v3767 = vpop.f32.mrf.mxu0
    %v3768 = vadd.f32 %v3139, %v3767
    %v3769 = vpop.f32.mrf.mxu0
    %3770 = vmatprep.mubr.f32.mxu0 0.0
    %3771 = vmatmul.mubr.f32.gmra.mxu0 %v3103
    %v3772 = vpop.f32.mrf.mxu0
    %v3773 = vadd.f32 %v3139, %v3772
    %v3774 = vpop.f32.mrf.mxu0
    %3775 = vmatprep.mubr.f32.mxu0 0.0
    %3776 = vmatmul.mubr.f32.gmra.mxu0 %v3104
    %v3777 = vpop.f32.mrf.mxu0
    %v3778 = vadd.f32 %v3139, %v3777
    %v3779 = vpop.f32.mrf.mxu0
    %3780 = vmatprep.mubr.f32.mxu0 0.0
    %3781 = vmatmul.mubr.f32.gmra.mxu0 %v3105
    %v3782 = vpop.f32.mrf.mxu0
    %v3783 = vadd.f32 %v3139, %v3782
    %v3784 = vpop.f32.mrf.mxu0
    %3785 = vmatprep.mubr.f32.mxu0 0.0
    %3786 = vmatmul.mubr.f32.gmra.mxu0 %v3106
    %v3787 = vpop.f32.mrf.mxu0
    %v3788 = vadd.f32 %v3139, %v3787
    %v3789 = vpop.f32.mrf.mxu0
    %3790 = vmatprep.mubr.f32.mxu0 0.0
    %3791 = vmatmul.mubr.f32.gmra.mxu0 %v3107
    %v3792 = vpop.f32.mrf.mxu0
    %v3793 = vadd.f32 %v3139, %v3792
    %v3794 = vpop.f32.mrf.mxu0
    %3795 = vmatprep.mubr.f32.mxu0 0.0
    %3796 = vmatmul.mubr.f32.gmra.mxu0 %v3108
    %v3797 = vpop.f32.mrf.mxu0
    %v3798 = vadd.f32 %v3139, %v3797
    %v3799 = vpop.f32.mrf.mxu0
    %3800 = vmatprep.mubr.f32.mxu0 0.0
    %3801 = vmatmul.mubr.f32.gmra.mxu0 %v3109
    %v3802 = vpop.f32.mrf.mxu0
    %v3803 = vadd.f32 %v3139, %v3802
    %v3804 = vpop.f32.mrf.mxu0
    %3805 = vmatprep.mubr.f32.mxu0 0.0
    %3806 = vmatmul.mubr.f32.gmra.mxu0 %v3110
    %v3807 = vpop.f32.mrf.mxu0
    %v3808 = vadd.f32 %v3139, %v3807
    %v3809 = vpop.f32.mrf.mxu0
    %3810 = vmatprep.mubr.f32.mxu0 0.0
    %3811 = vmatmul.mubr.f32.gmra.mxu0 %v3111
    %v3812 = vpop.f32.mrf.mxu0
    %v3813 = vadd.f32 %v3139, %v3812
    %v3814 = vpop.f32.mrf.mxu0
    %3815 = vmatprep.mubr.f32.mxu0 0.0
    %3816 = vmatmul.mubr.f32.gmra.mxu0 %v3112
    %v3817 = vpop.f32.mrf.mxu0
    %v3818 = vadd.f32 %v3139, %v3817
    %v3819 = vpop.f32.mrf.mxu0
    %3820 = vmatprep.mubr.f32.mxu0 0.0
    %3821 = vmatmul.mubr.f32.gmra.mxu0 %v3113
    %v3822 = vpop.f32.mrf.mxu0
    %v3823 = vadd.f32 %v3139, %v3822
    %v3824 = vpop.f32.mrf.mxu0
    %3825 = vmatprep.mubr.f32.mxu0 0.0
    %3826 = vmatmul.mubr.f32.gmra.mxu0 %v3114
    %v3827 = vpop.f32.mrf.mxu0
    %v3828 = vadd.f32 %v3139, %v3827
    %v3829 = vpop.f32.mrf.mxu0
    %3830 = vmatprep.mubr.f32.mxu0 0.0
    %3831 = vmatmul.mubr.f32.gmra.mxu0 %v3115
    %v3832 = vpop.f32.mrf.mxu0
    %v3833 = vadd.f32 %v3139, %v3832
    %v3834 = vpop.f32.mrf.mxu0
    %3835 = vmatprep.mubr.f32.mxu0 0.0
    %3836 = vmatmul.mubr.f32.gmra.mxu0 %v3116
    %v3837 = vpop.f32.mrf.mxu0
    %v3838 = vadd.f32 %v3139, %v3837
    %v3839 = vpop.f32.mrf.mxu0
    %3840 = vmatprep.mubr.f32.mxu0 0.0
    %3841 = vmatmul.mubr.f32.gmra.mxu0 %v3117
    %v3842 = vpop.f32.mrf.mxu0
    %v3843 = vadd.f32 %v3139, %v3842
    %v3844 = vpop.f32.mrf.mxu0
    %3845 = vdwg.mxu0
    %v3846 = vmax.f32 %v3208, 0.0
    %v3847 = vmax.f32 %v3213, 0.0
    %v3848 = vmax.f32 %v3218, 0.0
    %v3849 = vmax.f32 %v3223, 0.0
    %v3850 = vmax.f32 %v3228, 0.0
    %v3851 = vmax.f32 %v3233, 0.0
    %v3852 = vmax.f32 %v3238, 0.0
    %v3853 = vmax.f32 %v3243, 0.0
    %v3854 = vmax.f32 %v3248, 0.0
    %v3855 = vmax.f32 %v3253, 0.0
    %v3856 = vmax.f32 %v3258, 0.0
    %v3857 = vmax.f32 %v3263, 0.0
    %v3858 = vmax.f32 %v3268, 0.0
    %v3859 = vmax.f32 %v3273, 0.0
    %v3860 = vmax.f32 %v3278, 0.0
    %v3861 = vmax.f32 %v3283, 0.0
    %v3862 = vmax.f32 %v3288, 0.0
    %v3863 = vmax.f32 %v3293, 0.0
    %v3864 = vmax.f32 %v3298, 0.0
    %v3865 = vmax.f32 %v3303, 0.0
    %v3866 = vmax.f32 %v3308, 0.0
    %v3867 = vmax.f32 %v3313, 0.0
    %v3868 = vmax.f32 %v3318, 0.0
    %v3869 = vmax.f32 %v3323, 0.0
    %v3870 = vmax.f32 %v3328, 0.0
    %v3871 = vmax.f32 %v3333, 0.0
    %v3872 = vmax.f32 %v3338, 0.0
    %v3873 = vmax.f32 %v3343, 0.0
    %v3874 = vmax.f32 %v3348, 0.0
    %v3875 = vmax.f32 %v3353, 0.0
    %v3876 = vmax.f32 %v3358, 0.0
    %v3877 = vmax.f32 %v3363, 0.0
    %v3878 = vmax.f32 %v3368, 0.0
    %v3879 = vmax.f32 %v3373, 0.0
    %v3880 = vmax.f32 %v3378, 0.0
    %v3881 = vmax.f32 %v3383, 0.0
    %v3882 = vmax.f32 %v3388, 0.0
    %v3883 = vmax.f32 %v3393, 0.0
    %v3884 = vmax.f32 %v3398, 0.0
    %v3885 = vmax.f32 %v3403, 0.0
    %v3886 = vmax.f32 %v3408, 0.0
    %v3887 = vmax.f32 %v3413, 0.0
    %v3888 = vmax.f32 %v3418, 0.0
    %v3889 = vmax.f32 %v3423, 0.0
    %v3890 = vmax.f32 %v3428, 0.0
    %v3891 = vmax.f32 %v3433, 0.0
    %v3892 = vmax.f32 %v3438, 0.0
    %v3893 = vmax.f32 %v3443, 0.0
    %v3894 = vmax.f32 %v3448, 0.0
    %v3895 = vmax.f32 %v3453, 0.0
    %v3896 = vmax.f32 %v3458, 0.0
    %v3897 = vmax.f32 %v3463, 0.0
    %v3898 = vmax.f32 %v3468, 0.0
    %v3899 = vmax.f32 %v3473, 0.0
    %v3900 = vmax.f32 %v3478, 0.0
    %v3901 = vmax.f32 %v3483, 0.0
    %v3902 = vmax.f32 %v3488, 0.0
    %v3903 = vmax.f32 %v3493, 0.0
    %v3904 = vmax.f32 %v3498, 0.0
    %v3905 = vmax.f32 %v3503, 0.0
    %v3906 = vmax.f32 %v3508, 0.0
    %v3907 = vmax.f32 %v3513, 0.0
    %v3908 = vmax.f32 %v3518, 0.0
    %v3909 = vmax.f32 %v3523, 0.0
    %v3910 = vmax.f32 %v3528, 0.0
    %v3911 = vmax.f32 %v3533, 0.0
    %v3912 = vmax.f32 %v3538, 0.0
    %v3913 = vmax.f32 %v3543, 0.0
    %v3914 = vmax.f32 %v3548, 0.0
    %v3915 = vmax.f32 %v3553, 0.0
    %v3916 = vmax.f32 %v3558, 0.0
    %v3917 = vmax.f32 %v3563, 0.0
    %v3918 = vmax.f32 %v3568, 0.0
    %v3919 = vmax.f32 %v3573, 0.0
    %v3920 = vmax.f32 %v3578, 0.0
    %v3921 = vmax.f32 %v3583, 0.0
    %v3922 = vmax.f32 %v3588, 0.0
    %v3923 = vmax.f32 %v3593, 0.0
    %v3924 = vmax.f32 %v3598, 0.0
    %v3925 = vmax.f32 %v3603, 0.0
    %v3926 = vmax.f32 %v3608, 0.0
    %v3927 = vmax.f32 %v3613, 0.0
    %v3928 = vmax.f32 %v3618, 0.0
    %v3929 = vmax.f32 %v3623, 0.0
    %v3930 = vmax.f32 %v3628, 0.0
    %v3931 = vmax.f32 %v3633, 0.0
    %v3932 = vmax.f32 %v3638, 0.0
    %v3933 = vmax.f32 %v3643, 0.0
    %v3934 = vmax.f32 %v3648, 0.0
    %v3935 = vmax.f32 %v3653, 0.0
    %v3936 = vmax.f32 %v3658, 0.0
    %v3937 = vmax.f32 %v3663, 0.0
    %v3938 = vmax.f32 %v3668, 0.0
    %v3939 = vmax.f32 %v3673, 0.0
    %v3940 = vmax.f32 %v3678, 0.0
    %v3941 = vmax.f32 %v3683, 0.0
    %v3942 = vmax.f32 %v3688, 0.0
    %v3943 = vmax.f32 %v3693, 0.0
    %v3944 = vmax.f32 %v3698, 0.0
    %v3945 = vmax.f32 %v3703, 0.0
    %v3946 = vmax.f32 %v3708, 0.0
    %v3947 = vmax.f32 %v3713, 0.0
    %v3948 = vmax.f32 %v3718, 0.0
    %v3949 = vmax.f32 %v3723, 0.0
    %v3950 = vmax.f32 %v3728, 0.0
    %v3951 = vmax.f32 %v3733, 0.0
    %v3952 = vmax.f32 %v3738, 0.0
    %v3953 = vmax.f32 %v3743, 0.0
    %v3954 = vmax.f32 %v3748, 0.0
    %v3955 = vmax.f32 %v3753, 0.0
    %v3956 = vmax.f32 %v3758, 0.0
    %v3957 = vmax.f32 %v3763, 0.0
    %v3958 = vmax.f32 %v3768, 0.0
    %v3959 = vmax.f32 %v3773, 0.0
    %v3960 = vmax.f32 %v3778, 0.0
    %v3961 = vmax.f32 %v3783, 0.0
    %v3962 = vmax.f32 %v3788, 0.0
    %v3963 = vmax.f32 %v3793, 0.0
    %v3964 = vmax.f32 %v3798, 0.0
    %v3965 = vmax.f32 %v3803, 0.0
    %v3966 = vmax.f32 %v3808, 0.0
    %v3967 = vmax.f32 %v3813, 0.0
    %v3968 = vmax.f32 %v3818, 0.0
    %v3969 = vmax.f32 %v3823, 0.0
    %v3970 = vmax.f32 %v3828, 0.0
    %v3971 = vmax.f32 %v3833, 0.0
    %v3972 = vmax.f32 %v3838, 0.0
    %v3973 = vmax.f32 %v3843, 0.0
    %v3974 = vld [vmem:[%s9] sm:$0xff]
    %v3975 = vld [vmem:[%s9 + $0x8] sm:$0xff]
    %v3976 = vld [vmem:[%s9 + $0x10] sm:$0xff]
    %v3977 = vld [vmem:[%s9 + $0x18] sm:$0xff]
    %v3978 = vld [vmem:[%s9 + $0x20] sm:$0xff]
    %v3979 = vld [vmem:[%s9 + $0x28] sm:$0xff]
    %v3980 = vld [vmem:[%s9 + $0x30] sm:$0xff]
    %v3981 = vld [vmem:[%s9 + $0x38] sm:$0xff]
    %v3982 = vld [vmem:[%s9 + $0x40] sm:$0xff]
    %v3983 = vld [vmem:[%s9 + $0x48] sm:$0xff]
    %v3984 = vld [vmem:[%s9 + $0x50] sm:$0xff]
    %v3985 = vld [vmem:[%s9 + $0x58] sm:$0xff]
    %v3986 = vld [vmem:[%s9 + $0x60] sm:$0xff]
    %v3987 = vld [vmem:[%s9 + $0x68] sm:$0xff]
    %v3988 = vld [vmem:[%s9 + $0x70] sm:$0xff]
    %v3989 = vld [vmem:[%s9 + $0x78] sm:$0xff]
    %v3990 = vld [vmem:[%s10] sm:$0x1]
    %v3992 = vlaneseq
    %v3993 = vshrl.u32 %v3992, 7
    %v3994 = vsub.s32 0, %v3993
    %v3995 = vrot.slane %v3990, %v3994
    %3997 = vmatprep.subr.mxu0 0.0
    %3998 = vmatpush1.msra.mxu0 %v3989
    %3999 = vmatprep.subr.mxu0 0.0
    %4000 = vmatpush1.msra.mxu0 %v3988
    %4001 = vmatprep.subr.mxu0 0.0
    %4002 = vmatpush1.msra.mxu0 %v3987
    %4003 = vmatprep.subr.mxu0 0.0
    %4004 = vmatpush1.msra.mxu0 %v3986
    %4005 = vmatprep.subr.mxu0 0.0
    %4006 = vmatpush1.msra.mxu0 %v3985
    %4007 = vmatprep.subr.mxu0 0.0
    %4008 = vmatpush1.msra.mxu0 %v3984
    %4009 = vmatprep.subr.mxu0 0.0
    %4010 = vmatpush1.msra.mxu0 %v3983
    %4011 = vmatprep.subr.mxu0 0.0
    %4012 = vmatpush1.msra.mxu0 %v3982
    %4013 = vmatprep.subr.mxu0 0.0
    %4014 = vmatpush1.msra.mxu0 %v3981
    %4015 = vmatprep.subr.mxu0 0.0
    %4016 = vmatpush1.msra.mxu0 %v3980
    %4017 = vmatprep.subr.mxu0 0.0
    %4018 = vmatpush1.msra.mxu0 %v3979
    %4019 = vmatprep.subr.mxu0 0.0
    %4020 = vmatpush1.msra.mxu0 %v3978
    %4021 = vmatprep.subr.mxu0 0.0
    %4022 = vmatpush1.msra.mxu0 %v3977
    %4023 = vmatprep.subr.mxu0 0.0
    %4024 = vmatpush1.msra.mxu0 %v3976
    %4025 = vmatprep.subr.mxu0 0.0
    %4026 = vmatpush1.msra.mxu0 %v3975
    %4027 = vmatprep.subr.mxu0 0.0
    %4028 = vmatpush1.msra.mxu0 %v3974
    %4029 = vmatprep.subr.mxu0 0.0
    %4030 = vmatpush2.msra.mxu0 0.0
    %4031 = vmatprep.subr.mxu0 0.0
    %4032 = vmatpush2.msra.mxu0 0.0
    %4033 = vmatprep.subr.mxu0 0.0
    %4034 = vmatpush2.msra.mxu0 0.0
    %4035 = vmatprep.subr.mxu0 0.0
    %4036 = vmatpush2.msra.mxu0 0.0
    %4037 = vmatprep.subr.mxu0 0.0
    %4038 = vmatpush2.msra.mxu0 0.0
    %4039 = vmatprep.subr.mxu0 0.0
    %4040 = vmatpush2.msra.mxu0 0.0
    %4041 = vmatprep.subr.mxu0 0.0
    %4042 = vmatpush2.msra.mxu0 0.0
    %4043 = vmatprep.subr.mxu0 0.0
    %4044 = vmatpush2.msra.mxu0 0.0
    %4045 = vmatprep.subr.mxu0 0.0
    %4046 = vmatpush2.msra.mxu0 0.0
    %4047 = vmatprep.subr.mxu0 0.0
    %4048 = vmatpush2.msra.mxu0 0.0
    %4049 = vmatprep.subr.mxu0 0.0
    %4050 = vmatpush2.msra.mxu0 0.0
    %4051 = vmatprep.subr.mxu0 0.0
    %4052 = vmatpush2.msra.mxu0 0.0
    %4053 = vmatprep.subr.mxu0 0.0
    %4054 = vmatpush2.msra.mxu0 0.0
    %4055 = vmatprep.subr.mxu0 0.0
    %4056 = vmatpush2.msra.mxu0 0.0
    %4057 = vmatprep.subr.mxu0 0.0
    %4058 = vmatpush2.msra.mxu0 0.0
    %4059 = vmatprep.subr.mxu0 0.0
    %4060 = vmatpush2.msra.mxu0 0.0
    %4061 = vmatprep.mubr.f32.mxu0 0.0
    %4062 = vmatmul.mubr.f32.gmra.mxu0 %v3846
    %v4063 = vpop.f32.mrf.mxu0
    %v4064 = vadd.f32 %v3995, %v4063
    %v4065 = vpop.f32.mrf.mxu0
    %4066 = vmatprep.mubr.f32.mxu0 0.0
    %4067 = vmatmul.mubr.f32.gmra.mxu0 %v3847
    %v4068 = vpop.f32.mrf.mxu0
    %v4069 = vadd.f32 %v3995, %v4068
    %v4070 = vpop.f32.mrf.mxu0
    %4071 = vmatprep.mubr.f32.mxu0 0.0
    %4072 = vmatmul.mubr.f32.gmra.mxu0 %v3848
    %v4073 = vpop.f32.mrf.mxu0
    %v4074 = vadd.f32 %v3995, %v4073
    %v4075 = vpop.f32.mrf.mxu0
    %4076 = vmatprep.mubr.f32.mxu0 0.0
    %4077 = vmatmul.mubr.f32.gmra.mxu0 %v3849
    %v4078 = vpop.f32.mrf.mxu0
    %v4079 = vadd.f32 %v3995, %v4078
    %v4080 = vpop.f32.mrf.mxu0
    %4081 = vmatprep.mubr.f32.mxu0 0.0
    %4082 = vmatmul.mubr.f32.gmra.mxu0 %v3850
    %v4083 = vpop.f32.mrf.mxu0
    %v4084 = vadd.f32 %v3995, %v4083
    %v4085 = vpop.f32.mrf.mxu0
    %4086 = vmatprep.mubr.f32.mxu0 0.0
    %4087 = vmatmul.mubr.f32.gmra.mxu0 %v3851
    %v4088 = vpop.f32.mrf.mxu0
    %v4089 = vadd.f32 %v3995, %v4088
    %v4090 = vpop.f32.mrf.mxu0
    %4091 = vmatprep.mubr.f32.mxu0 0.0
    %4092 = vmatmul.mubr.f32.gmra.mxu0 %v3852
    %v4093 = vpop.f32.mrf.mxu0
    %v4094 = vadd.f32 %v3995, %v4093
    %v4095 = vpop.f32.mrf.mxu0
    %4096 = vmatprep.mubr.f32.mxu0 0.0
    %4097 = vmatmul.mubr.f32.gmra.mxu0 %v3853
    %v4098 = vpop.f32.mrf.mxu0
    %v4099 = vadd.f32 %v3995, %v4098
    %v4100 = vpop.f32.mrf.mxu0
    %4101 = vmatprep.mubr.f32.mxu0 0.0
    %4102 = vmatmul.mubr.f32.gmra.mxu0 %v3854
    %v4103 = vpop.f32.mrf.mxu0
    %v4104 = vadd.f32 %v3995, %v4103
    %v4105 = vpop.f32.mrf.mxu0
    %4106 = vmatprep.mubr.f32.mxu0 0.0
    %4107 = vmatmul.mubr.f32.gmra.mxu0 %v3855
    %v4108 = vpop.f32.mrf.mxu0
    %v4109 = vadd.f32 %v3995, %v4108
    %v4110 = vpop.f32.mrf.mxu0
    %4111 = vmatprep.mubr.f32.mxu0 0.0
    %4112 = vmatmul.mubr.f32.gmra.mxu0 %v3856
    %v4113 = vpop.f32.mrf.mxu0
    %v4114 = vadd.f32 %v3995, %v4113
    %v4115 = vpop.f32.mrf.mxu0
    %4116 = vmatprep.mubr.f32.mxu0 0.0
    %4117 = vmatmul.mubr.f32.gmra.mxu0 %v3857
    %v4118 = vpop.f32.mrf.mxu0
    %v4119 = vadd.f32 %v3995, %v4118
    %v4120 = vpop.f32.mrf.mxu0
    %4121 = vmatprep.mubr.f32.mxu0 0.0
    %4122 = vmatmul.mubr.f32.gmra.mxu0 %v3858
    %v4123 = vpop.f32.mrf.mxu0
    %v4124 = vadd.f32 %v3995, %v4123
    %v4125 = vpop.f32.mrf.mxu0
    %4126 = vmatprep.mubr.f32.mxu0 0.0
    %4127 = vmatmul.mubr.f32.gmra.mxu0 %v3859
    %v4128 = vpop.f32.mrf.mxu0
    %v4129 = vadd.f32 %v3995, %v4128
    %v4130 = vpop.f32.mrf.mxu0
    %4131 = vmatprep.mubr.f32.mxu0 0.0
    %4132 = vmatmul.mubr.f32.gmra.mxu0 %v3860
    %v4133 = vpop.f32.mrf.mxu0
    %v4134 = vadd.f32 %v3995, %v4133
    %v4135 = vpop.f32.mrf.mxu0
    %4136 = vmatprep.mubr.f32.mxu0 0.0
    %4137 = vmatmul.mubr.f32.gmra.mxu0 %v3861
    %v4138 = vpop.f32.mrf.mxu0
    %v4139 = vadd.f32 %v3995, %v4138
    %v4140 = vpop.f32.mrf.mxu0
    %4141 = vmatprep.mubr.f32.mxu0 0.0
    %4142 = vmatmul.mubr.f32.gmra.mxu0 %v3862
    %v4143 = vpop.f32.mrf.mxu0
    %v4144 = vadd.f32 %v3995, %v4143
    %v4145 = vpop.f32.mrf.mxu0
    %4146 = vmatprep.mubr.f32.mxu0 0.0
    %4147 = vmatmul.mubr.f32.gmra.mxu0 %v3863
    %v4148 = vpop.f32.mrf.mxu0
    %v4149 = vadd.f32 %v3995, %v4148
    %v4150 = vpop.f32.mrf.mxu0
    %4151 = vmatprep.mubr.f32.mxu0 0.0
    %4152 = vmatmul.mubr.f32.gmra.mxu0 %v3864
    %v4153 = vpop.f32.mrf.mxu0
    %v4154 = vadd.f32 %v3995, %v4153
    %v4155 = vpop.f32.mrf.mxu0
    %4156 = vmatprep.mubr.f32.mxu0 0.0
    %4157 = vmatmul.mubr.f32.gmra.mxu0 %v3865
    %v4158 = vpop.f32.mrf.mxu0
    %v4159 = vadd.f32 %v3995, %v4158
    %v4160 = vpop.f32.mrf.mxu0
    %4161 = vmatprep.mubr.f32.mxu0 0.0
    %4162 = vmatmul.mubr.f32.gmra.mxu0 %v3866
    %v4163 = vpop.f32.mrf.mxu0
    %v4164 = vadd.f32 %v3995, %v4163
    %v4165 = vpop.f32.mrf.mxu0
    %4166 = vmatprep.mubr.f32.mxu0 0.0
    %4167 = vmatmul.mubr.f32.gmra.mxu0 %v3867
    %v4168 = vpop.f32.mrf.mxu0
    %v4169 = vadd.f32 %v3995, %v4168
    %v4170 = vpop.f32.mrf.mxu0
    %4171 = vmatprep.mubr.f32.mxu0 0.0
    %4172 = vmatmul.mubr.f32.gmra.mxu0 %v3868
    %v4173 = vpop.f32.mrf.mxu0
    %v4174 = vadd.f32 %v3995, %v4173
    %v4175 = vpop.f32.mrf.mxu0
    %4176 = vmatprep.mubr.f32.mxu0 0.0
    %4177 = vmatmul.mubr.f32.gmra.mxu0 %v3869
    %v4178 = vpop.f32.mrf.mxu0
    %v4179 = vadd.f32 %v3995, %v4178
    %v4180 = vpop.f32.mrf.mxu0
    %4181 = vmatprep.mubr.f32.mxu0 0.0
    %4182 = vmatmul.mubr.f32.gmra.mxu0 %v3870
    %v4183 = vpop.f32.mrf.mxu0
    %v4184 = vadd.f32 %v3995, %v4183
    %v4185 = vpop.f32.mrf.mxu0
    %4186 = vmatprep.mubr.f32.mxu0 0.0
    %4187 = vmatmul.mubr.f32.gmra.mxu0 %v3871
    %v4188 = vpop.f32.mrf.mxu0
    %v4189 = vadd.f32 %v3995, %v4188
    %v4190 = vpop.f32.mrf.mxu0
    %4191 = vmatprep.mubr.f32.mxu0 0.0
    %4192 = vmatmul.mubr.f32.gmra.mxu0 %v3872
    %v4193 = vpop.f32.mrf.mxu0
    %v4194 = vadd.f32 %v3995, %v4193
    %v4195 = vpop.f32.mrf.mxu0
    %4196 = vmatprep.mubr.f32.mxu0 0.0
    %4197 = vmatmul.mubr.f32.gmra.mxu0 %v3873
    %v4198 = vpop.f32.mrf.mxu0
    %v4199 = vadd.f32 %v3995, %v4198
    %v4200 = vpop.f32.mrf.mxu0
    %4201 = vmatprep.mubr.f32.mxu0 0.0
    %4202 = vmatmul.mubr.f32.gmra.mxu0 %v3874
    %v4203 = vpop.f32.mrf.mxu0
    %v4204 = vadd.f32 %v3995, %v4203
    %v4205 = vpop.f32.mrf.mxu0
    %4206 = vmatprep.mubr.f32.mxu0 0.0
    %4207 = vmatmul.mubr.f32.gmra.mxu0 %v3875
    %v4208 = vpop.f32.mrf.mxu0
    %v4209 = vadd.f32 %v3995, %v4208
    %v4210 = vpop.f32.mrf.mxu0
    %4211 = vmatprep.mubr.f32.mxu0 0.0
    %4212 = vmatmul.mubr.f32.gmra.mxu0 %v3876
    %v4213 = vpop.f32.mrf.mxu0
    %v4214 = vadd.f32 %v3995, %v4213
    %v4215 = vpop.f32.mrf.mxu0
    %4216 = vmatprep.mubr.f32.mxu0 0.0
    %4217 = vmatmul.mubr.f32.gmra.mxu0 %v3877
    %v4218 = vpop.f32.mrf.mxu0
    %v4219 = vadd.f32 %v3995, %v4218
    %v4220 = vpop.f32.mrf.mxu0
    %4221 = vmatprep.mubr.f32.mxu0 0.0
    %4222 = vmatmul.mubr.f32.gmra.mxu0 %v3878
    %v4223 = vpop.f32.mrf.mxu0
    %v4224 = vadd.f32 %v3995, %v4223
    %v4225 = vpop.f32.mrf.mxu0
    %4226 = vmatprep.mubr.f32.mxu0 0.0
    %4227 = vmatmul.mubr.f32.gmra.mxu0 %v3879
    %v4228 = vpop.f32.mrf.mxu0
    %v4229 = vadd.f32 %v3995, %v4228
    %v4230 = vpop.f32.mrf.mxu0
    %4231 = vmatprep.mubr.f32.mxu0 0.0
    %4232 = vmatmul.mubr.f32.gmra.mxu0 %v3880
    %v4233 = vpop.f32.mrf.mxu0
    %v4234 = vadd.f32 %v3995, %v4233
    %v4235 = vpop.f32.mrf.mxu0
    %4236 = vmatprep.mubr.f32.mxu0 0.0
    %4237 = vmatmul.mubr.f32.gmra.mxu0 %v3881
    %v4238 = vpop.f32.mrf.mxu0
    %v4239 = vadd.f32 %v3995, %v4238
    %v4240 = vpop.f32.mrf.mxu0
    %4241 = vmatprep.mubr.f32.mxu0 0.0
    %4242 = vmatmul.mubr.f32.gmra.mxu0 %v3882
    %v4243 = vpop.f32.mrf.mxu0
    %v4244 = vadd.f32 %v3995, %v4243
    %v4245 = vpop.f32.mrf.mxu0
    %4246 = vmatprep.mubr.f32.mxu0 0.0
    %4247 = vmatmul.mubr.f32.gmra.mxu0 %v3883
    %v4248 = vpop.f32.mrf.mxu0
    %v4249 = vadd.f32 %v3995, %v4248
    %v4250 = vpop.f32.mrf.mxu0
    %4251 = vmatprep.mubr.f32.mxu0 0.0
    %4252 = vmatmul.mubr.f32.gmra.mxu0 %v3884
    %v4253 = vpop.f32.mrf.mxu0
    %v4254 = vadd.f32 %v3995, %v4253
    %v4255 = vpop.f32.mrf.mxu0
    %4256 = vmatprep.mubr.f32.mxu0 0.0
    %4257 = vmatmul.mubr.f32.gmra.mxu0 %v3885
    %v4258 = vpop.f32.mrf.mxu0
    %v4259 = vadd.f32 %v3995, %v4258
    %v4260 = vpop.f32.mrf.mxu0
    %4261 = vmatprep.mubr.f32.mxu0 0.0
    %4262 = vmatmul.mubr.f32.gmra.mxu0 %v3886
    %v4263 = vpop.f32.mrf.mxu0
    %v4264 = vadd.f32 %v3995, %v4263
    %v4265 = vpop.f32.mrf.mxu0
    %4266 = vmatprep.mubr.f32.mxu0 0.0
    %4267 = vmatmul.mubr.f32.gmra.mxu0 %v3887
    %v4268 = vpop.f32.mrf.mxu0
    %v4269 = vadd.f32 %v3995, %v4268
    %v4270 = vpop.f32.mrf.mxu0
    %4271 = vmatprep.mubr.f32.mxu0 0.0
    %4272 = vmatmul.mubr.f32.gmra.mxu0 %v3888
    %v4273 = vpop.f32.mrf.mxu0
    %v4274 = vadd.f32 %v3995, %v4273
    %v4275 = vpop.f32.mrf.mxu0
    %4276 = vmatprep.mubr.f32.mxu0 0.0
    %4277 = vmatmul.mubr.f32.gmra.mxu0 %v3889
    %v4278 = vpop.f32.mrf.mxu0
    %v4279 = vadd.f32 %v3995, %v4278
    %v4280 = vpop.f32.mrf.mxu0
    %4281 = vmatprep.mubr.f32.mxu0 0.0
    %4282 = vmatmul.mubr.f32.gmra.mxu0 %v3890
    %v4283 = vpop.f32.mrf.mxu0
    %v4284 = vadd.f32 %v3995, %v4283
    %v4285 = vpop.f32.mrf.mxu0
    %4286 = vmatprep.mubr.f32.mxu0 0.0
    %4287 = vmatmul.mubr.f32.gmra.mxu0 %v3891
    %v4288 = vpop.f32.mrf.mxu0
    %v4289 = vadd.f32 %v3995, %v4288
    %v4290 = vpop.f32.mrf.mxu0
    %4291 = vmatprep.mubr.f32.mxu0 0.0
    %4292 = vmatmul.mubr.f32.gmra.mxu0 %v3892
    %v4293 = vpop.f32.mrf.mxu0
    %v4294 = vadd.f32 %v3995, %v4293
    %v4295 = vpop.f32.mrf.mxu0
    %4296 = vmatprep.mubr.f32.mxu0 0.0
    %4297 = vmatmul.mubr.f32.gmra.mxu0 %v3893
    %v4298 = vpop.f32.mrf.mxu0
    %v4299 = vadd.f32 %v3995, %v4298
    %v4300 = vpop.f32.mrf.mxu0
    %4301 = vmatprep.mubr.f32.mxu0 0.0
    %4302 = vmatmul.mubr.f32.gmra.mxu0 %v3894
    %v4303 = vpop.f32.mrf.mxu0
    %v4304 = vadd.f32 %v3995, %v4303
    %v4305 = vpop.f32.mrf.mxu0
    %4306 = vmatprep.mubr.f32.mxu0 0.0
    %4307 = vmatmul.mubr.f32.gmra.mxu0 %v3895
    %v4308 = vpop.f32.mrf.mxu0
    %v4309 = vadd.f32 %v3995, %v4308
    %v4310 = vpop.f32.mrf.mxu0
    %4311 = vmatprep.mubr.f32.mxu0 0.0
    %4312 = vmatmul.mubr.f32.gmra.mxu0 %v3896
    %v4313 = vpop.f32.mrf.mxu0
    %v4314 = vadd.f32 %v3995, %v4313
    %v4315 = vpop.f32.mrf.mxu0
    %4316 = vmatprep.mubr.f32.mxu0 0.0
    %4317 = vmatmul.mubr.f32.gmra.mxu0 %v3897
    %v4318 = vpop.f32.mrf.mxu0
    %v4319 = vadd.f32 %v3995, %v4318
    %v4320 = vpop.f32.mrf.mxu0
    %4321 = vmatprep.mubr.f32.mxu0 0.0
    %4322 = vmatmul.mubr.f32.gmra.mxu0 %v3898
    %v4323 = vpop.f32.mrf.mxu0
    %v4324 = vadd.f32 %v3995, %v4323
    %v4325 = vpop.f32.mrf.mxu0
    %4326 = vmatprep.mubr.f32.mxu0 0.0
    %4327 = vmatmul.mubr.f32.gmra.mxu0 %v3899
    %v4328 = vpop.f32.mrf.mxu0
    %v4329 = vadd.f32 %v3995, %v4328
    %v4330 = vpop.f32.mrf.mxu0
    %4331 = vmatprep.mubr.f32.mxu0 0.0
    %4332 = vmatmul.mubr.f32.gmra.mxu0 %v3900
    %v4333 = vpop.f32.mrf.mxu0
    %v4334 = vadd.f32 %v3995, %v4333
    %v4335 = vpop.f32.mrf.mxu0
    %4336 = vmatprep.mubr.f32.mxu0 0.0
    %4337 = vmatmul.mubr.f32.gmra.mxu0 %v3901
    %v4338 = vpop.f32.mrf.mxu0
    %v4339 = vadd.f32 %v3995, %v4338
    %v4340 = vpop.f32.mrf.mxu0
    %4341 = vmatprep.mubr.f32.mxu0 0.0
    %4342 = vmatmul.mubr.f32.gmra.mxu0 %v3902
    %v4343 = vpop.f32.mrf.mxu0
    %v4344 = vadd.f32 %v3995, %v4343
    %v4345 = vpop.f32.mrf.mxu0
    %4346 = vmatprep.mubr.f32.mxu0 0.0
    %4347 = vmatmul.mubr.f32.gmra.mxu0 %v3903
    %v4348 = vpop.f32.mrf.mxu0
    %v4349 = vadd.f32 %v3995, %v4348
    %v4350 = vpop.f32.mrf.mxu0
    %4351 = vmatprep.mubr.f32.mxu0 0.0
    %4352 = vmatmul.mubr.f32.gmra.mxu0 %v3904
    %v4353 = vpop.f32.mrf.mxu0
    %v4354 = vadd.f32 %v3995, %v4353
    %v4355 = vpop.f32.mrf.mxu0
    %4356 = vmatprep.mubr.f32.mxu0 0.0
    %4357 = vmatmul.mubr.f32.gmra.mxu0 %v3905
    %v4358 = vpop.f32.mrf.mxu0
    %v4359 = vadd.f32 %v3995, %v4358
    %v4360 = vpop.f32.mrf.mxu0
    %4361 = vmatprep.mubr.f32.mxu0 0.0
    %4362 = vmatmul.mubr.f32.gmra.mxu0 %v3906
    %v4363 = vpop.f32.mrf.mxu0
    %v4364 = vadd.f32 %v3995, %v4363
    %v4365 = vpop.f32.mrf.mxu0
    %4366 = vmatprep.mubr.f32.mxu0 0.0
    %4367 = vmatmul.mubr.f32.gmra.mxu0 %v3907
    %v4368 = vpop.f32.mrf.mxu0
    %v4369 = vadd.f32 %v3995, %v4368
    %v4370 = vpop.f32.mrf.mxu0
    %4371 = vmatprep.mubr.f32.mxu0 0.0
    %4372 = vmatmul.mubr.f32.gmra.mxu0 %v3908
    %v4373 = vpop.f32.mrf.mxu0
    %v4374 = vadd.f32 %v3995, %v4373
    %v4375 = vpop.f32.mrf.mxu0
    %4376 = vmatprep.mubr.f32.mxu0 0.0
    %4377 = vmatmul.mubr.f32.gmra.mxu0 %v3909
    %v4378 = vpop.f32.mrf.mxu0
    %v4379 = vadd.f32 %v3995, %v4378
    %v4380 = vpop.f32.mrf.mxu0
    %4381 = vmatprep.mubr.f32.mxu0 0.0
    %4382 = vmatmul.mubr.f32.gmra.mxu0 %v3910
    %v4383 = vpop.f32.mrf.mxu0
    %v4384 = vadd.f32 %v3995, %v4383
    %v4385 = vpop.f32.mrf.mxu0
    %4386 = vmatprep.mubr.f32.mxu0 0.0
    %4387 = vmatmul.mubr.f32.gmra.mxu0 %v3911
    %v4388 = vpop.f32.mrf.mxu0
    %v4389 = vadd.f32 %v3995, %v4388
    %v4390 = vpop.f32.mrf.mxu0
    %4391 = vmatprep.mubr.f32.mxu0 0.0
    %4392 = vmatmul.mubr.f32.gmra.mxu0 %v3912
    %v4393 = vpop.f32.mrf.mxu0
    %v4394 = vadd.f32 %v3995, %v4393
    %v4395 = vpop.f32.mrf.mxu0
    %4396 = vmatprep.mubr.f32.mxu0 0.0
    %4397 = vmatmul.mubr.f32.gmra.mxu0 %v3913
    %v4398 = vpop.f32.mrf.mxu0
    %v4399 = vadd.f32 %v3995, %v4398
    %v4400 = vpop.f32.mrf.mxu0
    %4401 = vmatprep.mubr.f32.mxu0 0.0
    %4402 = vmatmul.mubr.f32.gmra.mxu0 %v3914
    %v4403 = vpop.f32.mrf.mxu0
    %v4404 = vadd.f32 %v3995, %v4403
    %v4405 = vpop.f32.mrf.mxu0
    %4406 = vmatprep.mubr.f32.mxu0 0.0
    %4407 = vmatmul.mubr.f32.gmra.mxu0 %v3915
    %v4408 = vpop.f32.mrf.mxu0
    %v4409 = vadd.f32 %v3995, %v4408
    %v4410 = vpop.f32.mrf.mxu0
    %4411 = vmatprep.mubr.f32.mxu0 0.0
    %4412 = vmatmul.mubr.f32.gmra.mxu0 %v3916
    %v4413 = vpop.f32.mrf.mxu0
    %v4414 = vadd.f32 %v3995, %v4413
    %v4415 = vpop.f32.mrf.mxu0
    %4416 = vmatprep.mubr.f32.mxu0 0.0
    %4417 = vmatmul.mubr.f32.gmra.mxu0 %v3917
    %v4418 = vpop.f32.mrf.mxu0
    %v4419 = vadd.f32 %v3995, %v4418
    %v4420 = vpop.f32.mrf.mxu0
    %4421 = vmatprep.mubr.f32.mxu0 0.0
    %4422 = vmatmul.mubr.f32.gmra.mxu0 %v3918
    %v4423 = vpop.f32.mrf.mxu0
    %v4424 = vadd.f32 %v3995, %v4423
    %v4425 = vpop.f32.mrf.mxu0
    %4426 = vmatprep.mubr.f32.mxu0 0.0
    %4427 = vmatmul.mubr.f32.gmra.mxu0 %v3919
    %v4428 = vpop.f32.mrf.mxu0
    %v4429 = vadd.f32 %v3995, %v4428
    %v4430 = vpop.f32.mrf.mxu0
    %4431 = vmatprep.mubr.f32.mxu0 0.0
    %4432 = vmatmul.mubr.f32.gmra.mxu0 %v3920
    %v4433 = vpop.f32.mrf.mxu0
    %v4434 = vadd.f32 %v3995, %v4433
    %v4435 = vpop.f32.mrf.mxu0
    %4436 = vmatprep.mubr.f32.mxu0 0.0
    %4437 = vmatmul.mubr.f32.gmra.mxu0 %v3921
    %v4438 = vpop.f32.mrf.mxu0
    %v4439 = vadd.f32 %v3995, %v4438
    %v4440 = vpop.f32.mrf.mxu0
    %4441 = vmatprep.mubr.f32.mxu0 0.0
    %4442 = vmatmul.mubr.f32.gmra.mxu0 %v3922
    %v4443 = vpop.f32.mrf.mxu0
    %v4444 = vadd.f32 %v3995, %v4443
    %v4445 = vpop.f32.mrf.mxu0
    %4446 = vmatprep.mubr.f32.mxu0 0.0
    %4447 = vmatmul.mubr.f32.gmra.mxu0 %v3923
    %v4448 = vpop.f32.mrf.mxu0
    %v4449 = vadd.f32 %v3995, %v4448
    %v4450 = vpop.f32.mrf.mxu0
    %4451 = vmatprep.mubr.f32.mxu0 0.0
    %4452 = vmatmul.mubr.f32.gmra.mxu0 %v3924
    %v4453 = vpop.f32.mrf.mxu0
    %v4454 = vadd.f32 %v3995, %v4453
    %v4455 = vpop.f32.mrf.mxu0
    %4456 = vmatprep.mubr.f32.mxu0 0.0
    %4457 = vmatmul.mubr.f32.gmra.mxu0 %v3925
    %v4458 = vpop.f32.mrf.mxu0
    %v4459 = vadd.f32 %v3995, %v4458
    %v4460 = vpop.f32.mrf.mxu0
    %4461 = vmatprep.mubr.f32.mxu0 0.0
    %4462 = vmatmul.mubr.f32.gmra.mxu0 %v3926
    %v4463 = vpop.f32.mrf.mxu0
    %v4464 = vadd.f32 %v3995, %v4463
    %v4465 = vpop.f32.mrf.mxu0
    %4466 = vmatprep.mubr.f32.mxu0 0.0
    %4467 = vmatmul.mubr.f32.gmra.mxu0 %v3927
    %v4468 = vpop.f32.mrf.mxu0
    %v4469 = vadd.f32 %v3995, %v4468
    %v4470 = vpop.f32.mrf.mxu0
    %4471 = vmatprep.mubr.f32.mxu0 0.0
    %4472 = vmatmul.mubr.f32.gmra.mxu0 %v3928
    %v4473 = vpop.f32.mrf.mxu0
    %v4474 = vadd.f32 %v3995, %v4473
    %v4475 = vpop.f32.mrf.mxu0
    %4476 = vmatprep.mubr.f32.mxu0 0.0
    %4477 = vmatmul.mubr.f32.gmra.mxu0 %v3929
    %v4478 = vpop.f32.mrf.mxu0
    %v4479 = vadd.f32 %v3995, %v4478
    %v4480 = vpop.f32.mrf.mxu0
    %4481 = vmatprep.mubr.f32.mxu0 0.0
    %4482 = vmatmul.mubr.f32.gmra.mxu0 %v3930
    %v4483 = vpop.f32.mrf.mxu0
    %v4484 = vadd.f32 %v3995, %v4483
    %v4485 = vpop.f32.mrf.mxu0
    %4486 = vmatprep.mubr.f32.mxu0 0.0
    %4487 = vmatmul.mubr.f32.gmra.mxu0 %v3931
    %v4488 = vpop.f32.mrf.mxu0
    %v4489 = vadd.f32 %v3995, %v4488
    %v4490 = vpop.f32.mrf.mxu0
    %4491 = vmatprep.mubr.f32.mxu0 0.0
    %4492 = vmatmul.mubr.f32.gmra.mxu0 %v3932
    %v4493 = vpop.f32.mrf.mxu0
    %v4494 = vadd.f32 %v3995, %v4493
    %v4495 = vpop.f32.mrf.mxu0
    %4496 = vmatprep.mubr.f32.mxu0 0.0
    %4497 = vmatmul.mubr.f32.gmra.mxu0 %v3933
    %v4498 = vpop.f32.mrf.mxu0
    %v4499 = vadd.f32 %v3995, %v4498
    %v4500 = vpop.f32.mrf.mxu0
    %4501 = vmatprep.mubr.f32.mxu0 0.0
    %4502 = vmatmul.mubr.f32.gmra.mxu0 %v3934
    %v4503 = vpop.f32.mrf.mxu0
    %v4504 = vadd.f32 %v3995, %v4503
    %v4505 = vpop.f32.mrf.mxu0
    %4506 = vmatprep.mubr.f32.mxu0 0.0
    %4507 = vmatmul.mubr.f32.gmra.mxu0 %v3935
    %v4508 = vpop.f32.mrf.mxu0
    %v4509 = vadd.f32 %v3995, %v4508
    %v4510 = vpop.f32.mrf.mxu0
    %4511 = vmatprep.mubr.f32.mxu0 0.0
    %4512 = vmatmul.mubr.f32.gmra.mxu0 %v3936
    %v4513 = vpop.f32.mrf.mxu0
    %v4514 = vadd.f32 %v3995, %v4513
    %v4515 = vpop.f32.mrf.mxu0
    %4516 = vmatprep.mubr.f32.mxu0 0.0
    %4517 = vmatmul.mubr.f32.gmra.mxu0 %v3937
    %v4518 = vpop.f32.mrf.mxu0
    %v4519 = vadd.f32 %v3995, %v4518
    %v4520 = vpop.f32.mrf.mxu0
    %4521 = vmatprep.mubr.f32.mxu0 0.0
    %4522 = vmatmul.mubr.f32.gmra.mxu0 %v3938
    %v4523 = vpop.f32.mrf.mxu0
    %v4524 = vadd.f32 %v3995, %v4523
    %v4525 = vpop.f32.mrf.mxu0
    %4526 = vmatprep.mubr.f32.mxu0 0.0
    %4527 = vmatmul.mubr.f32.gmra.mxu0 %v3939
    %v4528 = vpop.f32.mrf.mxu0
    %v4529 = vadd.f32 %v3995, %v4528
    %v4530 = vpop.f32.mrf.mxu0
    %4531 = vmatprep.mubr.f32.mxu0 0.0
    %4532 = vmatmul.mubr.f32.gmra.mxu0 %v3940
    %v4533 = vpop.f32.mrf.mxu0
    %v4534 = vadd.f32 %v3995, %v4533
    %v4535 = vpop.f32.mrf.mxu0
    %4536 = vmatprep.mubr.f32.mxu0 0.0
    %4537 = vmatmul.mubr.f32.gmra.mxu0 %v3941
    %v4538 = vpop.f32.mrf.mxu0
    %v4539 = vadd.f32 %v3995, %v4538
    %v4540 = vpop.f32.mrf.mxu0
    %4541 = vmatprep.mubr.f32.mxu0 0.0
    %4542 = vmatmul.mubr.f32.gmra.mxu0 %v3942
    %v4543 = vpop.f32.mrf.mxu0
    %v4544 = vadd.f32 %v3995, %v4543
    %v4545 = vpop.f32.mrf.mxu0
    %4546 = vmatprep.mubr.f32.mxu0 0.0
    %4547 = vmatmul.mubr.f32.gmra.mxu0 %v3943
    %v4548 = vpop.f32.mrf.mxu0
    %v4549 = vadd.f32 %v3995, %v4548
    %v4550 = vpop.f32.mrf.mxu0
    %4551 = vmatprep.mubr.f32.mxu0 0.0
    %4552 = vmatmul.mubr.f32.gmra.mxu0 %v3944
    %v4553 = vpop.f32.mrf.mxu0
    %v4554 = vadd.f32 %v3995, %v4553
    %v4555 = vpop.f32.mrf.mxu0
    %4556 = vmatprep.mubr.f32.mxu0 0.0
    %4557 = vmatmul.mubr.f32.gmra.mxu0 %v3945
    %v4558 = vpop.f32.mrf.mxu0
    %v4559 = vadd.f32 %v3995, %v4558
    %v4560 = vpop.f32.mrf.mxu0
    %4561 = vmatprep.mubr.f32.mxu0 0.0
    %4562 = vmatmul.mubr.f32.gmra.mxu0 %v3946
    %v4563 = vpop.f32.mrf.mxu0
    %v4564 = vadd.f32 %v3995, %v4563
    %v4565 = vpop.f32.mrf.mxu0
    %4566 = vmatprep.mubr.f32.mxu0 0.0
    %4567 = vmatmul.mubr.f32.gmra.mxu0 %v3947
    %v4568 = vpop.f32.mrf.mxu0
    %v4569 = vadd.f32 %v3995, %v4568
    %v4570 = vpop.f32.mrf.mxu0
    %4571 = vmatprep.mubr.f32.mxu0 0.0
    %4572 = vmatmul.mubr.f32.gmra.mxu0 %v3948
    %v4573 = vpop.f32.mrf.mxu0
    %v4574 = vadd.f32 %v3995, %v4573
    %v4575 = vpop.f32.mrf.mxu0
    %4576 = vmatprep.mubr.f32.mxu0 0.0
    %4577 = vmatmul.mubr.f32.gmra.mxu0 %v3949
    %v4578 = vpop.f32.mrf.mxu0
    %v4579 = vadd.f32 %v3995, %v4578
    %v4580 = vpop.f32.mrf.mxu0
    %4581 = vmatprep.mubr.f32.mxu0 0.0
    %4582 = vmatmul.mubr.f32.gmra.mxu0 %v3950
    %v4583 = vpop.f32.mrf.mxu0
    %v4584 = vadd.f32 %v3995, %v4583
    %v4585 = vpop.f32.mrf.mxu0
    %4586 = vmatprep.mubr.f32.mxu0 0.0
    %4587 = vmatmul.mubr.f32.gmra.mxu0 %v3951
    %v4588 = vpop.f32.mrf.mxu0
    %v4589 = vadd.f32 %v3995, %v4588
    %v4590 = vpop.f32.mrf.mxu0
    %4591 = vmatprep.mubr.f32.mxu0 0.0
    %4592 = vmatmul.mubr.f32.gmra.mxu0 %v3952
    %v4593 = vpop.f32.mrf.mxu0
    %v4594 = vadd.f32 %v3995, %v4593
    %v4595 = vpop.f32.mrf.mxu0
    %4596 = vmatprep.mubr.f32.mxu0 0.0
    %4597 = vmatmul.mubr.f32.gmra.mxu0 %v3953
    %v4598 = vpop.f32.mrf.mxu0
    %v4599 = vadd.f32 %v3995, %v4598
    %v4600 = vpop.f32.mrf.mxu0
    %4601 = vmatprep.mubr.f32.mxu0 0.0
    %4602 = vmatmul.mubr.f32.gmra.mxu0 %v3954
    %v4603 = vpop.f32.mrf.mxu0
    %v4604 = vadd.f32 %v3995, %v4603
    %v4605 = vpop.f32.mrf.mxu0
    %4606 = vmatprep.mubr.f32.mxu0 0.0
    %4607 = vmatmul.mubr.f32.gmra.mxu0 %v3955
    %v4608 = vpop.f32.mrf.mxu0
    %v4609 = vadd.f32 %v3995, %v4608
    %v4610 = vpop.f32.mrf.mxu0
    %4611 = vmatprep.mubr.f32.mxu0 0.0
    %4612 = vmatmul.mubr.f32.gmra.mxu0 %v3956
    %v4613 = vpop.f32.mrf.mxu0
    %v4614 = vadd.f32 %v3995, %v4613
    %v4615 = vpop.f32.mrf.mxu0
    %4616 = vmatprep.mubr.f32.mxu0 0.0
    %4617 = vmatmul.mubr.f32.gmra.mxu0 %v3957
    %v4618 = vpop.f32.mrf.mxu0
    %v4619 = vadd.f32 %v3995, %v4618
    %v4620 = vpop.f32.mrf.mxu0
    %4621 = vmatprep.mubr.f32.mxu0 0.0
    %4622 = vmatmul.mubr.f32.gmra.mxu0 %v3958
    %v4623 = vpop.f32.mrf.mxu0
    %v4624 = vadd.f32 %v3995, %v4623
    %v4625 = vpop.f32.mrf.mxu0
    %4626 = vmatprep.mubr.f32.mxu0 0.0
    %4627 = vmatmul.mubr.f32.gmra.mxu0 %v3959
    %v4628 = vpop.f32.mrf.mxu0
    %v4629 = vadd.f32 %v3995, %v4628
    %v4630 = vpop.f32.mrf.mxu0
    %4631 = vmatprep.mubr.f32.mxu0 0.0
    %4632 = vmatmul.mubr.f32.gmra.mxu0 %v3960
    %v4633 = vpop.f32.mrf.mxu0
    %v4634 = vadd.f32 %v3995, %v4633
    %v4635 = vpop.f32.mrf.mxu0
    %4636 = vmatprep.mubr.f32.mxu0 0.0
    %4637 = vmatmul.mubr.f32.gmra.mxu0 %v3961
    %v4638 = vpop.f32.mrf.mxu0
    %v4639 = vadd.f32 %v3995, %v4638
    %v4640 = vpop.f32.mrf.mxu0
    %4641 = vmatprep.mubr.f32.mxu0 0.0
    %4642 = vmatmul.mubr.f32.gmra.mxu0 %v3962
    %v4643 = vpop.f32.mrf.mxu0
    %v4644 = vadd.f32 %v3995, %v4643
    %v4645 = vpop.f32.mrf.mxu0
    %4646 = vmatprep.mubr.f32.mxu0 0.0
    %4647 = vmatmul.mubr.f32.gmra.mxu0 %v3963
    %v4648 = vpop.f32.mrf.mxu0
    %v4649 = vadd.f32 %v3995, %v4648
    %v4650 = vpop.f32.mrf.mxu0
    %4651 = vmatprep.mubr.f32.mxu0 0.0
    %4652 = vmatmul.mubr.f32.gmra.mxu0 %v3964
    %v4653 = vpop.f32.mrf.mxu0
    %v4654 = vadd.f32 %v3995, %v4653
    %v4655 = vpop.f32.mrf.mxu0
    %4656 = vmatprep.mubr.f32.mxu0 0.0
    %4657 = vmatmul.mubr.f32.gmra.mxu0 %v3965
    %v4658 = vpop.f32.mrf.mxu0
    %v4659 = vadd.f32 %v3995, %v4658
    %v4660 = vpop.f32.mrf.mxu0
    %4661 = vmatprep.mubr.f32.mxu0 0.0
    %4662 = vmatmul.mubr.f32.gmra.mxu0 %v3966
    %v4663 = vpop.f32.mrf.mxu0
    %v4664 = vadd.f32 %v3995, %v4663
    %v4665 = vpop.f32.mrf.mxu0
    %4666 = vmatprep.mubr.f32.mxu0 0.0
    %4667 = vmatmul.mubr.f32.gmra.mxu0 %v3967
    %v4668 = vpop.f32.mrf.mxu0
    %v4669 = vadd.f32 %v3995, %v4668
    %v4670 = vpop.f32.mrf.mxu0
    %4671 = vmatprep.mubr.f32.mxu0 0.0
    %4672 = vmatmul.mubr.f32.gmra.mxu0 %v3968
    %v4673 = vpop.f32.mrf.mxu0
    %v4674 = vadd.f32 %v3995, %v4673
    %v4675 = vpop.f32.mrf.mxu0
    %4676 = vmatprep.mubr.f32.mxu0 0.0
    %4677 = vmatmul.mubr.f32.gmra.mxu0 %v3969
    %v4678 = vpop.f32.mrf.mxu0
    %v4679 = vadd.f32 %v3995, %v4678
    %v4680 = vpop.f32.mrf.mxu0
    %4681 = vmatprep.mubr.f32.mxu0 0.0
    %4682 = vmatmul.mubr.f32.gmra.mxu0 %v3970
    %v4683 = vpop.f32.mrf.mxu0
    %v4684 = vadd.f32 %v3995, %v4683
    %v4685 = vpop.f32.mrf.mxu0
    %4686 = vmatprep.mubr.f32.mxu0 0.0
    %4687 = vmatmul.mubr.f32.gmra.mxu0 %v3971
    %v4688 = vpop.f32.mrf.mxu0
    %v4689 = vadd.f32 %v3995, %v4688
    %v4690 = vpop.f32.mrf.mxu0
    %4691 = vmatprep.mubr.f32.mxu0 0.0
    %4692 = vmatmul.mubr.f32.gmra.mxu0 %v3972
    %v4693 = vpop.f32.mrf.mxu0
    %v4694 = vadd.f32 %v3995, %v4693
    %v4695 = vpop.f32.mrf.mxu0
    %4696 = vmatprep.mubr.f32.mxu0 0.0
    %4697 = vmatmul.mubr.f32.gmra.mxu0 %v3973
    %v4698 = vpop.f32.mrf.mxu0
    %v4699 = vadd.f32 %v3995, %v4698
    %v4700 = vpop.f32.mrf.mxu0
    %4701 = vdwg.mxu0
    %v4702 = vmax.f32 %v4064, 0.0
    %v4703 = vmax.f32 %v4069, 0.0
    %v4704 = vmax.f32 %v4074, 0.0
    %v4705 = vmax.f32 %v4079, 0.0
    %v4706 = vmax.f32 %v4084, 0.0
    %v4707 = vmax.f32 %v4089, 0.0
    %v4708 = vmax.f32 %v4094, 0.0
    %v4709 = vmax.f32 %v4099, 0.0
    %v4710 = vmax.f32 %v4104, 0.0
    %v4711 = vmax.f32 %v4109, 0.0
    %v4712 = vmax.f32 %v4114, 0.0
    %v4713 = vmax.f32 %v4119, 0.0
    %v4714 = vmax.f32 %v4124, 0.0
    %v4715 = vmax.f32 %v4129, 0.0
    %v4716 = vmax.f32 %v4134, 0.0
    %v4717 = vmax.f32 %v4139, 0.0
    %v4718 = vmax.f32 %v4144, 0.0
    %v4719 = vmax.f32 %v4149, 0.0
    %v4720 = vmax.f32 %v4154, 0.0
    %v4721 = vmax.f32 %v4159, 0.0
    %v4722 = vmax.f32 %v4164, 0.0
    %v4723 = vmax.f32 %v4169, 0.0
    %v4724 = vmax.f32 %v4174, 0.0
    %v4725 = vmax.f32 %v4179, 0.0
    %v4726 = vmax.f32 %v4184, 0.0
    %v4727 = vmax.f32 %v4189, 0.0
    %v4728 = vmax.f32 %v4194, 0.0
    %v4729 = vmax.f32 %v4199, 0.0
    %v4730 = vmax.f32 %v4204, 0.0
    %v4731 = vmax.f32 %v4209, 0.0
    %v4732 = vmax.f32 %v4214, 0.0
    %v4733 = vmax.f32 %v4219, 0.0
    %v4734 = vmax.f32 %v4224, 0.0
    %v4735 = vmax.f32 %v4229, 0.0
    %v4736 = vmax.f32 %v4234, 0.0
    %v4737 = vmax.f32 %v4239, 0.0
    %v4738 = vmax.f32 %v4244, 0.0
    %v4739 = vmax.f32 %v4249, 0.0
    %v4740 = vmax.f32 %v4254, 0.0
    %v4741 = vmax.f32 %v4259, 0.0
    %v4742 = vmax.f32 %v4264, 0.0
    %v4743 = vmax.f32 %v4269, 0.0
    %v4744 = vmax.f32 %v4274, 0.0
    %v4745 = vmax.f32 %v4279, 0.0
    %v4746 = vmax.f32 %v4284, 0.0
    %v4747 = vmax.f32 %v4289, 0.0
    %v4748 = vmax.f32 %v4294, 0.0
    %v4749 = vmax.f32 %v4299, 0.0
    %v4750 = vmax.f32 %v4304, 0.0
    %v4751 = vmax.f32 %v4309, 0.0
    %v4752 = vmax.f32 %v4314, 0.0
    %v4753 = vmax.f32 %v4319, 0.0
    %v4754 = vmax.f32 %v4324, 0.0
    %v4755 = vmax.f32 %v4329, 0.0
    %v4756 = vmax.f32 %v4334, 0.0
    %v4757 = vmax.f32 %v4339, 0.0
    %v4758 = vmax.f32 %v4344, 0.0
    %v4759 = vmax.f32 %v4349, 0.0
    %v4760 = vmax.f32 %v4354, 0.0
    %v4761 = vmax.f32 %v4359, 0.0
    %v4762 = vmax.f32 %v4364, 0.0
    %v4763 = vmax.f32 %v4369, 0.0
    %v4764 = vmax.f32 %v4374, 0.0
    %v4765 = vmax.f32 %v4379, 0.0
    %v4766 = vmax.f32 %v4384, 0.0
    %v4767 = vmax.f32 %v4389, 0.0
    %v4768 = vmax.f32 %v4394, 0.0
    %v4769 = vmax.f32 %v4399, 0.0
    %v4770 = vmax.f32 %v4404, 0.0
    %v4771 = vmax.f32 %v4409, 0.0
    %v4772 = vmax.f32 %v4414, 0.0
    %v4773 = vmax.f32 %v4419, 0.0
    %v4774 = vmax.f32 %v4424, 0.0
    %v4775 = vmax.f32 %v4429, 0.0
    %v4776 = vmax.f32 %v4434, 0.0
    %v4777 = vmax.f32 %v4439, 0.0
    %v4778 = vmax.f32 %v4444, 0.0
    %v4779 = vmax.f32 %v4449, 0.0
    %v4780 = vmax.f32 %v4454, 0.0
    %v4781 = vmax.f32 %v4459, 0.0
    %v4782 = vmax.f32 %v4464, 0.0
    %v4783 = vmax.f32 %v4469, 0.0
    %v4784 = vmax.f32 %v4474, 0.0
    %v4785 = vmax.f32 %v4479, 0.0
    %v4786 = vmax.f32 %v4484, 0.0
    %v4787 = vmax.f32 %v4489, 0.0
    %v4788 = vmax.f32 %v4494, 0.0
    %v4789 = vmax.f32 %v4499, 0.0
    %v4790 = vmax.f32 %v4504, 0.0
    %v4791 = vmax.f32 %v4509, 0.0
    %v4792 = vmax.f32 %v4514, 0.0
    %v4793 = vmax.f32 %v4519, 0.0
    %v4794 = vmax.f32 %v4524, 0.0
    %v4795 = vmax.f32 %v4529, 0.0
    %v4796 = vmax.f32 %v4534, 0.0
    %v4797 = vmax.f32 %v4539, 0.0
    %v4798 = vmax.f32 %v4544, 0.0
    %v4799 = vmax.f32 %v4549, 0.0
    %v4800 = vmax.f32 %v4554, 0.0
    %v4801 = vmax.f32 %v4559, 0.0
    %v4802 = vmax.f32 %v4564, 0.0
    %v4803 = vmax.f32 %v4569, 0.0
    %v4804 = vmax.f32 %v4574, 0.0
    %v4805 = vmax.f32 %v4579, 0.0
    %v4806 = vmax.f32 %v4584, 0.0
    %v4807 = vmax.f32 %v4589, 0.0
    %v4808 = vmax.f32 %v4594, 0.0
    %v4809 = vmax.f32 %v4599, 0.0
    %v4810 = vmax.f32 %v4604, 0.0
    %v4811 = vmax.f32 %v4609, 0.0
    %v4812 = vmax.f32 %v4614, 0.0
    %v4813 = vmax.f32 %v4619, 0.0
    %v4814 = vmax.f32 %v4624, 0.0
    %v4815 = vmax.f32 %v4629, 0.0
    %v4816 = vmax.f32 %v4634, 0.0
    %v4817 = vmax.f32 %v4639, 0.0
    %v4818 = vmax.f32 %v4644, 0.0
    %v4819 = vmax.f32 %v4649, 0.0
    %v4820 = vmax.f32 %v4654, 0.0
    %v4821 = vmax.f32 %v4659, 0.0
    %v4822 = vmax.f32 %v4664, 0.0
    %v4823 = vmax.f32 %v4669, 0.0
    %v4824 = vmax.f32 %v4674, 0.0
    %v4825 = vmax.f32 %v4679, 0.0
    %v4826 = vmax.f32 %v4684, 0.0
    %v4827 = vmax.f32 %v4689, 0.0
    %v4828 = vmax.f32 %v4694, 0.0
    %v4829 = vmax.f32 %v4699, 0.0
    %v4830 = vld [vmem:[%s11] sm:$0xff]
    %v4831 = vld [vmem:[%s11 + $0x8] sm:$0xff]
    %4832 = vmatprep.subr.mxu0 0.0
    %4833 = vmatpush1.xpose.msra.mxu0 %v4717
    %4834 = vmatprep.subr.mxu0 0.0
    %4835 = vmatpush1.xpose.msra.mxu0 %v4716
    %4836 = vmatprep.subr.mxu0 0.0
    %4837 = vmatpush1.xpose.msra.mxu0 %v4715
    %4838 = vmatprep.subr.mxu0 0.0
    %4839 = vmatpush1.xpose.msra.mxu0 %v4714
    %4840 = vmatprep.subr.mxu0 0.0
    %4841 = vmatpush1.xpose.msra.mxu0 %v4713
    %4842 = vmatprep.subr.mxu0 0.0
    %4843 = vmatpush1.xpose.msra.mxu0 %v4712
    %4844 = vmatprep.subr.mxu0 0.0
    %4845 = vmatpush1.xpose.msra.mxu0 %v4711
    %4846 = vmatprep.subr.mxu0 0.0
    %4847 = vmatpush1.xpose.msra.mxu0 %v4710
    %4848 = vmatprep.subr.mxu0 0.0
    %4849 = vmatpush1.xpose.msra.mxu0 %v4709
    %4850 = vmatprep.subr.mxu0 0.0
    %4851 = vmatpush1.xpose.msra.mxu0 %v4708
    %4852 = vmatprep.subr.mxu0 0.0
    %4853 = vmatpush1.xpose.msra.mxu0 %v4707
    %4854 = vmatprep.subr.mxu0 0.0
    %4855 = vmatpush1.xpose.msra.mxu0 %v4706
    %4856 = vmatprep.subr.mxu0 0.0
    %4857 = vmatpush1.xpose.msra.mxu0 %v4705
    %4858 = vmatprep.subr.mxu0 0.0
    %4859 = vmatpush1.xpose.msra.mxu0 %v4704
    %4860 = vmatprep.subr.mxu0 0.0
    %4861 = vmatpush1.xpose.msra.mxu0 %v4703
    %4862 = vmatprep.subr.mxu0 0.0
    %4863 = vmatpush1.xpose.msra.mxu0 %v4702
    %4864 = vmatprep.subr.mxu0 0.0
    %4865 = vmatpush2.xpose.msra.mxu0 0.0
    %4866 = vmatprep.subr.mxu0 0.0
    %4867 = vmatpush2.xpose.msra.mxu0 0.0
    %4868 = vmatprep.subr.mxu0 0.0
    %4869 = vmatpush2.xpose.msra.mxu0 0.0
    %4870 = vmatprep.subr.mxu0 0.0
    %4871 = vmatpush2.xpose.msra.mxu0 0.0
    %4872 = vmatprep.subr.mxu0 0.0
    %4873 = vmatpush2.xpose.msra.mxu0 0.0
    %4874 = vmatprep.subr.mxu0 0.0
    %4875 = vmatpush2.xpose.msra.mxu0 0.0
    %4876 = vmatprep.subr.mxu0 0.0
    %4877 = vmatpush2.xpose.msra.mxu0 0.0
    %4878 = vmatprep.subr.mxu0 0.0
    %4879 = vmatpush2.xpose.msra.mxu0 0.0
    %4880 = vmatprep.subr.mxu0 0.0
    %4881 = vmatpush2.xpose.msra.mxu0 0.0
    %4882 = vmatprep.subr.mxu0 0.0
    %4883 = vmatpush2.xpose.msra.mxu0 0.0
    %4884 = vmatprep.subr.mxu0 0.0
    %4885 = vmatpush2.xpose.msra.mxu0 0.0
    %4886 = vmatprep.subr.mxu0 0.0
    %4887 = vmatpush2.xpose.msra.mxu0 0.0
    %4888 = vmatprep.subr.mxu0 0.0
    %4889 = vmatpush2.xpose.msra.mxu0 0.0
    %4890 = vmatprep.subr.mxu0 0.0
    %4891 = vmatpush2.xpose.msra.mxu0 0.0
    %4892 = vmatprep.subr.mxu0 0.0
    %4893 = vmatpush2.xpose.msra.mxu0 0.0
    %4894 = vmatprep.subr.mxu0 0.0
    %4895 = vmatpush2.xpose.msra.mxu0 0.0
    %4896 = vmatprep.mubr.f32.mxu0 0.0
    %4897 = vmatmul.mubr.f32.gmra.mxu0 %v4830
    %v4898 = vpop.f32.mrf.mxu0
    %v4899 = vadd.f32 0.0, %v4898
    %v4900 = vpop.f32.mrf.mxu0
    %4901 = vmatprep.mubr.f32.mxu0 0.0
    %4902 = vmatmul.mubr.f32.gmra.mxu0 %v4831
    %v4903 = vpop.f32.mrf.mxu0
    %v4904 = vpop.f32.mrf.mxu0
    %4905 = vdwg.mxu0
    %4906 = vmatprep.subr.mxu0 0.0
    %4907 = vmatpush1.xpose.msra.mxu0 %v4733
    %4908 = vmatprep.subr.mxu0 0.0
    %4909 = vmatpush1.xpose.msra.mxu0 %v4732
    %4910 = vmatprep.subr.mxu0 0.0
    %4911 = vmatpush1.xpose.msra.mxu0 %v4731
    %4912 = vmatprep.subr.mxu0 0.0
    %4913 = vmatpush1.xpose.msra.mxu0 %v4730
    %4914 = vmatprep.subr.mxu0 0.0
    %4915 = vmatpush1.xpose.msra.mxu0 %v4729
    %4916 = vmatprep.subr.mxu0 0.0
    %4917 = vmatpush1.xpose.msra.mxu0 %v4728
    %4918 = vmatprep.subr.mxu0 0.0
    %4919 = vmatpush1.xpose.msra.mxu0 %v4727
    %4920 = vmatprep.subr.mxu0 0.0
    %4921 = vmatpush1.xpose.msra.mxu0 %v4726
    %4922 = vmatprep.subr.mxu0 0.0
    %4923 = vmatpush1.xpose.msra.mxu0 %v4725
    %4924 = vmatprep.subr.mxu0 0.0
    %4925 = vmatpush1.xpose.msra.mxu0 %v4724
    %4926 = vmatprep.subr.mxu0 0.0
    %4927 = vmatpush1.xpose.msra.mxu0 %v4723
    %4928 = vmatprep.subr.mxu0 0.0
    %4929 = vmatpush1.xpose.msra.mxu0 %v4722
    %4930 = vmatprep.subr.mxu0 0.0
    %4931 = vmatpush1.xpose.msra.mxu0 %v4721
    %4932 = vmatprep.subr.mxu0 0.0
    %4933 = vmatpush1.xpose.msra.mxu0 %v4720
    %4934 = vmatprep.subr.mxu0 0.0
    %4935 = vmatpush1.xpose.msra.mxu0 %v4719
    %4936 = vmatprep.subr.mxu0 0.0
    %4937 = vmatpush1.xpose.msra.mxu0 %v4718
    %4938 = vmatprep.subr.mxu0 0.0
    %4939 = vmatpush2.xpose.msra.mxu0 0.0
    %4940 = vmatprep.subr.mxu0 0.0
    %4941 = vmatpush2.xpose.msra.mxu0 0.0
    %4942 = vmatprep.subr.mxu0 0.0
    %4943 = vmatpush2.xpose.msra.mxu0 0.0
    %4944 = vmatprep.subr.mxu0 0.0
    %4945 = vmatpush2.xpose.msra.mxu0 0.0
    %4946 = vmatprep.subr.mxu0 0.0
    %4947 = vmatpush2.xpose.msra.mxu0 0.0
    %4948 = vmatprep.subr.mxu0 0.0
    %4949 = vmatpush2.xpose.msra.mxu0 0.0
    %4950 = vmatprep.subr.mxu0 0.0
    %4951 = vmatpush2.xpose.msra.mxu0 0.0
    %4952 = vmatprep.subr.mxu0 0.0
    %4953 = vmatpush2.xpose.msra.mxu0 0.0
    %4954 = vmatprep.subr.mxu0 0.0
    %4955 = vmatpush2.xpose.msra.mxu0 0.0
    %4956 = vmatprep.subr.mxu0 0.0
    %4957 = vmatpush2.xpose.msra.mxu0 0.0
    %4958 = vmatprep.subr.mxu0 0.0
    %4959 = vmatpush2.xpose.msra.mxu0 0.0
    %4960 = vmatprep.subr.mxu0 0.0
    %4961 = vmatpush2.xpose.msra.mxu0 0.0
    %4962 = vmatprep.subr.mxu0 0.0
    %4963 = vmatpush2.xpose.msra.mxu0 0.0
    %4964 = vmatprep.subr.mxu0 0.0
    %4965 = vmatpush2.xpose.msra.mxu0 0.0
    %4966 = vmatprep.subr.mxu0 0.0
    %4967 = vmatpush2.xpose.msra.mxu0 0.0
    %4968 = vmatprep.subr.mxu0 0.0
    %4969 = vmatpush2.xpose.msra.mxu0 0.0
    %4970 = vmatprep.mubr.f32.mxu0 0.0
    %4971 = vmatmul.mubr.f32.gmra.mxu0 %v4830
    %v4972 = vpop.f32.mrf.mxu0
    %v4973 = vadd.f32 0.0, %v4972
    %v4974 = vpop.f32.mrf.mxu0
    %4975 = vmatprep.mubr.f32.mxu0 0.0
    %4976 = vmatmul.mubr.f32.gmra.mxu0 %v4831
    %v4977 = vpop.f32.mrf.mxu0
    %v4978 = vpop.f32.mrf.mxu0
    %4979 = vdwg.mxu0
    %4980 = vmatprep.subr.mxu0 0.0
    %4981 = vmatpush1.xpose.msra.mxu0 %v4749
    %4982 = vmatprep.subr.mxu0 0.0
    %4983 = vmatpush1.xpose.msra.mxu0 %v4748
    %4984 = vmatprep.subr.mxu0 0.0
    %4985 = vmatpush1.xpose.msra.mxu0 %v4747
    %4986 = vmatprep.subr.mxu0 0.0
    %4987 = vmatpush1.xpose.msra.mxu0 %v4746
    %4988 = vmatprep.subr.mxu0 0.0
    %4989 = vmatpush1.xpose.msra.mxu0 %v4745
    %4990 = vmatprep.subr.mxu0 0.0
    %4991 = vmatpush1.xpose.msra.mxu0 %v4744
    %4992 = vmatprep.subr.mxu0 0.0
    %4993 = vmatpush1.xpose.msra.mxu0 %v4743
    %4994 = vmatprep.subr.mxu0 0.0
    %4995 = vmatpush1.xpose.msra.mxu0 %v4742
    %4996 = vmatprep.subr.mxu0 0.0
    %4997 = vmatpush1.xpose.msra.mxu0 %v4741
    %4998 = vmatprep.subr.mxu0 0.0
    %4999 = vmatpush1.xpose.msra.mxu0 %v4740
    %5000 = vmatprep.subr.mxu0 0.0
    %5001 = vmatpush1.xpose.msra.mxu0 %v4739
    %5002 = vmatprep.subr.mxu0 0.0
    %5003 = vmatpush1.xpose.msra.mxu0 %v4738
    %5004 = vmatprep.subr.mxu0 0.0
    %5005 = vmatpush1.xpose.msra.mxu0 %v4737
    %5006 = vmatprep.subr.mxu0 0.0
    %5007 = vmatpush1.xpose.msra.mxu0 %v4736
    %5008 = vmatprep.subr.mxu0 0.0
    %5009 = vmatpush1.xpose.msra.mxu0 %v4735
    %5010 = vmatprep.subr.mxu0 0.0
    %5011 = vmatpush1.xpose.msra.mxu0 %v4734
    %5012 = vmatprep.subr.mxu0 0.0
    %5013 = vmatpush2.xpose.msra.mxu0 0.0
    %5014 = vmatprep.subr.mxu0 0.0
    %5015 = vmatpush2.xpose.msra.mxu0 0.0
    %5016 = vmatprep.subr.mxu0 0.0
    %5017 = vmatpush2.xpose.msra.mxu0 0.0
    %5018 = vmatprep.subr.mxu0 0.0
    %5019 = vmatpush2.xpose.msra.mxu0 0.0
    %5020 = vmatprep.subr.mxu0 0.0
    %5021 = vmatpush2.xpose.msra.mxu0 0.0
    %5022 = vmatprep.subr.mxu0 0.0
    %5023 = vmatpush2.xpose.msra.mxu0 0.0
    %5024 = vmatprep.subr.mxu0 0.0
    %5025 = vmatpush2.xpose.msra.mxu0 0.0
    %5026 = vmatprep.subr.mxu0 0.0
    %5027 = vmatpush2.xpose.msra.mxu0 0.0
    %5028 = vmatprep.subr.mxu0 0.0
    %5029 = vmatpush2.xpose.msra.mxu0 0.0
    %5030 = vmatprep.subr.mxu0 0.0
    %5031 = vmatpush2.xpose.msra.mxu0 0.0
    %5032 = vmatprep.subr.mxu0 0.0
    %5033 = vmatpush2.xpose.msra.mxu0 0.0
    %5034 = vmatprep.subr.mxu0 0.0
    %5035 = vmatpush2.xpose.msra.mxu0 0.0
    %5036 = vmatprep.subr.mxu0 0.0
    %5037 = vmatpush2.xpose.msra.mxu0 0.0
    %5038 = vmatprep.subr.mxu0 0.0
    %5039 = vmatpush2.xpose.msra.mxu0 0.0
    %5040 = vmatprep.subr.mxu0 0.0
    %5041 = vmatpush2.xpose.msra.mxu0 0.0
    %5042 = vmatprep.subr.mxu0 0.0
    %5043 = vmatpush2.xpose.msra.mxu0 0.0
    %5044 = vmatprep.mubr.f32.mxu0 0.0
    %5045 = vmatmul.mubr.f32.gmra.mxu0 %v4830
    %v5046 = vpop.f32.mrf.mxu0
    %v5047 = vadd.f32 0.0, %v5046
    %v5048 = vpop.f32.mrf.mxu0
    %5049 = vmatprep.mubr.f32.mxu0 0.0
    %5050 = vmatmul.mubr.f32.gmra.mxu0 %v4831
    %v5051 = vpop.f32.mrf.mxu0
    %v5052 = vpop.f32.mrf.mxu0
    %5053 = vdwg.mxu0
    %5054 = vmatprep.subr.mxu0 0.0
    %5055 = vmatpush1.xpose.msra.mxu0 %v4765
    %5056 = vmatprep.subr.mxu0 0.0
    %5057 = vmatpush1.xpose.msra.mxu0 %v4764
    %5058 = vmatprep.subr.mxu0 0.0
    %5059 = vmatpush1.xpose.msra.mxu0 %v4763
    %5060 = vmatprep.subr.mxu0 0.0
    %5061 = vmatpush1.xpose.msra.mxu0 %v4762
    %5062 = vmatprep.subr.mxu0 0.0
    %5063 = vmatpush1.xpose.msra.mxu0 %v4761
    %5064 = vmatprep.subr.mxu0 0.0
    %5065 = vmatpush1.xpose.msra.mxu0 %v4760
    %5066 = vmatprep.subr.mxu0 0.0
    %5067 = vmatpush1.xpose.msra.mxu0 %v4759
    %5068 = vmatprep.subr.mxu0 0.0
    %5069 = vmatpush1.xpose.msra.mxu0 %v4758
    %5070 = vmatprep.subr.mxu0 0.0
    %5071 = vmatpush1.xpose.msra.mxu0 %v4757
    %5072 = vmatprep.subr.mxu0 0.0
    %5073 = vmatpush1.xpose.msra.mxu0 %v4756
    %5074 = vmatprep.subr.mxu0 0.0
    %5075 = vmatpush1.xpose.msra.mxu0 %v4755
    %5076 = vmatprep.subr.mxu0 0.0
    %5077 = vmatpush1.xpose.msra.mxu0 %v4754
    %5078 = vmatprep.subr.mxu0 0.0
    %5079 = vmatpush1.xpose.msra.mxu0 %v4753
    %5080 = vmatprep.subr.mxu0 0.0
    %5081 = vmatpush1.xpose.msra.mxu0 %v4752
    %5082 = vmatprep.subr.mxu0 0.0
    %5083 = vmatpush1.xpose.msra.mxu0 %v4751
    %5084 = vmatprep.subr.mxu0 0.0
    %5085 = vmatpush1.xpose.msra.mxu0 %v4750
    %5086 = vmatprep.subr.mxu0 0.0
    %5087 = vmatpush2.xpose.msra.mxu0 0.0
    %5088 = vmatprep.subr.mxu0 0.0
    %5089 = vmatpush2.xpose.msra.mxu0 0.0
    %5090 = vmatprep.subr.mxu0 0.0
    %5091 = vmatpush2.xpose.msra.mxu0 0.0
    %5092 = vmatprep.subr.mxu0 0.0
    %5093 = vmatpush2.xpose.msra.mxu0 0.0
    %5094 = vmatprep.subr.mxu0 0.0
    %5095 = vmatpush2.xpose.msra.mxu0 0.0
    %5096 = vmatprep.subr.mxu0 0.0
    %5097 = vmatpush2.xpose.msra.mxu0 0.0
    %5098 = vmatprep.subr.mxu0 0.0
    %5099 = vmatpush2.xpose.msra.mxu0 0.0
    %5100 = vmatprep.subr.mxu0 0.0
    %5101 = vmatpush2.xpose.msra.mxu0 0.0
    %5102 = vmatprep.subr.mxu0 0.0
    %5103 = vmatpush2.xpose.msra.mxu0 0.0
    %5104 = vmatprep.subr.mxu0 0.0
    %5105 = vmatpush2.xpose.msra.mxu0 0.0
    %5106 = vmatprep.subr.mxu0 0.0
    %5107 = vmatpush2.xpose.msra.mxu0 0.0
    %5108 = vmatprep.subr.mxu0 0.0
    %5109 = vmatpush2.xpose.msra.mxu0 0.0
    %5110 = vmatprep.subr.mxu0 0.0
    %5111 = vmatpush2.xpose.msra.mxu0 0.0
    %5112 = vmatprep.subr.mxu0 0.0
    %5113 = vmatpush2.xpose.msra.mxu0 0.0
    %5114 = vmatprep.subr.mxu0 0.0
    %5115 = vmatpush2.xpose.msra.mxu0 0.0
    %5116 = vmatprep.subr.mxu0 0.0
    %5117 = vmatpush2.xpose.msra.mxu0 0.0
    %5118 = vmatprep.mubr.f32.mxu0 0.0
    %5119 = vmatmul.mubr.f32.gmra.mxu0 %v4830
    %v5120 = vpop.f32.mrf.mxu0
    %v5121 = vadd.f32 0.0, %v5120
    %v5122 = vpop.f32.mrf.mxu0
    %5123 = vmatprep.mubr.f32.mxu0 0.0
    %5124 = vmatmul.mubr.f32.gmra.mxu0 %v4831
    %v5125 = vpop.f32.mrf.mxu0
    %v5126 = vpop.f32.mrf.mxu0
    %5127 = vdwg.mxu0
    %5128 = vmatprep.subr.mxu0 0.0
    %5129 = vmatpush1.xpose.msra.mxu0 %v4781
    %5130 = vmatprep.subr.mxu0 0.0
    %5131 = vmatpush1.xpose.msra.mxu0 %v4780
    %5132 = vmatprep.subr.mxu0 0.0
    %5133 = vmatpush1.xpose.msra.mxu0 %v4779
    %5134 = vmatprep.subr.mxu0 0.0
    %5135 = vmatpush1.xpose.msra.mxu0 %v4778
    %5136 = vmatprep.subr.mxu0 0.0
    %5137 = vmatpush1.xpose.msra.mxu0 %v4777
    %5138 = vmatprep.subr.mxu0 0.0
    %5139 = vmatpush1.xpose.msra.mxu0 %v4776
    %5140 = vmatprep.subr.mxu0 0.0
    %5141 = vmatpush1.xpose.msra.mxu0 %v4775
    %5142 = vmatprep.subr.mxu0 0.0
    %5143 = vmatpush1.xpose.msra.mxu0 %v4774
    %5144 = vmatprep.subr.mxu0 0.0
    %5145 = vmatpush1.xpose.msra.mxu0 %v4773
    %5146 = vmatprep.subr.mxu0 0.0
    %5147 = vmatpush1.xpose.msra.mxu0 %v4772
    %5148 = vmatprep.subr.mxu0 0.0
    %5149 = vmatpush1.xpose.msra.mxu0 %v4771
    %5150 = vmatprep.subr.mxu0 0.0
    %5151 = vmatpush1.xpose.msra.mxu0 %v4770
    %5152 = vmatprep.subr.mxu0 0.0
    %5153 = vmatpush1.xpose.msra.mxu0 %v4769
    %5154 = vmatprep.subr.mxu0 0.0
    %5155 = vmatpush1.xpose.msra.mxu0 %v4768
    %5156 = vmatprep.subr.mxu0 0.0
    %5157 = vmatpush1.xpose.msra.mxu0 %v4767
    %5158 = vmatprep.subr.mxu0 0.0
    %5159 = vmatpush1.xpose.msra.mxu0 %v4766
    %5160 = vmatprep.subr.mxu0 0.0
    %5161 = vmatpush2.xpose.msra.mxu0 0.0
    %5162 = vmatprep.subr.mxu0 0.0
    %5163 = vmatpush2.xpose.msra.mxu0 0.0
    %5164 = vmatprep.subr.mxu0 0.0
    %5165 = vmatpush2.xpose.msra.mxu0 0.0
    %5166 = vmatprep.subr.mxu0 0.0
    %5167 = vmatpush2.xpose.msra.mxu0 0.0
    %5168 = vmatprep.subr.mxu0 0.0
    %5169 = vmatpush2.xpose.msra.mxu0 0.0
    %5170 = vmatprep.subr.mxu0 0.0
    %5171 = vmatpush2.xpose.msra.mxu0 0.0
    %5172 = vmatprep.subr.mxu0 0.0
    %5173 = vmatpush2.xpose.msra.mxu0 0.0
    %5174 = vmatprep.subr.mxu0 0.0
    %5175 = vmatpush2.xpose.msra.mxu0 0.0
    %5176 = vmatprep.subr.mxu0 0.0
    %5177 = vmatpush2.xpose.msra.mxu0 0.0
    %5178 = vmatprep.subr.mxu0 0.0
    %5179 = vmatpush2.xpose.msra.mxu0 0.0
    %5180 = vmatprep.subr.mxu0 0.0
    %5181 = vmatpush2.xpose.msra.mxu0 0.0
    %5182 = vmatprep.subr.mxu0 0.0
    %5183 = vmatpush2.xpose.msra.mxu0 0.0
    %5184 = vmatprep.subr.mxu0 0.0
    %5185 = vmatpush2.xpose.msra.mxu0 0.0
    %5186 = vmatprep.subr.mxu0 0.0
    %5187 = vmatpush2.xpose.msra.mxu0 0.0
    %5188 = vmatprep.subr.mxu0 0.0
    %5189 = vmatpush2.xpose.msra.mxu0 0.0
    %5190 = vmatprep.subr.mxu0 0.0
    %5191 = vmatpush2.xpose.msra.mxu0 0.0
    %5192 = vmatprep.mubr.f32.mxu0 0.0
    %5193 = vmatmul.mubr.f32.gmra.mxu0 %v4830
    %v5194 = vpop.f32.mrf.mxu0
    %v5195 = vadd.f32 0.0, %v5194
    %v5196 = vpop.f32.mrf.mxu0
    %5197 = vmatprep.mubr.f32.mxu0 0.0
    %5198 = vmatmul.mubr.f32.gmra.mxu0 %v4831
    %v5199 = vpop.f32.mrf.mxu0
    %v5200 = vpop.f32.mrf.mxu0
    %5201 = vdwg.mxu0
    %5202 = vmatprep.subr.mxu0 0.0
    %5203 = vmatpush1.xpose.msra.mxu0 %v4797
    %5204 = vmatprep.subr.mxu0 0.0
    %5205 = vmatpush1.xpose.msra.mxu0 %v4796
    %5206 = vmatprep.subr.mxu0 0.0
    %5207 = vmatpush1.xpose.msra.mxu0 %v4795
    %5208 = vmatprep.subr.mxu0 0.0
    %5209 = vmatpush1.xpose.msra.mxu0 %v4794
    %5210 = vmatprep.subr.mxu0 0.0
    %5211 = vmatpush1.xpose.msra.mxu0 %v4793
    %5212 = vmatprep.subr.mxu0 0.0
    %5213 = vmatpush1.xpose.msra.mxu0 %v4792
    %5214 = vmatprep.subr.mxu0 0.0
    %5215 = vmatpush1.xpose.msra.mxu0 %v4791
    %5216 = vmatprep.subr.mxu0 0.0
    %5217 = vmatpush1.xpose.msra.mxu0 %v4790
    %5218 = vmatprep.subr.mxu0 0.0
    %5219 = vmatpush1.xpose.msra.mxu0 %v4789
    %5220 = vmatprep.subr.mxu0 0.0
    %5221 = vmatpush1.xpose.msra.mxu0 %v4788
    %5222 = vmatprep.subr.mxu0 0.0
    %5223 = vmatpush1.xpose.msra.mxu0 %v4787
    %5224 = vmatprep.subr.mxu0 0.0
    %5225 = vmatpush1.xpose.msra.mxu0 %v4786
    %5226 = vmatprep.subr.mxu0 0.0
    %5227 = vmatpush1.xpose.msra.mxu0 %v4785
    %5228 = vmatprep.subr.mxu0 0.0
    %5229 = vmatpush1.xpose.msra.mxu0 %v4784
    %5230 = vmatprep.subr.mxu0 0.0
    %5231 = vmatpush1.xpose.msra.mxu0 %v4783
    %5232 = vmatprep.subr.mxu0 0.0
    %5233 = vmatpush1.xpose.msra.mxu0 %v4782
    %5234 = vmatprep.subr.mxu0 0.0
    %5235 = vmatpush2.xpose.msra.mxu0 0.0
    %5236 = vmatprep.subr.mxu0 0.0
    %5237 = vmatpush2.xpose.msra.mxu0 0.0
    %5238 = vmatprep.subr.mxu0 0.0
    %5239 = vmatpush2.xpose.msra.mxu0 0.0
    %5240 = vmatprep.subr.mxu0 0.0
    %5241 = vmatpush2.xpose.msra.mxu0 0.0
    %5242 = vmatprep.subr.mxu0 0.0
    %5243 = vmatpush2.xpose.msra.mxu0 0.0
    %5244 = vmatprep.subr.mxu0 0.0
    %5245 = vmatpush2.xpose.msra.mxu0 0.0
    %5246 = vmatprep.subr.mxu0 0.0
    %5247 = vmatpush2.xpose.msra.mxu0 0.0
    %5248 = vmatprep.subr.mxu0 0.0
    %5249 = vmatpush2.xpose.msra.mxu0 0.0
    %5250 = vmatprep.subr.mxu0 0.0
    %5251 = vmatpush2.xpose.msra.mxu0 0.0
    %5252 = vmatprep.subr.mxu0 0.0
    %5253 = vmatpush2.xpose.msra.mxu0 0.0
    %5254 = vmatprep.subr.mxu0 0.0
    %5255 = vmatpush2.xpose.msra.mxu0 0.0
    %5256 = vmatprep.subr.mxu0 0.0
    %5257 = vmatpush2.xpose.msra.mxu0 0.0
    %5258 = vmatprep.subr.mxu0 0.0
    %5259 = vmatpush2.xpose.msra.mxu0 0.0
    %5260 = vmatprep.subr.mxu0 0.0
    %5261 = vmatpush2.xpose.msra.mxu0 0.0
    %5262 = vmatprep.subr.mxu0 0.0
    %5263 = vmatpush2.xpose.msra.mxu0 0.0
    %5264 = vmatprep.subr.mxu0 0.0
    %5265 = vmatpush2.xpose.msra.mxu0 0.0
    %5266 = vmatprep.mubr.f32.mxu0 0.0
    %5267 = vmatmul.mubr.f32.gmra.mxu0 %v4830
    %v5268 = vpop.f32.mrf.mxu0
    %v5269 = vadd.f32 0.0, %v5268
    %v5270 = vpop.f32.mrf.mxu0
    %5271 = vmatprep.mubr.f32.mxu0 0.0
    %5272 = vmatmul.mubr.f32.gmra.mxu0 %v4831
    %v5273 = vpop.f32.mrf.mxu0
    %v5274 = vpop.f32.mrf.mxu0
    %5275 = vdwg.mxu0
    %5276 = vmatprep.subr.mxu0 0.0
    %5277 = vmatpush1.xpose.msra.mxu0 %v4813
    %5278 = vmatprep.subr.mxu0 0.0
    %5279 = vmatpush1.xpose.msra.mxu0 %v4812
    %5280 = vmatprep.subr.mxu0 0.0
    %5281 = vmatpush1.xpose.msra.mxu0 %v4811
    %5282 = vmatprep.subr.mxu0 0.0
    %5283 = vmatpush1.xpose.msra.mxu0 %v4810
    %5284 = vmatprep.subr.mxu0 0.0
    %5285 = vmatpush1.xpose.msra.mxu0 %v4809
    %5286 = vmatprep.subr.mxu0 0.0
    %5287 = vmatpush1.xpose.msra.mxu0 %v4808
    %5288 = vmatprep.subr.mxu0 0.0
    %5289 = vmatpush1.xpose.msra.mxu0 %v4807
    %5290 = vmatprep.subr.mxu0 0.0
    %5291 = vmatpush1.xpose.msra.mxu0 %v4806
    %5292 = vmatprep.subr.mxu0 0.0
    %5293 = vmatpush1.xpose.msra.mxu0 %v4805
    %5294 = vmatprep.subr.mxu0 0.0
    %5295 = vmatpush1.xpose.msra.mxu0 %v4804
    %5296 = vmatprep.subr.mxu0 0.0
    %5297 = vmatpush1.xpose.msra.mxu0 %v4803
    %5298 = vmatprep.subr.mxu0 0.0
    %5299 = vmatpush1.xpose.msra.mxu0 %v4802
    %5300 = vmatprep.subr.mxu0 0.0
    %5301 = vmatpush1.xpose.msra.mxu0 %v4801
    %5302 = vmatprep.subr.mxu0 0.0
    %5303 = vmatpush1.xpose.msra.mxu0 %v4800
    %5304 = vmatprep.subr.mxu0 0.0
    %5305 = vmatpush1.xpose.msra.mxu0 %v4799
    %5306 = vmatprep.subr.mxu0 0.0
    %5307 = vmatpush1.xpose.msra.mxu0 %v4798
    %5308 = vmatprep.subr.mxu0 0.0
    %5309 = vmatpush2.xpose.msra.mxu0 0.0
    %5310 = vmatprep.subr.mxu0 0.0
    %5311 = vmatpush2.xpose.msra.mxu0 0.0
    %5312 = vmatprep.subr.mxu0 0.0
    %5313 = vmatpush2.xpose.msra.mxu0 0.0
    %5314 = vmatprep.subr.mxu0 0.0
    %5315 = vmatpush2.xpose.msra.mxu0 0.0
    %5316 = vmatprep.subr.mxu0 0.0
    %5317 = vmatpush2.xpose.msra.mxu0 0.0
    %5318 = vmatprep.subr.mxu0 0.0
    %5319 = vmatpush2.xpose.msra.mxu0 0.0
    %5320 = vmatprep.subr.mxu0 0.0
    %5321 = vmatpush2.xpose.msra.mxu0 0.0
    %5322 = vmatprep.subr.mxu0 0.0
    %5323 = vmatpush2.xpose.msra.mxu0 0.0
    %5324 = vmatprep.subr.mxu0 0.0
    %5325 = vmatpush2.xpose.msra.mxu0 0.0
    %5326 = vmatprep.subr.mxu0 0.0
    %5327 = vmatpush2.xpose.msra.mxu0 0.0
    %5328 = vmatprep.subr.mxu0 0.0
    %5329 = vmatpush2.xpose.msra.mxu0 0.0
    %5330 = vmatprep.subr.mxu0 0.0
    %5331 = vmatpush2.xpose.msra.mxu0 0.0
    %5332 = vmatprep.subr.mxu0 0.0
    %5333 = vmatpush2.xpose.msra.mxu0 0.0
    %5334 = vmatprep.subr.mxu0 0.0
    %5335 = vmatpush2.xpose.msra.mxu0 0.0
    %5336 = vmatprep.subr.mxu0 0.0
    %5337 = vmatpush2.xpose.msra.mxu0 0.0
    %5338 = vmatprep.subr.mxu0 0.0
    %5339 = vmatpush2.xpose.msra.mxu0 0.0
    %5340 = vmatprep.mubr.f32.mxu0 0.0
    %5341 = vmatmul.mubr.f32.gmra.mxu0 %v4830
    %v5342 = vpop.f32.mrf.mxu0
    %v5343 = vadd.f32 0.0, %v5342
    %v5344 = vpop.f32.mrf.mxu0
    %5345 = vmatprep.mubr.f32.mxu0 0.0
    %5346 = vmatmul.mubr.f32.gmra.mxu0 %v4831
    %v5347 = vpop.f32.mrf.mxu0
    %v5348 = vpop.f32.mrf.mxu0
    %5349 = vdwg.mxu0
    %5350 = vmatprep.subr.mxu0 0.0
    %5351 = vmatpush1.xpose.msra.mxu0 %v4829
    %5352 = vmatprep.subr.mxu0 0.0
    %5353 = vmatpush1.xpose.msra.mxu0 %v4828
    %5354 = vmatprep.subr.mxu0 0.0
    %5355 = vmatpush1.xpose.msra.mxu0 %v4827
    %5356 = vmatprep.subr.mxu0 0.0
    %5357 = vmatpush1.xpose.msra.mxu0 %v4826
    %5358 = vmatprep.subr.mxu0 0.0
    %5359 = vmatpush1.xpose.msra.mxu0 %v4825
    %5360 = vmatprep.subr.mxu0 0.0
    %5361 = vmatpush1.xpose.msra.mxu0 %v4824
    %5362 = vmatprep.subr.mxu0 0.0
    %5363 = vmatpush1.xpose.msra.mxu0 %v4823
    %5364 = vmatprep.subr.mxu0 0.0
    %5365 = vmatpush1.xpose.msra.mxu0 %v4822
    %5366 = vmatprep.subr.mxu0 0.0
    %5367 = vmatpush1.xpose.msra.mxu0 %v4821
    %5368 = vmatprep.subr.mxu0 0.0
    %5369 = vmatpush1.xpose.msra.mxu0 %v4820
    %5370 = vmatprep.subr.mxu0 0.0
    %5371 = vmatpush1.xpose.msra.mxu0 %v4819
    %5372 = vmatprep.subr.mxu0 0.0
    %5373 = vmatpush1.xpose.msra.mxu0 %v4818
    %5374 = vmatprep.subr.mxu0 0.0
    %5375 = vmatpush1.xpose.msra.mxu0 %v4817
    %5376 = vmatprep.subr.mxu0 0.0
    %5377 = vmatpush1.xpose.msra.mxu0 %v4816
    %5378 = vmatprep.subr.mxu0 0.0
    %5379 = vmatpush1.xpose.msra.mxu0 %v4815
    %5380 = vmatprep.subr.mxu0 0.0
    %5381 = vmatpush1.xpose.msra.mxu0 %v4814
    %5382 = vmatprep.subr.mxu0 0.0
    %5383 = vmatpush2.xpose.msra.mxu0 0.0
    %5384 = vmatprep.subr.mxu0 0.0
    %5385 = vmatpush2.xpose.msra.mxu0 0.0
    %5386 = vmatprep.subr.mxu0 0.0
    %5387 = vmatpush2.xpose.msra.mxu0 0.0
    %5388 = vmatprep.subr.mxu0 0.0
    %5389 = vmatpush2.xpose.msra.mxu0 0.0
    %5390 = vmatprep.subr.mxu0 0.0
    %5391 = vmatpush2.xpose.msra.mxu0 0.0
    %5392 = vmatprep.subr.mxu0 0.0
    %5393 = vmatpush2.xpose.msra.mxu0 0.0
    %5394 = vmatprep.subr.mxu0 0.0
    %5395 = vmatpush2.xpose.msra.mxu0 0.0
    %5396 = vmatprep.subr.mxu0 0.0
    %5397 = vmatpush2.xpose.msra.mxu0 0.0
    %5398 = vmatprep.subr.mxu0 0.0
    %5399 = vmatpush2.xpose.msra.mxu0 0.0
    %5400 = vmatprep.subr.mxu0 0.0
    %5401 = vmatpush2.xpose.msra.mxu0 0.0
    %5402 = vmatprep.subr.mxu0 0.0
    %5403 = vmatpush2.xpose.msra.mxu0 0.0
    %5404 = vmatprep.subr.mxu0 0.0
    %5405 = vmatpush2.xpose.msra.mxu0 0.0
    %5406 = vmatprep.subr.mxu0 0.0
    %5407 = vmatpush2.xpose.msra.mxu0 0.0
    %5408 = vmatprep.subr.mxu0 0.0
    %5409 = vmatpush2.xpose.msra.mxu0 0.0
    %5410 = vmatprep.subr.mxu0 0.0
    %5411 = vmatpush2.xpose.msra.mxu0 0.0
    %5412 = vmatprep.subr.mxu0 0.0
    %5413 = vmatpush2.xpose.msra.mxu0 0.0
    %5414 = vmatprep.mubr.f32.mxu0 0.0
    %5415 = vmatmul.mubr.f32.gmra.mxu0 %v4830
    %v5416 = vpop.f32.mrf.mxu0
    %v5417 = vadd.f32 0.0, %v5416
    %v5418 = vpop.f32.mrf.mxu0
    %5419 = vmatprep.mubr.f32.mxu0 0.0
    %5420 = vmatmul.mubr.f32.gmra.mxu0 %v4831
    %v5421 = vpop.f32.mrf.mxu0
    %v5422 = vpop.f32.mrf.mxu0
    %5423 = vdwg.mxu0
    %v5425 = vrot.slane %v4973, 7
    %v5428 = vrot.slane %v5047, 6
    %v5431 = vrot.slane %v5121, 5
    %v5434 = vrot.slane %v5195, 4
    %v5437 = vrot.slane %v5269, 3
    %v5440 = vrot.slane %v5343, 2
    %v5443 = vrot.slane %v5417, 1
    %vm5445 = vcmask 1040384
    %v5446 = vsel %vm5445, %v4899, %v5425
    %vm5447 = vcmask 1041408
    %v5448 = vsel %vm5447, %v5446, %v5428
    %vm5449 = vcmask 1042432
    %v5450 = vsel %vm5449, %v5448, %v5431
    %vm5451 = vcmask 1043456
    %v5452 = vsel %vm5451, %v5450, %v5434
    %vm5453 = vcmask 1044480
    %v5454 = vsel %vm5453, %v5452, %v5437
    %v5455 = vsel %vm569, %v5454, %v5440
    %vm5456 = vcmask 1046528
    %v5457 = vsel %vm5456, %v5455, %v5443
    %v5458 = vld [vmem:[%s12] sm:$0x1]
    %v5460 = vlaneseq
    %v5461 = vshrl.u32 %v5460, 7
    %v5462 = vsub.s32 0, %v5461
    %v5463 = vrot.slane %v5458, %v5462
    %v5465 = vadd.f32 %v5457, %v5463
    %v5466 = vsub.f32 0.0, %v5465
    %v5467 = vmul.f32 %v5466, 1.442695
    %v5468 = vpow.pop %v5467
    %v5469 = vadd.f32 %v5468, 1.0
    %v5470 = vrcp.pop %v5469
    %5471 = vst [vmem:[#allocation2] sm:$0xff] %v5470
    // Predicated region
    $region54: #{tpu_custom_call.1} parent=1 // pred_check
      _
    $region55: #{tpu_custom_call.1} parent=1 // pred_check_branch
      %5473 = sbr.rel (0) target = $region57
    $region56: #{tpu_custom_call.1} parent=1 // pred_region
      %s5475 = ssub.s32 128, 128
      %5476 = vsyncadd [#allocation3], %s5475
      %s5478 = sshll.u32 [#allocation2], 4
      %s5479 = int_to_ptr.vmem [resolvable:$true] %s5478
      %5481 = dma.vmem_to_hbm [thread:$0]  %s5479, 128, %s13, [#allocation3]
    $region57: #{tpu_custom_call.1} parent=1 // pred_fallthru
      _
    // Predicated region
    $region58: #{tpu_custom_call.1} parent=1 // pred_check
      _
    $region59: #{tpu_custom_call.1} parent=1 // pred_check_branch
      %5483 = sbr.rel (0) target = $region61
    $region60: #{tpu_custom_call.1} parent=1 // pred_region
      %5484 = dma.done [#allocation3], 128
    $region61: #{tpu_custom_call.1} parent=1 // pred_fallthru
      _
    %5485 = vsyncpa [#allocation3], 1

</llo_original>
